<compile_context>
chip_gen: v7x
topology: tpu7x:2x2x1
jax: 0.10.0
libtpu: 0.0.40
codegen_flags: <defaults>
</compile_context>

<pallas_src>
import jax
import jax.numpy as jnp
from jax.experimental import pallas as pl
from jax.experimental.pallas import tpu as pltpu

# ----------------------------- toy config ------------------------------------
VOCAB = 100       # word vocab size
NUM_TOPICS = 10   # topic vocab size
H = 32            # hidden_size
NH = 2            # attention heads
FF = 64           # FFN intermediate dim
A = 32            # additive-attention projection dim
L = 8             # title_length (== sublane tile)
N = 4             # num_neighbors
B = 2             # batch_size

NEG = -1e9        # additive mask value (Python literal)


def _round_up(x, m):
    return -(-x // m) * m


def _layernorm(x, g, b, eps=1e-5):
    mu = jnp.mean(x, axis=-1, keepdims=True)
    var = jnp.mean((x - mu) ** 2, axis=-1, keepdims=True)
    return (x - mu) * jax.lax.rsqrt(var + eps) * g + b


# ------------------- fused encoder + aggregator kernel -----------------------
def fused_kernel(wid_ref, tid_ref, ab_ref, wpb_ref, npb_ref,
                 wemb_ref, temb_ref,
                 wqkv_ref, wo_ref, ln1g_ref, ln1b_ref, ln2g_ref, ln2b_ref,
                 w1_ref, b1_ref, w2_ref, b2_ref,
                 wa_ref, ba_ref, va_ref,
                 wagg_ref, bagg_ref, vagg_ref,
                 out_ref):
    rows = wid_ref.shape[0]              # B*N*L
    vpad = wemb_ref.shape[0]             # padded vocab rows
    tpad = temb_ref.shape[0]             # padded topic rows
    hid = wemb_ref.shape[1]              # H
    bsz, n_nb = npb_ref.shape            # B, N
    titles, seq = wpb_ref.shape          # B*N, L
    dh = hid // NH
    scale = 1.0 / float(dh) ** 0.5       # Python literal (no const capture)

    # ---- embedding gather fused as one-hot matmuls on the (otherwise idle) MXU ----
    # TODO(synk): for production vocab sizes replace the one-hot matmul with a
    # scalar-prefetch (SMEM ids) + DMA-gather of embedding rows.
    wid = wid_ref[...]                   # [rows, 1] int32
    tid = tid_ref[...]                   # [rows, 1] int32
    word_oh = (wid == jax.lax.broadcasted_iota(jnp.int32, (rows, vpad), 1)
               ).astype(jnp.float32)                                        # [rows, Vp]
    topic_oh = (tid == jax.lax.broadcasted_iota(jnp.int32, (rows, tpad), 1)
                ).astype(jnp.float32)                                       # [rows, Tp]
    x2 = (jnp.dot(word_oh, wemb_ref[...], preferred_element_type=jnp.float32)
          + jnp.dot(topic_oh, temb_ref[...], preferred_element_type=jnp.float32))  # [rows, H]

    # ---- fused QKV projection: one [rows,H] x [H,3H] matmul ----
    qkv = jnp.dot(x2, wqkv_ref[...], preferred_element_type=jnp.float32)    # [rows, 3H]
    ab = ab_ref[...]                     # [rows, rows] block-diag key bias
    wo = wo_ref[...]                     # [H, H]

    # ---- multi-head self-attention as full block-diagonal matmuls ----
    attn = None
    for h in range(NH):                  # static tiny loop (NH=2)
        qh = qkv[:, h * dh:(h + 1) * dh]
        kh = qkv[:, hid + h * dh: hid + (h + 1) * dh]
        vh = qkv[:, 2 * hid + h * dh: 2 * hid + (h + 1) * dh]
        s = jax.lax.dot_general(qh, kh, (((1,), (1,)), ((), ())),
                                preferred_element_type=jnp.float32) * scale + ab  # [rows, rows]
        s = s - jnp.max(s, axis=-1, keepdims=True)
        p = jnp.exp(s)
        p = p * pl.reciprocal(jnp.sum(p, axis=-1, keepdims=True), approx=True)
        ctx = jnp.dot(p, vh, preferred_element_type=jnp.float32)            # [rows, dh]
        part = jnp.dot(ctx, wo[h * dh:(h + 1) * dh, :],
                       preferred_element_type=jnp.float32)                  # [rows, H]
        attn = part if attn is None else attn + part

    # ---- post-LN transformer layer: residual + LN, FFN, residual + LN ----
    h1 = _layernorm(x2 + attn, ln1g_ref[...], ln1b_ref[...])
    f = jnp.maximum(jnp.dot(h1, w1_ref[...], preferred_element_type=jnp.float32)
                    + b1_ref[...], 0.0)
    f = jnp.dot(f, w2_ref[...], preferred_element_type=jnp.float32) + b2_ref[...]
    h2 = _layernorm(h1 + f, ln2g_ref[...], ln2b_ref[...])                   # [rows, H]

    # ---- additive word-attention pooling (per title), L on the lane axis ----
    e = jnp.tanh(jnp.dot(h2, wa_ref[...], preferred_element_type=jnp.float32)
                 + ba_ref[...])                                             # [rows, A]
    e3 = e.reshape(titles, seq, e.shape[-1])                                # [T, L, A]
    s_w = jnp.sum(e3 * va_ref[...], axis=-1) + wpb_ref[...]                 # [T, L]
    s_w = s_w - jnp.max(s_w, axis=-1, keepdims=True)
    pw = jnp.exp(s_w)
    pw = pw * pl.reciprocal(jnp.sum(pw, axis=-1, keepdims=True), approx=True)  # [T, L]
    h2_3 = h2.reshape(titles, seq, hid)                                     # [T, L, H]
    pooled = jnp.sum(h2_3 * pw[:, :, None], axis=1)                         # [T, H]

    # ---- neighbor aggregator (additive attention), N on the lane axis ----
    ea = jnp.tanh(jnp.dot(pooled, wagg_ref[...], preferred_element_type=jnp.float32)
                  + bagg_ref[...])                                          # [T, A]
    ea3 = ea.reshape(bsz, n_nb, ea.shape[-1])                               # [B, N, A]
    s_n = jnp.sum(ea3 * vagg_ref[...], axis=-1) + npb_ref[...]              # [B, N]
    s_n = s_n - jnp.max(s_n, axis=-1, keepdims=True)
    pa = jnp.exp(s_n)
    pa = pa * pl.reciprocal(jnp.sum(pa, axis=-1, keepdims=True), approx=True)  # [B, N]
    pooled3 = pooled.reshape(bsz, n_nb, hid)                                # [B, N, H]
    sem = jnp.sum(pooled3 * pa[:, :, None], axis=1)                         # [B, H]

    # ---- single packed lane-dense output slab (one writeback DMA) ----
    # rows 0:B      -> semantic [B, H]
    # rows B:2B     -> news weights [B, N]
    # rows 2B:2B+T  -> word weights [B*N, L]
    out_ref[...] = jnp.zeros_like(out_ref)
    out_ref[0:bsz, 0:hid] = sem
    out_ref[bsz:2 * bsz, 0:n_nb] = pa
    out_ref[2 * bsz:2 * bsz + titles, 0:seq] = pw
    # TODO(synk): dropout on attention weights is identity in eval mode; training
    # parity would need the pltpu PRNG path (pltpu.prng_seed / stateful_bernoulli).


# --------------------------------- wrapper ------------------------------------
WEIGHT_KEYS = ("wqkv", "wo", "ln1g", "ln1b", "ln2g", "ln2b",
               "w1", "b1", "w2", "b2", "wa", "ba", "va", "wagg", "bagg", "vagg")


def init_params(key):
    ks = jax.random.split(key, 10)
    s = 0.02
    return {
        "word_emb":  jax.random.normal(ks[0], (VOCAB, H), jnp.float32) * s,
        "topic_emb": jax.random.normal(ks[1], (NUM_TOPICS, H), jnp.float32) * s,
        "wqkv": jax.random.normal(ks[2], (H, 3 * H), jnp.float32) * s,
        "wo":   jax.random.normal(ks[3], (H, H), jnp.float32) * s,
        "ln1g": jnp.ones((1, H), jnp.float32), "ln1b": jnp.zeros((1, H), jnp.float32),
        "ln2g": jnp.ones((1, H), jnp.float32), "ln2b": jnp.zeros((1, H), jnp.float32),
        "w1": jax.random.normal(ks[4], (H, FF), jnp.float32) * s,
        "b1": jnp.zeros((1, FF), jnp.float32),
        "w2": jax.random.normal(ks[5], (FF, H), jnp.float32) * s,
        "b2": jnp.zeros((1, H), jnp.float32),
        "wa": jax.random.normal(ks[6], (H, A), jnp.float32) * s,
        "ba": jnp.zeros((1, A), jnp.float32),
        "va": jax.random.normal(ks[7], (1, A), jnp.float32) * s,
        "wagg": jax.random.normal(ks[8], (H, A), jnp.float32) * s,
        "bagg": jnp.zeros((1, A), jnp.float32),
        "vagg": jax.random.normal(ks[9], (1, A), jnp.float32) * s,
    }


def neighbor_news_semantic_forward(params, word_ids, topic_ids,
                                   news_mask=None, word_mask=None):
    Bsz, Nn, Ln = word_ids.shape
    vocab, hid = params["word_emb"].shape
    ntopic = params["topic_emb"].shape[0]
    T = Bsz * Nn
    R = T * Ln
    if word_mask is None:
        word_mask = jnp.ones((Bsz, Nn, Ln), jnp.float32)
    if news_mask is None:
        news_mask = jnp.ones((Bsz, Nn), jnp.float32)

    # ids as tiny int32 columns (kernel builds one-hots in VMEM)
    wid = word_ids.reshape(R, 1).astype(jnp.int32)
    tid = jnp.repeat(topic_ids.reshape(T).astype(jnp.int32), Ln).reshape(R, 1)

    # zero-padded embedding tables (tile-friendly row counts)
    vpad = _round_up(vocab, 128)
    tpad = _round_up(ntopic, 8)
    wemb = jnp.zeros((vpad, hid), jnp.float32).at[:vocab].set(params["word_emb"])
    temb = jnp.zeros((tpad, hid), jnp.float32).at[:ntopic].set(params["topic_emb"])

    # block-diagonal additive attention bias [R, R]: a query only attends to keys
    # of the SAME (batch, neighbor) title that are not padding.
    group = jnp.repeat(jnp.arange(T, dtype=jnp.int32), Ln)                 # [R]
    same_title = group[:, None] == group[None, :]                          # [R, R]
    key_valid = word_mask.reshape(R) > 0.5
    attn_bias = jnp.where(same_title & key_valid[None, :], 0.0, NEG
                          ).astype(jnp.float32)                            # [R, R]

    wpb = ((1.0 - word_mask.astype(jnp.float32)) * NEG).reshape(T, Ln)     # [T, L]
    npb = ((1.0 - news_mask.astype(jnp.float32)) * NEG).reshape(Bsz, Nn)   # [B, N]

    weights = [params[k] for k in WEIGHT_KEYS]
    ins = [wid, tid, attn_bias, wpb, npb, wemb, temb] + weights

    out_rows = _round_up(2 * Bsz + T, 8)
    out_cols = 128
    assert hid <= out_cols and Nn <= out_cols and Ln <= out_cols

    def _spec(shape):
        nd = len(shape)
        return pl.BlockSpec(shape, lambda i, _nd=nd: (0,) * _nd)

    out = pl.pallas_call(
        fused_kernel,
        grid=(1,),                                   # batch folded into the body
        in_specs=[_spec(a.shape) for a in ins],
        out_specs=pl.BlockSpec((out_rows, out_cols), lambda i: (0, 0)),
        out_shape=jax.ShapeDtypeStruct((out_rows, out_cols), jnp.float32),
        compiler_params=pltpu.CompilerParams(dimension_semantics=("arbitrary",)),
    )(*ins)

    sem = out[0:Bsz, 0:hid]                          # neighbor_news_semantic [B, H]
    nw = out[Bsz:2 * Bsz, 0:Nn]                      # news_attention_weights [B, N]
    ww = out[2 * Bsz:2 * Bsz + T, 0:Ln].reshape(Bsz, Nn, Ln)  # word weights [B, N, L]
    return sem, nw, ww


# ---------------------------------- main --------------------------------------
if __name__ == "__main__":
    key = jax.random.PRNGKey(0)
    kp, k1, k2 = jax.random.split(key, 3)
    params = init_params(kp)

    word_ids = jax.random.randint(k1, (B, N, L), 0, VOCAB)
    topic_ids = jax.random.randint(k2, (B, N), 0, NUM_TOPICS)
    # masks: last token of every title and last neighbor of batch row 0 are padding
    word_mask = jnp.ones((B, N, L), jnp.float32).at[:, :, -1].set(0.0)
    news_mask = jnp.ones((B, N), jnp.float32).at[0, -1].set(0.0)

    sem, news_w, word_w = neighbor_news_semantic_forward(
        params, word_ids, topic_ids, news_mask, word_mask)
    jax.block_until_ready((sem, news_w, word_w))

    assert sem.shape == (B, H)
    assert news_w.shape == (B, N)
    assert word_w.shape == (B, N, L)
    assert bool(jnp.all(jnp.isfinite(sem)))
    assert bool(jnp.all(jnp.isfinite(news_w)))
    assert bool(jnp.all(jnp.isfinite(word_w)))
    # softmax weights sum to ~1 (approx reciprocal -> slightly loose tolerance)
    assert bool(jnp.all(jnp.abs(jnp.sum(news_w, -1) - 1.0) < 5e-3))
    assert bool(jnp.all(jnp.abs(jnp.sum(word_w, -1) - 1.0) < 5e-3))
    # masked positions receive ~0 attention weight
    assert bool(jnp.all(word_w[:, :, -1] < 1e-3))
    assert bool(news_w[0, -1] < 1e-3)
    print("KERNEL_OK")
</pallas_src>

<mosaic_0001>
module attributes {stable_mosaic.version = 11 : i64} {
  func.func @fused_kernel(%arg0: i32, %arg1: memref<64x1xi32, #tpu.memory_space<vmem>>, %arg2: memref<64x1xi32, #tpu.memory_space<vmem>>, %arg3: memref<64x64xf32, #tpu.memory_space<vmem>>, %arg4: memref<8x8xf32, #tpu.memory_space<vmem>>, %arg5: memref<2x4xf32, #tpu.memory_space<vmem>>, %arg6: memref<128x32xf32, #tpu.memory_space<vmem>>, %arg7: memref<16x32xf32, #tpu.memory_space<vmem>>, %arg8: memref<32x96xf32, #tpu.memory_space<vmem>>, %arg9: memref<32x32xf32, #tpu.memory_space<vmem>>, %arg10: memref<1x32xf32, #tpu.memory_space<vmem>>, %arg11: memref<1x32xf32, #tpu.memory_space<vmem>>, %arg12: memref<1x32xf32, #tpu.memory_space<vmem>>, %arg13: memref<1x32xf32, #tpu.memory_space<vmem>>, %arg14: memref<32x64xf32, #tpu.memory_space<vmem>>, %arg15: memref<1x64xf32, #tpu.memory_space<vmem>>, %arg16: memref<64x32xf32, #tpu.memory_space<vmem>>, %arg17: memref<1x32xf32, #tpu.memory_space<vmem>>, %arg18: memref<32x32xf32, #tpu.memory_space<vmem>>, %arg19: memref<1x32xf32, #tpu.memory_space<vmem>>, %arg20: memref<1x32xf32, #tpu.memory_space<vmem>>, %arg21: memref<32x32xf32, #tpu.memory_space<vmem>>, %arg22: memref<1x32xf32, #tpu.memory_space<vmem>>, %arg23: memref<1x32xf32, #tpu.memory_space<vmem>>, %arg24: memref<16x128xf32, #tpu.memory_space<vmem>>) attributes {dimension_semantics = [#tpu.dimension_semantics<arbitrary>], iteration_bounds = array<i64: 1>, scalar_prefetch = 0 : i64, scratch_operands = 0 : i64, tpu.core_type = #tpu.core_type<tc>, window_params = [{pipeline_mode = #tpu.pipeline_mode<synchronous>, transform_indices = @transform_0, window_bounds = array<i64: 64, 1>}, {pipeline_mode = #tpu.pipeline_mode<synchronous>, transform_indices = @transform_1, window_bounds = array<i64: 64, 1>}, {pipeline_mode = #tpu.pipeline_mode<synchronous>, transform_indices = @transform_2, window_bounds = array<i64: 64, 64>}, {pipeline_mode = #tpu.pipeline_mode<synchronous>, transform_indices = @transform_3, window_bounds = array<i64: 8, 8>}, {pipeline_mode = #tpu.pipeline_mode<synchronous>, transform_indices = @transform_4, window_bounds = array<i64: 2, 4>}, {pipeline_mode = #tpu.pipeline_mode<synchronous>, transform_indices = @transform_5, window_bounds = array<i64: 128, 32>}, {pipeline_mode = #tpu.pipeline_mode<synchronous>, transform_indices = @transform_6, window_bounds = array<i64: 16, 32>}, {pipeline_mode = #tpu.pipeline_mode<synchronous>, transform_indices = @transform_7, window_bounds = array<i64: 32, 96>}, {pipeline_mode = #tpu.pipeline_mode<synchronous>, transform_indices = @transform_8, window_bounds = array<i64: 32, 32>}, {pipeline_mode = #tpu.pipeline_mode<synchronous>, transform_indices = @transform_9, window_bounds = array<i64: 1, 32>}, {pipeline_mode = #tpu.pipeline_mode<synchronous>, transform_indices = @transform_10, window_bounds = array<i64: 1, 32>}, {pipeline_mode = #tpu.pipeline_mode<synchronous>, transform_indices = @transform_11, window_bounds = array<i64: 1, 32>}, {pipeline_mode = #tpu.pipeline_mode<synchronous>, transform_indices = @transform_12, window_bounds = array<i64: 1, 32>}, {pipeline_mode = #tpu.pipeline_mode<synchronous>, transform_indices = @transform_13, window_bounds = array<i64: 32, 64>}, {pipeline_mode = #tpu.pipeline_mode<synchronous>, transform_indices = @transform_14, window_bounds = array<i64: 1, 64>}, {pipeline_mode = #tpu.pipeline_mode<synchronous>, transform_indices = @transform_15, window_bounds = array<i64: 64, 32>}, {pipeline_mode = #tpu.pipeline_mode<synchronous>, transform_indices = @transform_16, window_bounds = array<i64: 1, 32>}, {pipeline_mode = #tpu.pipeline_mode<synchronous>, transform_indices = @transform_17, window_bounds = array<i64: 32, 32>}, {pipeline_mode = #tpu.pipeline_mode<synchronous>, transform_indices = @transform_18, window_bounds = array<i64: 1, 32>}, {pipeline_mode = #tpu.pipeline_mode<synchronous>, transform_indices = @transform_19, window_bounds = array<i64: 1, 32>}, {pipeline_mode = #tpu.pipeline_mode<synchronous>, transform_indices = @transform_20, window_bounds = array<i64: 32, 32>}, {pipeline_mode = #tpu.pipeline_mode<synchronous>, transform_indices = @transform_21, window_bounds = array<i64: 1, 32>}, {pipeline_mode = #tpu.pipeline_mode<synchronous>, transform_indices = @transform_22, window_bounds = array<i64: 1, 32>}, {pipeline_mode = #tpu.pipeline_mode<synchronous>, transform_indices = @transform_23, window_bounds = array<i64: 16, 128>}]} {
    %c0 = arith.constant 0 : index
    %c0_0 = arith.constant 0 : index
    %0 = vector.load %arg1[%c0, %c0_0] : memref<64x1xi32, #tpu.memory_space<vmem>>, vector<64x1xi32>
    %c0_1 = arith.constant 0 : index
    %c0_2 = arith.constant 0 : index
    %1 = vector.load %arg2[%c0_1, %c0_2] : memref<64x1xi32, #tpu.memory_space<vmem>>, vector<64x1xi32>
    %2 = tpu.iota {dimensions = array<i32: 1>} : vector<64x128xi32>
    %3 = vector.broadcast %0 : vector<64x1xi32> to vector<64x128xi32>
    %4 = arith.cmpi eq, %3, %2 : vector<64x128xi32>
    %5 = arith.extui %4 : vector<64x128xi1> to vector<64x128xi32>
    %6 = arith.sitofp %5 : vector<64x128xi32> to vector<64x128xf32>
    %7 = tpu.iota {dimensions = array<i32: 1>} : vector<64x16xi32>
    %8 = vector.broadcast %1 : vector<64x1xi32> to vector<64x16xi32>
    %9 = arith.cmpi eq, %8, %7 : vector<64x16xi32>
    %10 = arith.extui %9 : vector<64x16xi1> to vector<64x16xi32>
    %11 = arith.sitofp %10 : vector<64x16xi32> to vector<64x16xf32>
    %c0_3 = arith.constant 0 : index
    %c0_4 = arith.constant 0 : index
    %12 = vector.load %arg6[%c0_3, %c0_4] : memref<128x32xf32, #tpu.memory_space<vmem>>, vector<128x32xf32>
    %cst = arith.constant dense<0.000000e+00> : vector<64x32xf32>
    %13 = tpu.matmul %6, %12, %cst {dimension_numbers = #tpu.dot_dimension_numbers<[1], [0], [0], [1], [0, 0, 1, 1], [], []>} : vector<64x128xf32>, vector<128x32xf32>, vector<64x32xf32> -> vector<64x32xf32>
    %c0_5 = arith.constant 0 : index
    %c0_6 = arith.constant 0 : index
    %14 = vector.load %arg7[%c0_5, %c0_6] : memref<16x32xf32, #tpu.memory_space<vmem>>, vector<16x32xf32>
    %cst_7 = arith.constant dense<0.000000e+00> : vector<64x32xf32>
    %15 = tpu.matmul %11, %14, %cst_7 {dimension_numbers = #tpu.dot_dimension_numbers<[1], [0], [0], [1], [0, 0, 1, 1], [], []>} : vector<64x16xf32>, vector<16x32xf32>, vector<64x32xf32> -> vector<64x32xf32>
    %16 = arith.addf %13, %15 : vector<64x32xf32>
    %c0_8 = arith.constant 0 : index
    %c0_9 = arith.constant 0 : index
    %17 = vector.load %arg8[%c0_8, %c0_9] : memref<32x96xf32, #tpu.memory_space<vmem>>, vector<32x96xf32>
    %cst_10 = arith.constant dense<0.000000e+00> : vector<64x96xf32>
    %18 = tpu.matmul %16, %17, %cst_10 {dimension_numbers = #tpu.dot_dimension_numbers<[1], [0], [0], [1], [0, 0, 1, 1], [], []>} : vector<64x32xf32>, vector<32x96xf32>, vector<64x96xf32> -> vector<64x96xf32>
    %c0_11 = arith.constant 0 : index
    %c0_12 = arith.constant 0 : index
    %19 = vector.load %arg3[%c0_11, %c0_12] : memref<64x64xf32, #tpu.memory_space<vmem>>, vector<64x64xf32>
    %c0_13 = arith.constant 0 : index
    %c0_14 = arith.constant 0 : index
    %20 = vector.load %arg9[%c0_13, %c0_14] : memref<32x32xf32, #tpu.memory_space<vmem>>, vector<32x32xf32>
    %21 = vector.extract_strided_slice %18 {offsets = [0, 0], sizes = [64, 16], strides = [1, 1]} : vector<64x96xf32> to vector<64x16xf32>
    %22 = vector.extract_strided_slice %18 {offsets = [0, 32], sizes = [64, 16], strides = [1, 1]} : vector<64x96xf32> to vector<64x16xf32>
    %23 = vector.extract_strided_slice %18 {offsets = [0, 64], sizes = [64, 16], strides = [1, 1]} : vector<64x96xf32> to vector<64x16xf32>
    %cst_15 = arith.constant dense<0.000000e+00> : vector<64x64xf32>
    %24 = tpu.matmul %21, %22, %cst_15 {dimension_numbers = #tpu.dot_dimension_numbers<[1], [1], [0], [0], [0, 0, 1, 0], [], []>} : vector<64x16xf32>, vector<64x16xf32>, vector<64x64xf32> -> vector<64x64xf32>
    %cst_16 = arith.constant 2.500000e-01 : f32
    %25 = vector.broadcast %cst_16 : f32 to vector<64x64xf32>
    %26 = arith.mulf %24, %25 : vector<64x64xf32>
    %27 = arith.addf %26, %19 : vector<64x64xf32>
    %cst_17 = arith.constant dense<0xFF800000> : vector<64xf32>
    %28 = vector.multi_reduction <maximumf>, %27, %cst_17 [1] : vector<64x64xf32> to vector<64xf32>
    %29 = vector.shape_cast %28 : vector<64xf32> to vector<64x1xf32>
    %30 = vector.broadcast %29 : vector<64x1xf32> to vector<64x64xf32>
    %31 = arith.subf %27, %30 : vector<64x64xf32>
    %32 = math.exp %31 : vector<64x64xf32>
    %cst_18 = arith.constant dense<0.000000e+00> : vector<64xf32>
    %33 = vector.multi_reduction <add>, %32, %cst_18 [1] : vector<64x64xf32> to vector<64xf32>
    %34 = vector.shape_cast %33 : vector<64xf32> to vector<64x1xf32>
    %35 = tpu.reciprocal %34 {approx = true} : vector<64x1xf32> -> vector<64x1xf32>
    %36 = vector.broadcast %35 : vector<64x1xf32> to vector<64x64xf32>
    %37 = arith.mulf %32, %36 : vector<64x64xf32>
    %cst_19 = arith.constant dense<0.000000e+00> : vector<64x16xf32>
    %38 = tpu.matmul %37, %23, %cst_19 {dimension_numbers = #tpu.dot_dimension_numbers<[1], [0], [0], [1], [0, 0, 1, 1], [], []>} : vector<64x64xf32>, vector<64x16xf32>, vector<64x16xf32> -> vector<64x16xf32>
    %39 = vector.extract_strided_slice %20 {offsets = [0, 0], sizes = [16, 32], strides = [1, 1]} : vector<32x32xf32> to vector<16x32xf32>
    %cst_20 = arith.constant dense<0.000000e+00> : vector<64x32xf32>
    %40 = tpu.matmul %38, %39, %cst_20 {dimension_numbers = #tpu.dot_dimension_numbers<[1], [0], [0], [1], [0, 0, 1, 1], [], []>} : vector<64x16xf32>, vector<16x32xf32>, vector<64x32xf32> -> vector<64x32xf32>
    %41 = vector.extract_strided_slice %18 {offsets = [0, 16], sizes = [64, 16], strides = [1, 1]} : vector<64x96xf32> to vector<64x16xf32>
    %42 = vector.extract_strided_slice %18 {offsets = [0, 48], sizes = [64, 16], strides = [1, 1]} : vector<64x96xf32> to vector<64x16xf32>
    %43 = vector.extract_strided_slice %18 {offsets = [0, 80], sizes = [64, 16], strides = [1, 1]} : vector<64x96xf32> to vector<64x16xf32>
    %cst_21 = arith.constant dense<0.000000e+00> : vector<64x64xf32>
    %44 = tpu.matmul %41, %42, %cst_21 {dimension_numbers = #tpu.dot_dimension_numbers<[1], [1], [0], [0], [0, 0, 1, 0], [], []>} : vector<64x16xf32>, vector<64x16xf32>, vector<64x64xf32> -> vector<64x64xf32>
    %cst_22 = arith.constant 2.500000e-01 : f32
    %45 = vector.broadcast %cst_22 : f32 to vector<64x64xf32>
    %46 = arith.mulf %44, %45 : vector<64x64xf32>
    %47 = arith.addf %46, %19 : vector<64x64xf32>
    %cst_23 = arith.constant dense<0xFF800000> : vector<64xf32>
    %48 = vector.multi_reduction <maximumf>, %47, %cst_23 [1] : vector<64x64xf32> to vector<64xf32>
    %49 = vector.shape_cast %48 : vector<64xf32> to vector<64x1xf32>
    %50 = vector.broadcast %49 : vector<64x1xf32> to vector<64x64xf32>
    %51 = arith.subf %47, %50 : vector<64x64xf32>
    %52 = math.exp %51 : vector<64x64xf32>
    %cst_24 = arith.constant dense<0.000000e+00> : vector<64xf32>
    %53 = vector.multi_reduction <add>, %52, %cst_24 [1] : vector<64x64xf32> to vector<64xf32>
    %54 = vector.shape_cast %53 : vector<64xf32> to vector<64x1xf32>
    %55 = tpu.reciprocal %54 {approx = true} : vector<64x1xf32> -> vector<64x1xf32>
    %56 = vector.broadcast %55 : vector<64x1xf32> to vector<64x64xf32>
    %57 = arith.mulf %52, %56 : vector<64x64xf32>
    %cst_25 = arith.constant dense<0.000000e+00> : vector<64x16xf32>
    %58 = tpu.matmul %57, %43, %cst_25 {dimension_numbers = #tpu.dot_dimension_numbers<[1], [0], [0], [1], [0, 0, 1, 1], [], []>} : vector<64x64xf32>, vector<64x16xf32>, vector<64x16xf32> -> vector<64x16xf32>
    %59 = vector.extract_strided_slice %20 {offsets = [16, 0], sizes = [16, 32], strides = [1, 1]} : vector<32x32xf32> to vector<16x32xf32>
    %cst_26 = arith.constant dense<0.000000e+00> : vector<64x32xf32>
    %60 = tpu.matmul %58, %59, %cst_26 {dimension_numbers = #tpu.dot_dimension_numbers<[1], [0], [0], [1], [0, 0, 1, 1], [], []>} : vector<64x16xf32>, vector<16x32xf32>, vector<64x32xf32> -> vector<64x32xf32>
    %61 = arith.addf %40, %60 : vector<64x32xf32>
    %62 = arith.addf %16, %61 : vector<64x32xf32>
    %c0_27 = arith.constant 0 : index
    %c0_28 = arith.constant 0 : index
    %63 = vector.load %arg10[%c0_27, %c0_28] : memref<1x32xf32, #tpu.memory_space<vmem>>, vector<1x32xf32>
    %c0_29 = arith.constant 0 : index
    %c0_30 = arith.constant 0 : index
    %64 = vector.load %arg11[%c0_29, %c0_30] : memref<1x32xf32, #tpu.memory_space<vmem>>, vector<1x32xf32>
    %cst_31 = arith.constant dense<0.000000e+00> : vector<64xf32>
    %65 = vector.multi_reduction <add>, %62, %cst_31 [1] : vector<64x32xf32> to vector<64xf32>
    %66 = vector.shape_cast %65 : vector<64xf32> to vector<64x1xf32>
    %cst_32 = arith.constant 3.200000e+01 : f32
    %67 = vector.broadcast %cst_32 : f32 to vector<64x1xf32>
    %68 = arith.divf %66, %67 : vector<64x1xf32>
    %69 = vector.broadcast %68 : vector<64x1xf32> to vector<64x32xf32>
    %70 = arith.subf %62, %69 : vector<64x32xf32>
    %71 = arith.mulf %70, %70 : vector<64x32xf32>
    %cst_33 = arith.constant dense<0.000000e+00> : vector<64xf32>
    %72 = vector.multi_reduction <add>, %71, %cst_33 [1] : vector<64x32xf32> to vector<64xf32>
    %73 = vector.shape_cast %72 : vector<64xf32> to vector<64x1xf32>
    %cst_34 = arith.constant 3.200000e+01 : f32
    %74 = vector.broadcast %cst_34 : f32 to vector<64x1xf32>
    %75 = arith.divf %73, %74 : vector<64x1xf32>
    %76 = vector.broadcast %68 : vector<64x1xf32> to vector<64x32xf32>
    %77 = arith.subf %62, %76 : vector<64x32xf32>
    %cst_35 = arith.constant 9.99999974E-6 : f32
    %78 = vector.broadcast %cst_35 : f32 to vector<64x1xf32>
    %79 = arith.addf %75, %78 : vector<64x1xf32>
    %80 = math.rsqrt %79 : vector<64x1xf32>
    %81 = vector.broadcast %80 : vector<64x1xf32> to vector<64x32xf32>
    %82 = arith.mulf %77, %81 : vector<64x32xf32>
    %83 = vector.broadcast %63 : vector<1x32xf32> to vector<64x32xf32>
    %84 = arith.mulf %82, %83 : vector<64x32xf32>
    %85 = vector.broadcast %64 : vector<1x32xf32> to vector<64x32xf32>
    %86 = arith.addf %84, %85 : vector<64x32xf32>
    %c0_36 = arith.constant 0 : index
    %c0_37 = arith.constant 0 : index
    %87 = vector.load %arg14[%c0_36, %c0_37] : memref<32x64xf32, #tpu.memory_space<vmem>>, vector<32x64xf32>
    %cst_38 = arith.constant dense<0.000000e+00> : vector<64x64xf32>
    %88 = tpu.matmul %86, %87, %cst_38 {dimension_numbers = #tpu.dot_dimension_numbers<[1], [0], [0], [1], [0, 0, 1, 1], [], []>} : vector<64x32xf32>, vector<32x64xf32>, vector<64x64xf32> -> vector<64x64xf32>
    %c0_39 = arith.constant 0 : index
    %c0_40 = arith.constant 0 : index
    %89 = vector.load %arg15[%c0_39, %c0_40] : memref<1x64xf32, #tpu.memory_space<vmem>>, vector<1x64xf32>
    %90 = vector.broadcast %89 : vector<1x64xf32> to vector<64x64xf32>
    %91 = arith.addf %88, %90 : vector<64x64xf32>
    %cst_41 = arith.constant 0.000000e+00 : f32
    %92 = vector.broadcast %cst_41 : f32 to vector<64x64xf32>
    %93 = arith.maximumf %91, %92 : vector<64x64xf32>
    %c0_42 = arith.constant 0 : index
    %c0_43 = arith.constant 0 : index
    %94 = vector.load %arg16[%c0_42, %c0_43] : memref<64x32xf32, #tpu.memory_space<vmem>>, vector<64x32xf32>
    %cst_44 = arith.constant dense<0.000000e+00> : vector<64x32xf32>
    %95 = tpu.matmul %93, %94, %cst_44 {dimension_numbers = #tpu.dot_dimension_numbers<[1], [0], [0], [1], [0, 0, 1, 1], [], []>} : vector<64x64xf32>, vector<64x32xf32>, vector<64x32xf32> -> vector<64x32xf32>
    %c0_45 = arith.constant 0 : index
    %c0_46 = arith.constant 0 : index
    %96 = vector.load %arg17[%c0_45, %c0_46] : memref<1x32xf32, #tpu.memory_space<vmem>>, vector<1x32xf32>
    %97 = vector.broadcast %96 : vector<1x32xf32> to vector<64x32xf32>
    %98 = arith.addf %95, %97 : vector<64x32xf32>
    %99 = arith.addf %86, %98 : vector<64x32xf32>
    %c0_47 = arith.constant 0 : index
    %c0_48 = arith.constant 0 : index
    %100 = vector.load %arg12[%c0_47, %c0_48] : memref<1x32xf32, #tpu.memory_space<vmem>>, vector<1x32xf32>
    %c0_49 = arith.constant 0 : index
    %c0_50 = arith.constant 0 : index
    %101 = vector.load %arg13[%c0_49, %c0_50] : memref<1x32xf32, #tpu.memory_space<vmem>>, vector<1x32xf32>
    %cst_51 = arith.constant dense<0.000000e+00> : vector<64xf32>
    %102 = vector.multi_reduction <add>, %99, %cst_51 [1] : vector<64x32xf32> to vector<64xf32>
    %103 = vector.shape_cast %102 : vector<64xf32> to vector<64x1xf32>
    %cst_52 = arith.constant 3.200000e+01 : f32
    %104 = vector.broadcast %cst_52 : f32 to vector<64x1xf32>
    %105 = arith.divf %103, %104 : vector<64x1xf32>
    %106 = vector.broadcast %105 : vector<64x1xf32> to vector<64x32xf32>
    %107 = arith.subf %99, %106 : vector<64x32xf32>
    %108 = arith.mulf %107, %107 : vector<64x32xf32>
    %cst_53 = arith.constant dense<0.000000e+00> : vector<64xf32>
    %109 = vector.multi_reduction <add>, %108, %cst_53 [1] : vector<64x32xf32> to vector<64xf32>
    %110 = vector.shape_cast %109 : vector<64xf32> to vector<64x1xf32>
    %cst_54 = arith.constant 3.200000e+01 : f32
    %111 = vector.broadcast %cst_54 : f32 to vector<64x1xf32>
    %112 = arith.divf %110, %111 : vector<64x1xf32>
    %113 = vector.broadcast %105 : vector<64x1xf32> to vector<64x32xf32>
    %114 = arith.subf %99, %113 : vector<64x32xf32>
    %cst_55 = arith.constant 9.99999974E-6 : f32
    %115 = vector.broadcast %cst_55 : f32 to vector<64x1xf32>
    %116 = arith.addf %112, %115 : vector<64x1xf32>
    %117 = math.rsqrt %116 : vector<64x1xf32>
    %118 = vector.broadcast %117 : vector<64x1xf32> to vector<64x32xf32>
    %119 = arith.mulf %114, %118 : vector<64x32xf32>
    %120 = vector.broadcast %100 : vector<1x32xf32> to vector<64x32xf32>
    %121 = arith.mulf %119, %120 : vector<64x32xf32>
    %122 = vector.broadcast %101 : vector<1x32xf32> to vector<64x32xf32>
    %123 = arith.addf %121, %122 : vector<64x32xf32>
    %c0_56 = arith.constant 0 : index
    %c0_57 = arith.constant 0 : index
    %124 = vector.load %arg18[%c0_56, %c0_57] : memref<32x32xf32, #tpu.memory_space<vmem>>, vector<32x32xf32>
    %cst_58 = arith.constant dense<0.000000e+00> : vector<64x32xf32>
    %125 = tpu.matmul %123, %124, %cst_58 {dimension_numbers = #tpu.dot_dimension_numbers<[1], [0], [0], [1], [0, 0, 1, 1], [], []>} : vector<64x32xf32>, vector<32x32xf32>, vector<64x32xf32> -> vector<64x32xf32>
    %c0_59 = arith.constant 0 : index
    %c0_60 = arith.constant 0 : index
    %126 = vector.load %arg19[%c0_59, %c0_60] : memref<1x32xf32, #tpu.memory_space<vmem>>, vector<1x32xf32>
    %127 = vector.broadcast %126 : vector<1x32xf32> to vector<64x32xf32>
    %128 = arith.addf %125, %127 : vector<64x32xf32>
    %129 = math.tanh %128 : vector<64x32xf32>
    %130 = vector.shape_cast %129 : vector<64x32xf32> to vector<8x8x32xf32>
    %c0_61 = arith.constant 0 : index
    %c0_62 = arith.constant 0 : index
    %131 = vector.load %arg20[%c0_61, %c0_62] : memref<1x32xf32, #tpu.memory_space<vmem>>, vector<1x32xf32>
    %132 = vector.shape_cast %131 : vector<1x32xf32> to vector<1x1x32xf32>
    %133 = vector.broadcast %132 : vector<1x1x32xf32> to vector<8x8x32xf32>
    %134 = arith.mulf %130, %133 : vector<8x8x32xf32>
    %cst_63 = arith.constant dense<0.000000e+00> : vector<8x8xf32>
    %135 = vector.multi_reduction <add>, %134, %cst_63 [2] : vector<8x8x32xf32> to vector<8x8xf32>
    %c0_64 = arith.constant 0 : index
    %c0_65 = arith.constant 0 : index
    %136 = vector.load %arg4[%c0_64, %c0_65] : memref<8x8xf32, #tpu.memory_space<vmem>>, vector<8x8xf32>
    %137 = arith.addf %135, %136 : vector<8x8xf32>
    %cst_66 = arith.constant dense<0xFF800000> : vector<8xf32>
    %138 = vector.multi_reduction <maximumf>, %137, %cst_66 [1] : vector<8x8xf32> to vector<8xf32>
    %139 = vector.shape_cast %138 : vector<8xf32> to vector<8x1xf32>
    %140 = vector.broadcast %139 : vector<8x1xf32> to vector<8x8xf32>
    %141 = arith.subf %137, %140 : vector<8x8xf32>
    %142 = math.exp %141 : vector<8x8xf32>
    %cst_67 = arith.constant dense<0.000000e+00> : vector<8xf32>
    %143 = vector.multi_reduction <add>, %142, %cst_67 [1] : vector<8x8xf32> to vector<8xf32>
    %144 = vector.shape_cast %143 : vector<8xf32> to vector<8x1xf32>
    %145 = tpu.reciprocal %144 {approx = true} : vector<8x1xf32> -> vector<8x1xf32>
    %146 = vector.broadcast %145 : vector<8x1xf32> to vector<8x8xf32>
    %147 = arith.mulf %142, %146 : vector<8x8xf32>
    %148 = vector.shape_cast %123 : vector<64x32xf32> to vector<8x8x32xf32>
    %149 = vector.shape_cast %147 : vector<8x8xf32> to vector<8x8x1xf32>
    %150 = vector.broadcast %149 : vector<8x8x1xf32> to vector<8x8x32xf32>
    %151 = arith.mulf %148, %150 : vector<8x8x32xf32>
    %cst_68 = arith.constant dense<0.000000e+00> : vector<8x32xf32>
    %152 = vector.multi_reduction <add>, %151, %cst_68 [1] : vector<8x8x32xf32> to vector<8x32xf32>
    %c0_69 = arith.constant 0 : index
    %c0_70 = arith.constant 0 : index
    %153 = vector.load %arg21[%c0_69, %c0_70] : memref<32x32xf32, #tpu.memory_space<vmem>>, vector<32x32xf32>
    %cst_71 = arith.constant dense<0.000000e+00> : vector<8x32xf32>
    %154 = tpu.matmul %152, %153, %cst_71 {dimension_numbers = #tpu.dot_dimension_numbers<[1], [0], [0], [1], [0, 0, 1, 1], [], []>} : vector<8x32xf32>, vector<32x32xf32>, vector<8x32xf32> -> vector<8x32xf32>
    %c0_72 = arith.constant 0 : index
    %c0_73 = arith.constant 0 : index
    %155 = vector.load %arg22[%c0_72, %c0_73] : memref<1x32xf32, #tpu.memory_space<vmem>>, vector<1x32xf32>
    %156 = vector.broadcast %155 : vector<1x32xf32> to vector<8x32xf32>
    %157 = arith.addf %154, %156 : vector<8x32xf32>
    %158 = math.tanh %157 : vector<8x32xf32>
    %159 = vector.shape_cast %158 : vector<8x32xf32> to vector<2x4x32xf32>
    %c0_74 = arith.constant 0 : index
    %c0_75 = arith.constant 0 : index
    %160 = vector.load %arg23[%c0_74, %c0_75] : memref<1x32xf32, #tpu.memory_space<vmem>>, vector<1x32xf32>
    %161 = vector.shape_cast %160 : vector<1x32xf32> to vector<1x1x32xf32>
    %162 = vector.broadcast %161 : vector<1x1x32xf32> to vector<2x4x32xf32>
    %163 = arith.mulf %159, %162 : vector<2x4x32xf32>
    %cst_76 = arith.constant dense<0.000000e+00> : vector<2x4xf32>
    %164 = vector.multi_reduction <add>, %163, %cst_76 [2] : vector<2x4x32xf32> to vector<2x4xf32>
    %c0_77 = arith.constant 0 : index
    %c0_78 = arith.constant 0 : index
    %165 = vector.load %arg5[%c0_77, %c0_78] : memref<2x4xf32, #tpu.memory_space<vmem>>, vector<2x4xf32>
    %166 = arith.addf %164, %165 : vector<2x4xf32>
    %cst_79 = arith.constant dense<0xFF800000> : vector<2xf32>
    %167 = vector.multi_reduction <maximumf>, %166, %cst_79 [1] : vector<2x4xf32> to vector<2xf32>
    %168 = vector.shape_cast %167 : vector<2xf32> to vector<2x1xf32>
    %169 = vector.broadcast %168 : vector<2x1xf32> to vector<2x4xf32>
    %170 = arith.subf %166, %169 : vector<2x4xf32>
    %171 = math.exp %170 : vector<2x4xf32>
    %cst_80 = arith.constant dense<0.000000e+00> : vector<2xf32>
    %172 = vector.multi_reduction <add>, %171, %cst_80 [1] : vector<2x4xf32> to vector<2xf32>
    %173 = vector.shape_cast %172 : vector<2xf32> to vector<2x1xf32>
    %174 = tpu.reciprocal %173 {approx = true} : vector<2x1xf32> -> vector<2x1xf32>
    %175 = vector.broadcast %174 : vector<2x1xf32> to vector<2x4xf32>
    %176 = arith.mulf %171, %175 : vector<2x4xf32>
    %177 = vector.shape_cast %152 : vector<8x32xf32> to vector<2x4x32xf32>
    %178 = vector.shape_cast %176 : vector<2x4xf32> to vector<2x4x1xf32>
    %179 = vector.broadcast %178 : vector<2x4x1xf32> to vector<2x4x32xf32>
    %180 = arith.mulf %177, %179 : vector<2x4x32xf32>
    %cst_81 = arith.constant dense<0.000000e+00> : vector<2x32xf32>
    %181 = vector.multi_reduction <add>, %180, %cst_81 [1] : vector<2x4x32xf32> to vector<2x32xf32>
    %cst_82 = arith.constant 0.000000e+00 : f32
    %182 = vector.broadcast %cst_82 : f32 to vector<16x128xf32>
    %c0_83 = arith.constant 0 : index
    %c0_84 = arith.constant 0 : index
    %183 = vector.load %arg24[%c0_83, %c0_84] : memref<16x128xf32, #tpu.memory_space<vmem>>, vector<16x128xf32>
    tpu.vector_store %arg24[%c0_83, %c0_84], %182 {strides = array<i32>} : memref<16x128xf32, #tpu.memory_space<vmem>>, vector<16x128xf32>,
    %c0_85 = arith.constant 0 : index
    %c0_86 = arith.constant 0 : index
    %184 = vector.load %arg24[%c0_85, %c0_86] : memref<16x128xf32, #tpu.memory_space<vmem>>, vector<2x32xf32>
    tpu.vector_store %arg24[%c0_85, %c0_86], %181 {strides = array<i32>} : memref<16x128xf32, #tpu.memory_space<vmem>>, vector<2x32xf32>,
    %c2 = arith.constant 2 : index
    %c0_87 = arith.constant 0 : index
    %185 = vector.load %arg24[%c2, %c0_87] : memref<16x128xf32, #tpu.memory_space<vmem>>, vector<2x4xf32>
    tpu.vector_store %arg24[%c2, %c0_87], %176 {strides = array<i32>} : memref<16x128xf32, #tpu.memory_space<vmem>>, vector<2x4xf32>,
    %c4 = arith.constant 4 : index
    %c0_88 = arith.constant 0 : index
    %186 = vector.load %arg24[%c4, %c0_88] : memref<16x128xf32, #tpu.memory_space<vmem>>, vector<8x8xf32>
    tpu.vector_store %arg24[%c4, %c0_88], %147 {strides = array<i32>} : memref<16x128xf32, #tpu.memory_space<vmem>>, vector<8x8xf32>,
    return
  }
  func.func @transform_0(%arg0: i32) -> (i32, i32) {
    %c0_i32 = arith.constant 0 : i32
    %c0_i32_0 = arith.constant 0 : i32
    %c0_i32_1 = arith.constant 0 : i32
    return %c0_i32, %c0_i32_0 : i32, i32
  }
  func.func @transform_1(%arg0: i32) -> (i32, i32) {
    %c0_i32 = arith.constant 0 : i32
    %c0_i32_0 = arith.constant 0 : i32
    %c0_i32_1 = arith.constant 0 : i32
    return %c0_i32, %c0_i32_0 : i32, i32
  }
  func.func @transform_2(%arg0: i32) -> (i32, i32) {
    %c0_i32 = arith.constant 0 : i32
    %c0_i32_0 = arith.constant 0 : i32
    %c0_i32_1 = arith.constant 0 : i32
    return %c0_i32, %c0_i32_0 : i32, i32
  }
  func.func @transform_3(%arg0: i32) -> (i32, i32) {
    %c0_i32 = arith.constant 0 : i32
    %c0_i32_0 = arith.constant 0 : i32
    %c0_i32_1 = arith.constant 0 : i32
    return %c0_i32, %c0_i32_0 : i32, i32
  }
  func.func @transform_4(%arg0: i32) -> (i32, i32) {
    %c0_i32 = arith.constant 0 : i32
    %c0_i32_0 = arith.constant 0 : i32
    %c0_i32_1 = arith.constant 0 : i32
    return %c0_i32, %c0_i32_0 : i32, i32
  }
  func.func @transform_5(%arg0: i32) -> (i32, i32) {
    %c0_i32 = arith.constant 0 : i32
    %c0_i32_0 = arith.constant 0 : i32
    %c0_i32_1 = arith.constant 0 : i32
    return %c0_i32, %c0_i32_0 : i32, i32
  }
  func.func @transform_6(%arg0: i32) -> (i32, i32) {
    %c0_i32 = arith.constant 0 : i32
    %c0_i32_0 = arith.constant 0 : i32
    %c0_i32_1 = arith.constant 0 : i32
    return %c0_i32, %c0_i32_0 : i32, i32
  }
  func.func @transform_7(%arg0: i32) -> (i32, i32) {
    %c0_i32 = arith.constant 0 : i32
    %c0_i32_0 = arith.constant 0 : i32
    %c0_i32_1 = arith.constant 0 : i32
    return %c0_i32, %c0_i32_0 : i32, i32
  }
  func.func @transform_8(%arg0: i32) -> (i32, i32) {
    %c0_i32 = arith.constant 0 : i32
    %c0_i32_0 = arith.constant 0 : i32
    %c0_i32_1 = arith.constant 0 : i32
    return %c0_i32, %c0_i32_0 : i32, i32
  }
  func.func @transform_9(%arg0: i32) -> (i32, i32) {
    %c0_i32 = arith.constant 0 : i32
    %c0_i32_0 = arith.constant 0 : i32
    %c0_i32_1 = arith.constant 0 : i32
    return %c0_i32, %c0_i32_0 : i32, i32
  }
  func.func @transform_10(%arg0: i32) -> (i32, i32) {
    %c0_i32 = arith.constant 0 : i32
    %c0_i32_0 = arith.constant 0 : i32
    %c0_i32_1 = arith.constant 0 : i32
    return %c0_i32, %c0_i32_0 : i32, i32
  }
  func.func @transform_11(%arg0: i32) -> (i32, i32) {
    %c0_i32 = arith.constant 0 : i32
    %c0_i32_0 = arith.constant 0 : i32
    %c0_i32_1 = arith.constant 0 : i32
    return %c0_i32, %c0_i32_0 : i32, i32
  }
  func.func @transform_12(%arg0: i32) -> (i32, i32) {
    %c0_i32 = arith.constant 0 : i32
    %c0_i32_0 = arith.constant 0 : i32
    %c0_i32_1 = arith.constant 0 : i32
    return %c0_i32, %c0_i32_0 : i32, i32
  }
  func.func @transform_13(%arg0: i32) -> (i32, i32) {
    %c0_i32 = arith.constant 0 : i32
    %c0_i32_0 = arith.constant 0 : i32
    %c0_i32_1 = arith.constant 0 : i32
    return %c0_i32, %c0_i32_0 : i32, i32
  }
  func.func @transform_14(%arg0: i32) -> (i32, i32) {
    %c0_i32 = arith.constant 0 : i32
    %c0_i32_0 = arith.constant 0 : i32
    %c0_i32_1 = arith.constant 0 : i32
    return %c0_i32, %c0_i32_0 : i32, i32
  }
  func.func @transform_15(%arg0: i32) -> (i32, i32) {
    %c0_i32 = arith.constant 0 : i32
    %c0_i32_0 = arith.constant 0 : i32
    %c0_i32_1 = arith.constant 0 : i32
    return %c0_i32, %c0_i32_0 : i32, i32
  }
  func.func @transform_16(%arg0: i32) -> (i32, i32) {
    %c0_i32 = arith.constant 0 : i32
    %c0_i32_0 = arith.constant 0 : i32
    %c0_i32_1 = arith.constant 0 : i32
    return %c0_i32, %c0_i32_0 : i32, i32
  }
  func.func @transform_17(%arg0: i32) -> (i32, i32) {
    %c0_i32 = arith.constant 0 : i32
    %c0_i32_0 = arith.constant 0 : i32
    %c0_i32_1 = arith.constant 0 : i32
    return %c0_i32, %c0_i32_0 : i32, i32
  }
  func.func @transform_18(%arg0: i32) -> (i32, i32) {
    %c0_i32 = arith.constant 0 : i32
    %c0_i32_0 = arith.constant 0 : i32
    %c0_i32_1 = arith.constant 0 : i32
    return %c0_i32, %c0_i32_0 : i32, i32
  }
  func.func @transform_19(%arg0: i32) -> (i32, i32) {
    %c0_i32 = arith.constant 0 : i32
    %c0_i32_0 = arith.constant 0 : i32
    %c0_i32_1 = arith.constant 0 : i32
    return %c0_i32, %c0_i32_0 : i32, i32
  }
  func.func @transform_20(%arg0: i32) -> (i32, i32) {
    %c0_i32 = arith.constant 0 : i32
    %c0_i32_0 = arith.constant 0 : i32
    %c0_i32_1 = arith.constant 0 : i32
    return %c0_i32, %c0_i32_0 : i32, i32
  }
  func.func @transform_21(%arg0: i32) -> (i32, i32) {
    %c0_i32 = arith.constant 0 : i32
    %c0_i32_0 = arith.constant 0 : i32
    %c0_i32_1 = arith.constant 0 : i32
    return %c0_i32, %c0_i32_0 : i32, i32
  }
  func.func @transform_22(%arg0: i32) -> (i32, i32) {
    %c0_i32 = arith.constant 0 : i32
    %c0_i32_0 = arith.constant 0 : i32
    %c0_i32_1 = arith.constant 0 : i32
    return %c0_i32, %c0_i32_0 : i32, i32
  }
  func.func @transform_23(%arg0: i32) -> (i32, i32) {
    %c0_i32 = arith.constant 0 : i32
    %c0_i32_0 = arith.constant 0 : i32
    %c0_i32_1 = arith.constant 0 : i32
    return %c0_i32, %c0_i32_0 : i32, i32
  }
}

</mosaic_0001>

<llo_original>
// kernel: tpu_custom_call.1
$region0: #{tpu_custom_call.1}
  #allocation0 [shape = 'u32[]', space=smem, size = 0x4, offset = 0x4, fixed_abs, tag = 'smem constant byte address 0x4 - core index']
  #allocation1 [shape = 'u32[144,128]{1,0:T(1,128)}', space=vmem, size = 0x12000, scoped, tag = 'internal scratch']
  %s0 = inlined_call_operand.vmem [shape: s32[64,1], index: 0, kind: input, shape index: {}]
  %s1 = inlined_call_operand.vmem [shape: s32[64,1], index: 1, kind: input, shape index: {}]
  %s2 = inlined_call_operand.vmem [shape: f32[64,64], index: 2, kind: input, shape index: {}]
  %s3 = inlined_call_operand.vmem [shape: f32[8,8], index: 3, kind: input, shape index: {}]
  %s4 = inlined_call_operand.vmem [shape: f32[2,4], index: 4, kind: input, shape index: {}]
  %s5 = inlined_call_operand.vmem [shape: f32[128,32], index: 5, kind: input, shape index: {}]
  %s6 = inlined_call_operand.vmem [shape: f32[16,32], index: 6, kind: input, shape index: {}]
  %s7 = inlined_call_operand.vmem [shape: f32[32,96], index: 7, kind: input, shape index: {}]
  %s8 = inlined_call_operand.vmem [shape: f32[32,32], index: 8, kind: input, shape index: {}]
  %s9 = inlined_call_operand.vmem [shape: f32[1,32], index: 9, kind: input, shape index: {}]
  %s10 = inlined_call_operand.vmem [shape: f32[1,32], index: 10, kind: input, shape index: {}]
  %s11 = inlined_call_operand.vmem [shape: f32[1,32], index: 11, kind: input, shape index: {}]
  %s12 = inlined_call_operand.vmem [shape: f32[1,32], index: 12, kind: input, shape index: {}]
  %s13 = inlined_call_operand.vmem [shape: f32[32,64], index: 13, kind: input, shape index: {}]
  %s14 = inlined_call_operand.vmem [shape: f32[1,64], index: 14, kind: input, shape index: {}]
  %s15 = inlined_call_operand.vmem [shape: f32[64,32], index: 15, kind: input, shape index: {}]
  %s16 = inlined_call_operand.vmem [shape: f32[1,32], index: 16, kind: input, shape index: {}]
  %s17 = inlined_call_operand.vmem [shape: f32[32,32], index: 17, kind: input, shape index: {}]
  %s18 = inlined_call_operand.vmem [shape: f32[1,32], index: 18, kind: input, shape index: {}]
  %s19 = inlined_call_operand.vmem [shape: f32[1,32], index: 19, kind: input, shape index: {}]
  %s20 = inlined_call_operand.vmem [shape: f32[32,32], index: 20, kind: input, shape index: {}]
  %s21 = inlined_call_operand.vmem [shape: f32[1,32], index: 21, kind: input, shape index: {}]
  %s22 = inlined_call_operand.vmem [shape: f32[1,32], index: 22, kind: input, shape index: {}]
  %s23 = inlined_call_operand.hbm [shape: f32[16,128], index: 23, kind: output, shape index: {}]
  %s24 = sld [smem:[#allocation0]]
  $region102: #{tpu_custom_call.1} parent=0
    _
  %s26 = ssub.s32 1, %s24
  %s27 = scalar_select 0, %s26, %s24
  $region1: #{tpu_custom_call.1} parent=0
    #allocation2 [shape = 'u8[8192]{0}', space=vmem, size = 0x2000, scoped, tag = 'output window, operand 0, single buffered']
    #allocation3 [shape = 's32[1]{0}', space=sflag, size = 0x4, scoped, tag = 'scoped memory for tpu_custom_call.1']
    %28 = vsyncpa [#allocation3], 0
    // Predicated region
    $region2: #{tpu_custom_call.1} parent=1 // pred_check
      _
    $region3: #{tpu_custom_call.1} parent=1 // pred_check_branch
      %30 = sbr.rel (0) target = $region5
    $region4: #{tpu_custom_call.1} parent=1 // pred_region
      _
    $region5: #{tpu_custom_call.1} parent=1 // pred_fallthru
      _
    // Predicated region
    $region6: #{tpu_custom_call.1} parent=1 // pred_check
      _
    $region7: #{tpu_custom_call.1} parent=1 // pred_check_branch
      %32 = sbr.rel (0) target = $region9
    $region8: #{tpu_custom_call.1} parent=1 // pred_region
      _
    $region9: #{tpu_custom_call.1} parent=1 // pred_fallthru
      _
    // Predicated region
    $region10: #{tpu_custom_call.1} parent=1 // pred_check
      _
    $region11: #{tpu_custom_call.1} parent=1 // pred_check_branch
      %34 = sbr.rel (0) target = $region13
    $region12: #{tpu_custom_call.1} parent=1 // pred_region
      _
    $region13: #{tpu_custom_call.1} parent=1 // pred_fallthru
      _
    // Predicated region
    $region14: #{tpu_custom_call.1} parent=1 // pred_check
      _
    $region15: #{tpu_custom_call.1} parent=1 // pred_check_branch
      %36 = sbr.rel (0) target = $region17
    $region16: #{tpu_custom_call.1} parent=1 // pred_region
      _
    $region17: #{tpu_custom_call.1} parent=1 // pred_fallthru
      _
    // Predicated region
    $region18: #{tpu_custom_call.1} parent=1 // pred_check
      _
    $region19: #{tpu_custom_call.1} parent=1 // pred_check_branch
      %38 = sbr.rel (0) target = $region21
    $region20: #{tpu_custom_call.1} parent=1 // pred_region
      _
    $region21: #{tpu_custom_call.1} parent=1 // pred_fallthru
      _
    // Predicated region
    $region22: #{tpu_custom_call.1} parent=1 // pred_check
      _
    $region23: #{tpu_custom_call.1} parent=1 // pred_check_branch
      %40 = sbr.rel (0) target = $region25
    $region24: #{tpu_custom_call.1} parent=1 // pred_region
      _
    $region25: #{tpu_custom_call.1} parent=1 // pred_fallthru
      _
    // Predicated region
    $region26: #{tpu_custom_call.1} parent=1 // pred_check
      _
    $region27: #{tpu_custom_call.1} parent=1 // pred_check_branch
      %42 = sbr.rel (0) target = $region29
    $region28: #{tpu_custom_call.1} parent=1 // pred_region
      _
    $region29: #{tpu_custom_call.1} parent=1 // pred_fallthru
      _
    // Predicated region
    $region30: #{tpu_custom_call.1} parent=1 // pred_check
      _
    $region31: #{tpu_custom_call.1} parent=1 // pred_check_branch
      %44 = sbr.rel (0) target = $region33
    $region32: #{tpu_custom_call.1} parent=1 // pred_region
      _
    $region33: #{tpu_custom_call.1} parent=1 // pred_fallthru
      _
    // Predicated region
    $region34: #{tpu_custom_call.1} parent=1 // pred_check
      _
    $region35: #{tpu_custom_call.1} parent=1 // pred_check_branch
      %46 = sbr.rel (0) target = $region37
    $region36: #{tpu_custom_call.1} parent=1 // pred_region
      _
    $region37: #{tpu_custom_call.1} parent=1 // pred_fallthru
      _
    // Predicated region
    $region38: #{tpu_custom_call.1} parent=1 // pred_check
      _
    $region39: #{tpu_custom_call.1} parent=1 // pred_check_branch
      %48 = sbr.rel (0) target = $region41
    $region40: #{tpu_custom_call.1} parent=1 // pred_region
      _
    $region41: #{tpu_custom_call.1} parent=1 // pred_fallthru
      _
    // Predicated region
    $region42: #{tpu_custom_call.1} parent=1 // pred_check
      _
    $region43: #{tpu_custom_call.1} parent=1 // pred_check_branch
      %50 = sbr.rel (0) target = $region45
    $region44: #{tpu_custom_call.1} parent=1 // pred_region
      _
    $region45: #{tpu_custom_call.1} parent=1 // pred_fallthru
      _
    // Predicated region
    $region46: #{tpu_custom_call.1} parent=1 // pred_check
      _
    $region47: #{tpu_custom_call.1} parent=1 // pred_check_branch
      %52 = sbr.rel (0) target = $region49
    $region48: #{tpu_custom_call.1} parent=1 // pred_region
      _
    $region49: #{tpu_custom_call.1} parent=1 // pred_fallthru
      _
    // Predicated region
    $region50: #{tpu_custom_call.1} parent=1 // pred_check
      _
    $region51: #{tpu_custom_call.1} parent=1 // pred_check_branch
      %54 = sbr.rel (0) target = $region53
    $region52: #{tpu_custom_call.1} parent=1 // pred_region
      _
    $region53: #{tpu_custom_call.1} parent=1 // pred_fallthru
      _
    // Predicated region
    $region54: #{tpu_custom_call.1} parent=1 // pred_check
      _
    $region55: #{tpu_custom_call.1} parent=1 // pred_check_branch
      %56 = sbr.rel (0) target = $region57
    $region56: #{tpu_custom_call.1} parent=1 // pred_region
      _
    $region57: #{tpu_custom_call.1} parent=1 // pred_fallthru
      _
    // Predicated region
    $region58: #{tpu_custom_call.1} parent=1 // pred_check
      _
    $region59: #{tpu_custom_call.1} parent=1 // pred_check_branch
      %58 = sbr.rel (0) target = $region61
    $region60: #{tpu_custom_call.1} parent=1 // pred_region
      _
    $region61: #{tpu_custom_call.1} parent=1 // pred_fallthru
      _
    // Predicated region
    $region62: #{tpu_custom_call.1} parent=1 // pred_check
      _
    $region63: #{tpu_custom_call.1} parent=1 // pred_check_branch
      %60 = sbr.rel (0) target = $region65
    $region64: #{tpu_custom_call.1} parent=1 // pred_region
      _
    $region65: #{tpu_custom_call.1} parent=1 // pred_fallthru
      _
    // Predicated region
    $region66: #{tpu_custom_call.1} parent=1 // pred_check
      _
    $region67: #{tpu_custom_call.1} parent=1 // pred_check_branch
      %62 = sbr.rel (0) target = $region69
    $region68: #{tpu_custom_call.1} parent=1 // pred_region
      _
    $region69: #{tpu_custom_call.1} parent=1 // pred_fallthru
      _
    // Predicated region
    $region70: #{tpu_custom_call.1} parent=1 // pred_check
      _
    $region71: #{tpu_custom_call.1} parent=1 // pred_check_branch
      %64 = sbr.rel (0) target = $region73
    $region72: #{tpu_custom_call.1} parent=1 // pred_region
      _
    $region73: #{tpu_custom_call.1} parent=1 // pred_fallthru
      _
    // Predicated region
    $region74: #{tpu_custom_call.1} parent=1 // pred_check
      _
    $region75: #{tpu_custom_call.1} parent=1 // pred_check_branch
      %66 = sbr.rel (0) target = $region77
    $region76: #{tpu_custom_call.1} parent=1 // pred_region
      _
    $region77: #{tpu_custom_call.1} parent=1 // pred_fallthru
      _
    // Predicated region
    $region78: #{tpu_custom_call.1} parent=1 // pred_check
      _
    $region79: #{tpu_custom_call.1} parent=1 // pred_check_branch
      %68 = sbr.rel (0) target = $region81
    $region80: #{tpu_custom_call.1} parent=1 // pred_region
      _
    $region81: #{tpu_custom_call.1} parent=1 // pred_fallthru
      _
    // Predicated region
    $region82: #{tpu_custom_call.1} parent=1 // pred_check
      _
    $region83: #{tpu_custom_call.1} parent=1 // pred_check_branch
      %70 = sbr.rel (0) target = $region85
    $region84: #{tpu_custom_call.1} parent=1 // pred_region
      _
    $region85: #{tpu_custom_call.1} parent=1 // pred_fallthru
      _
    // Predicated region
    $region86: #{tpu_custom_call.1} parent=1 // pred_check
      _
    $region87: #{tpu_custom_call.1} parent=1 // pred_check_branch
      %72 = sbr.rel (0) target = $region89
    $region88: #{tpu_custom_call.1} parent=1 // pred_region
      _
    $region89: #{tpu_custom_call.1} parent=1 // pred_fallthru
      _
    // Predicated region
    $region90: #{tpu_custom_call.1} parent=1 // pred_check
      _
    $region91: #{tpu_custom_call.1} parent=1 // pred_check_branch
      %74 = sbr.rel (0) target = $region93
    $region92: #{tpu_custom_call.1} parent=1 // pred_region
      _
    $region93: #{tpu_custom_call.1} parent=1 // pred_fallthru
      _
    %v75 = vld [vmem:[%s0] sm:$0xff]
    %v76 = vld [vmem:[%s0 + $0x8] sm:$0xff]
    %v77 = vld [vmem:[%s0 + $0x10] sm:$0xff]
    %v78 = vld [vmem:[%s0 + $0x18] sm:$0xff]
    %v79 = vld [vmem:[%s0 + $0x20] sm:$0xff]
    %v80 = vld [vmem:[%s0 + $0x28] sm:$0xff]
    %v81 = vld [vmem:[%s0 + $0x30] sm:$0xff]
    %v82 = vld [vmem:[%s0 + $0x38] sm:$0xff]
    %v83 = vld [vmem:[%s1] sm:$0xff]
    %v84 = vld [vmem:[%s1 + $0x8] sm:$0xff]
    %v85 = vld [vmem:[%s1 + $0x10] sm:$0xff]
    %v86 = vld [vmem:[%s1 + $0x18] sm:$0xff]
    %v87 = vld [vmem:[%s1 + $0x20] sm:$0xff]
    %v88 = vld [vmem:[%s1 + $0x28] sm:$0xff]
    %v89 = vld [vmem:[%s1 + $0x30] sm:$0xff]
    %v90 = vld [vmem:[%s1 + $0x38] sm:$0xff]
    %v91 = vlaneseq
    %v92 = vand.u32 %v91, 127
    %93 = vset.pattern.permute.xlu0 0
    %94 = vperm.xlu0 %93, %v75
    %v95 = vpop.permute.xlu0 %94
    %96 = vset.pattern.permute.xlu0 0
    %97 = vperm.xlu0 %96, %v76
    %v98 = vpop.permute.xlu0 %97
    %99 = vset.pattern.permute.xlu0 0
    %100 = vperm.xlu0 %99, %v77
    %v101 = vpop.permute.xlu0 %100
    %102 = vset.pattern.permute.xlu0 0
    %103 = vperm.xlu0 %102, %v78
    %v104 = vpop.permute.xlu0 %103
    %105 = vset.pattern.permute.xlu0 0
    %106 = vperm.xlu0 %105, %v79
    %v107 = vpop.permute.xlu0 %106
    %108 = vset.pattern.permute.xlu0 0
    %109 = vperm.xlu0 %108, %v80
    %v110 = vpop.permute.xlu0 %109
    %111 = vset.pattern.permute.xlu0 0
    %112 = vperm.xlu0 %111, %v81
    %v113 = vpop.permute.xlu0 %112
    %114 = vset.pattern.permute.xlu0 0
    %115 = vperm.xlu0 %114, %v82
    %v116 = vpop.permute.xlu0 %115
    %vm117 = vcmp.eq.s32.totalorder %v95, %v92
    %vm118 = vcmp.eq.s32.totalorder %v98, %v92
    %vm119 = vcmp.eq.s32.totalorder %v101, %v92
    %vm120 = vcmp.eq.s32.totalorder %v104, %v92
    %vm121 = vcmp.eq.s32.totalorder %v107, %v92
    %vm122 = vcmp.eq.s32.totalorder %v110, %v92
    %vm123 = vcmp.eq.s32.totalorder %v113, %v92
    %vm124 = vcmp.eq.s32.totalorder %v116, %v92
    %v125 = vsel %vm117, 1, 0
    %v126 = vsel %vm118, 1, 0
    %v127 = vsel %vm119, 1, 0
    %v128 = vsel %vm120, 1, 0
    %v129 = vsel %vm121, 1, 0
    %v130 = vsel %vm122, 1, 0
    %v131 = vsel %vm123, 1, 0
    %v132 = vsel %vm124, 1, 0
    %v133 = vcvt.s32.f32 %v125
    %v134 = vcvt.s32.f32 %v126
    %v135 = vcvt.s32.f32 %v127
    %v136 = vcvt.s32.f32 %v128
    %v137 = vcvt.s32.f32 %v129
    %v138 = vcvt.s32.f32 %v130
    %v139 = vcvt.s32.f32 %v131
    %v140 = vcvt.s32.f32 %v132
    %141 = vset.pattern.permute.xlu0 0
    %142 = vperm.xlu0 %141, %v83
    %v143 = vpop.permute.xlu0 %142
    %144 = vset.pattern.permute.xlu0 0
    %145 = vperm.xlu0 %144, %v84
    %v146 = vpop.permute.xlu0 %145
    %147 = vset.pattern.permute.xlu0 0
    %148 = vperm.xlu0 %147, %v85
    %v149 = vpop.permute.xlu0 %148
    %150 = vset.pattern.permute.xlu0 0
    %151 = vperm.xlu0 %150, %v86
    %v152 = vpop.permute.xlu0 %151
    %153 = vset.pattern.permute.xlu0 0
    %154 = vperm.xlu0 %153, %v87
    %v155 = vpop.permute.xlu0 %154
    %156 = vset.pattern.permute.xlu0 0
    %157 = vperm.xlu0 %156, %v88
    %v158 = vpop.permute.xlu0 %157
    %159 = vset.pattern.permute.xlu0 0
    %160 = vperm.xlu0 %159, %v89
    %v161 = vpop.permute.xlu0 %160
    %162 = vset.pattern.permute.xlu0 0
    %163 = vperm.xlu0 %162, %v90
    %v164 = vpop.permute.xlu0 %163
    %vm165 = vcmp.eq.s32.totalorder %v143, %v92
    %vm166 = vcmp.eq.s32.totalorder %v146, %v92
    %vm167 = vcmp.eq.s32.totalorder %v149, %v92
    %vm168 = vcmp.eq.s32.totalorder %v152, %v92
    %vm169 = vcmp.eq.s32.totalorder %v155, %v92
    %vm170 = vcmp.eq.s32.totalorder %v158, %v92
    %vm171 = vcmp.eq.s32.totalorder %v161, %v92
    %vm172 = vcmp.eq.s32.totalorder %v164, %v92
    %v173 = vsel %vm165, 1, 0
    %v174 = vsel %vm166, 1, 0
    %v175 = vsel %vm167, 1, 0
    %v176 = vsel %vm168, 1, 0
    %v177 = vsel %vm169, 1, 0
    %v178 = vsel %vm170, 1, 0
    %v179 = vsel %vm171, 1, 0
    %v180 = vsel %vm172, 1, 0
    %v181 = vcvt.s32.f32 %v173
    %v182 = vcvt.s32.f32 %v174
    %v183 = vcvt.s32.f32 %v175
    %v184 = vcvt.s32.f32 %v176
    %v185 = vcvt.s32.f32 %v177
    %v186 = vcvt.s32.f32 %v178
    %v187 = vcvt.s32.f32 %v179
    %v188 = vcvt.s32.f32 %v180
    %v189 = vld [vmem:[%s5] sm:$0xff]
    %v190 = vld [vmem:[%s5 + $0x8] sm:$0xff]
    %v191 = vld [vmem:[%s5 + $0x10] sm:$0xff]
    %v192 = vld [vmem:[%s5 + $0x18] sm:$0xff]
    %v193 = vld [vmem:[%s5 + $0x20] sm:$0xff]
    %v194 = vld [vmem:[%s5 + $0x28] sm:$0xff]
    %v195 = vld [vmem:[%s5 + $0x30] sm:$0xff]
    %v196 = vld [vmem:[%s5 + $0x38] sm:$0xff]
    %v197 = vld [vmem:[%s5 + $0x40] sm:$0xff]
    %v198 = vld [vmem:[%s5 + $0x48] sm:$0xff]
    %v199 = vld [vmem:[%s5 + $0x50] sm:$0xff]
    %v200 = vld [vmem:[%s5 + $0x58] sm:$0xff]
    %v201 = vld [vmem:[%s5 + $0x60] sm:$0xff]
    %v202 = vld [vmem:[%s5 + $0x68] sm:$0xff]
    %v203 = vld [vmem:[%s5 + $0x70] sm:$0xff]
    %v204 = vld [vmem:[%s5 + $0x78] sm:$0xff]
    %v205 = vld [vmem:[%s6] sm:$0xff]
    %v206 = vld [vmem:[%s6 + $0x8] sm:$0xff]
    %vm207 = vcmask 130048
    %v209 = vsel %vm207, %v181, 0
    %v212 = vsel %vm207, %v182, 0
    %v215 = vsel %vm207, %v183, 0
    %v218 = vsel %vm207, %v184, 0
    %v221 = vsel %vm207, %v185, 0
    %v224 = vsel %vm207, %v186, 0
    %v227 = vsel %vm207, %v187, 0
    %v230 = vsel %vm207, %v188, 0
    %232 = vmatprep.subr.mxu0 0.0
    %233 = vmatpush1.msra.mxu0 %v205
    %234 = vmatprep.subr.mxu0 0.0
    %235 = vmatpush1.msra.mxu0 %v206
    %236 = vmatprep.subr.mxu0 0.0
    %237 = vmatpush1.msra.mxu0 0.0
    %238 = vmatprep.subr.mxu0 0.0
    %239 = vmatpush1.msra.mxu0 0.0
    %240 = vmatprep.subr.mxu0 0.0
    %241 = vmatpush1.msra.mxu0 0.0
    %242 = vmatprep.subr.mxu0 0.0
    %243 = vmatpush1.msra.mxu0 0.0
    %244 = vmatprep.subr.mxu0 0.0
    %245 = vmatpush1.msra.mxu0 0.0
    %246 = vmatprep.subr.mxu0 0.0
    %247 = vmatpush1.msra.mxu0 0.0
    %248 = vmatprep.subr.mxu0 0.0
    %249 = vmatpush1.msra.mxu0 0.0
    %250 = vmatprep.subr.mxu0 0.0
    %251 = vmatpush1.msra.mxu0 0.0
    %252 = vmatprep.subr.mxu0 0.0
    %253 = vmatpush1.msra.mxu0 0.0
    %254 = vmatprep.subr.mxu0 0.0
    %255 = vmatpush1.msra.mxu0 0.0
    %256 = vmatprep.subr.mxu0 0.0
    %257 = vmatpush1.msra.mxu0 0.0
    %258 = vmatprep.subr.mxu0 0.0
    %259 = vmatpush1.msra.mxu0 0.0
    %260 = vmatprep.subr.mxu0 0.0
    %261 = vmatpush1.msra.mxu0 0.0
    %262 = vmatprep.subr.mxu0 0.0
    %263 = vmatpush1.msra.mxu0 0.0
    %264 = vmatprep.subr.mxu0 0.0
    %265 = vmatpush1.msra.mxu0 0.0
    %266 = vmatprep.subr.mxu0 0.0
    %267 = vmatpush1.msra.mxu0 0.0
    %268 = vmatprep.subr.mxu0 0.0
    %269 = vmatpush1.msra.mxu0 0.0
    %270 = vmatprep.subr.mxu0 0.0
    %271 = vmatpush1.msra.mxu0 0.0
    %272 = vmatprep.subr.mxu0 0.0
    %273 = vmatpush1.msra.mxu0 0.0
    %274 = vmatprep.subr.mxu0 0.0
    %275 = vmatpush1.msra.mxu0 0.0
    %276 = vmatprep.subr.mxu0 0.0
    %277 = vmatpush1.msra.mxu0 0.0
    %278 = vmatprep.subr.mxu0 0.0
    %279 = vmatpush1.msra.mxu0 0.0
    %280 = vmatprep.subr.mxu0 0.0
    %281 = vmatpush1.msra.mxu0 0.0
    %282 = vmatprep.subr.mxu0 0.0
    %283 = vmatpush1.msra.mxu0 0.0
    %284 = vmatprep.subr.mxu0 0.0
    %285 = vmatpush1.msra.mxu0 0.0
    %286 = vmatprep.subr.mxu0 0.0
    %287 = vmatpush1.msra.mxu0 0.0
    %288 = vmatprep.subr.mxu0 0.0
    %289 = vmatpush1.msra.mxu0 0.0
    %290 = vmatprep.subr.mxu0 0.0
    %291 = vmatpush1.msra.mxu0 0.0
    %292 = vmatprep.subr.mxu0 0.0
    %293 = vmatpush1.msra.mxu0 0.0
    %294 = vmatprep.subr.mxu0 0.0
    %295 = vmatpush1.msra.mxu0 0.0
    %296 = vmatprep.mubr.f32.mxu0 0.0
    %297 = vmatmul.mubr.f32.gmra.mrb[0].mxu0 %v209
    %v298 = vpop.f32.mrb[0].mxu0
    %v299 = vadd.f32 0.0, %v298
    %v300 = vpop.f32.mrb[0].mxu0
    %301 = vmatprep.mubr.f32.mxu0 0.0
    %302 = vmatmul.mubr.f32.gmra.mrb[0].mxu0 %v212
    %v303 = vpop.f32.mrb[0].mxu0
    %v304 = vadd.f32 0.0, %v303
    %v305 = vpop.f32.mrb[0].mxu0
    %306 = vmatprep.mubr.f32.mxu0 0.0
    %307 = vmatmul.mubr.f32.gmra.mrb[0].mxu0 %v215
    %v308 = vpop.f32.mrb[0].mxu0
    %v309 = vadd.f32 0.0, %v308
    %v310 = vpop.f32.mrb[0].mxu0
    %311 = vmatprep.mubr.f32.mxu0 0.0
    %312 = vmatmul.mubr.f32.gmra.mrb[0].mxu0 %v218
    %v313 = vpop.f32.mrb[0].mxu0
    %v314 = vadd.f32 0.0, %v313
    %v315 = vpop.f32.mrb[0].mxu0
    %316 = vmatprep.mubr.f32.mxu0 0.0
    %317 = vmatmul.mubr.f32.gmra.mrb[0].mxu0 %v221
    %v318 = vpop.f32.mrb[0].mxu0
    %v319 = vadd.f32 0.0, %v318
    %v320 = vpop.f32.mrb[0].mxu0
    %321 = vmatprep.mubr.f32.mxu0 0.0
    %322 = vmatmul.mubr.f32.gmra.mrb[0].mxu0 %v224
    %v323 = vpop.f32.mrb[0].mxu0
    %v324 = vadd.f32 0.0, %v323
    %v325 = vpop.f32.mrb[0].mxu0
    %326 = vmatprep.mubr.f32.mxu0 0.0
    %327 = vmatmul.mubr.f32.gmra.mrb[0].mxu0 %v227
    %v328 = vpop.f32.mrb[0].mxu0
    %v329 = vadd.f32 0.0, %v328
    %v330 = vpop.f32.mrb[0].mxu0
    %331 = vmatprep.mubr.f32.mxu0 0.0
    %332 = vmatmul.mubr.f32.gmra.mrb[0].mxu0 %v230
    %v333 = vpop.f32.mrb[0].mxu0
    %v334 = vadd.f32 0.0, %v333
    %v335 = vpop.f32.mrb[0].mxu0
    %336 = vdwg.mxu0
    %337 = vmatprep.subr.mxu0 0.0
    %338 = vmatpush1.msra.mxu0 %v189
    %339 = vmatprep.subr.mxu0 0.0
    %340 = vmatpush1.msra.mxu0 %v190
    %341 = vmatprep.subr.mxu0 0.0
    %342 = vmatpush1.msra.mxu0 %v191
    %343 = vmatprep.subr.mxu0 0.0
    %344 = vmatpush1.msra.mxu0 %v192
    %345 = vmatprep.subr.mxu0 0.0
    %346 = vmatpush1.msra.mxu0 %v193
    %347 = vmatprep.subr.mxu0 0.0
    %348 = vmatpush1.msra.mxu0 %v194
    %349 = vmatprep.subr.mxu0 0.0
    %350 = vmatpush1.msra.mxu0 %v195
    %351 = vmatprep.subr.mxu0 0.0
    %352 = vmatpush1.msra.mxu0 %v196
    %353 = vmatprep.subr.mxu0 0.0
    %354 = vmatpush1.msra.mxu0 %v197
    %355 = vmatprep.subr.mxu0 0.0
    %356 = vmatpush1.msra.mxu0 %v198
    %357 = vmatprep.subr.mxu0 0.0
    %358 = vmatpush1.msra.mxu0 %v199
    %359 = vmatprep.subr.mxu0 0.0
    %360 = vmatpush1.msra.mxu0 %v200
    %361 = vmatprep.subr.mxu0 0.0
    %362 = vmatpush1.msra.mxu0 %v201
    %363 = vmatprep.subr.mxu0 0.0
    %364 = vmatpush1.msra.mxu0 %v202
    %365 = vmatprep.subr.mxu0 0.0
    %366 = vmatpush1.msra.mxu0 %v203
    %367 = vmatprep.subr.mxu0 0.0
    %368 = vmatpush1.msra.mxu0 %v204
    %369 = vmatprep.subr.mxu0 0.0
    %370 = vmatpush1.msra.mxu0 0.0
    %371 = vmatprep.subr.mxu0 0.0
    %372 = vmatpush1.msra.mxu0 0.0
    %373 = vmatprep.subr.mxu0 0.0
    %374 = vmatpush1.msra.mxu0 0.0
    %375 = vmatprep.subr.mxu0 0.0
    %376 = vmatpush1.msra.mxu0 0.0
    %377 = vmatprep.subr.mxu0 0.0
    %378 = vmatpush1.msra.mxu0 0.0
    %379 = vmatprep.subr.mxu0 0.0
    %380 = vmatpush1.msra.mxu0 0.0
    %381 = vmatprep.subr.mxu0 0.0
    %382 = vmatpush1.msra.mxu0 0.0
    %383 = vmatprep.subr.mxu0 0.0
    %384 = vmatpush1.msra.mxu0 0.0
    %385 = vmatprep.subr.mxu0 0.0
    %386 = vmatpush1.msra.mxu0 0.0
    %387 = vmatprep.subr.mxu0 0.0
    %388 = vmatpush1.msra.mxu0 0.0
    %389 = vmatprep.subr.mxu0 0.0
    %390 = vmatpush1.msra.mxu0 0.0
    %391 = vmatprep.subr.mxu0 0.0
    %392 = vmatpush1.msra.mxu0 0.0
    %393 = vmatprep.subr.mxu0 0.0
    %394 = vmatpush1.msra.mxu0 0.0
    %395 = vmatprep.subr.mxu0 0.0
    %396 = vmatpush1.msra.mxu0 0.0
    %397 = vmatprep.subr.mxu0 0.0
    %398 = vmatpush1.msra.mxu0 0.0
    %399 = vmatprep.subr.mxu0 0.0
    %400 = vmatpush1.msra.mxu0 0.0
    %401 = vmatprep.mubr.f32.mxu0 0.0
    %402 = vmatmul.mubr.f32.gmra.mrb[0].mxu0 %v133
    %v403 = vpop.f32.mrb[0].mxu0
    %v404 = vadd.f32 %v299, %v403
    %v405 = vpop.f32.mrb[0].mxu0
    %406 = vmatprep.mubr.f32.mxu0 0.0
    %407 = vmatmul.mubr.f32.gmra.mrb[0].mxu0 %v134
    %v408 = vpop.f32.mrb[0].mxu0
    %v409 = vadd.f32 %v304, %v408
    %v410 = vpop.f32.mrb[0].mxu0
    %411 = vmatprep.mubr.f32.mxu0 0.0
    %412 = vmatmul.mubr.f32.gmra.mrb[0].mxu0 %v135
    %v413 = vpop.f32.mrb[0].mxu0
    %v414 = vadd.f32 %v309, %v413
    %v415 = vpop.f32.mrb[0].mxu0
    %416 = vmatprep.mubr.f32.mxu0 0.0
    %417 = vmatmul.mubr.f32.gmra.mrb[0].mxu0 %v136
    %v418 = vpop.f32.mrb[0].mxu0
    %v419 = vadd.f32 %v314, %v418
    %v420 = vpop.f32.mrb[0].mxu0
    %421 = vmatprep.mubr.f32.mxu0 0.0
    %422 = vmatmul.mubr.f32.gmra.mrb[0].mxu0 %v137
    %v423 = vpop.f32.mrb[0].mxu0
    %v424 = vadd.f32 %v319, %v423
    %v425 = vpop.f32.mrb[0].mxu0
    %426 = vmatprep.mubr.f32.mxu0 0.0
    %427 = vmatmul.mubr.f32.gmra.mrb[0].mxu0 %v138
    %v428 = vpop.f32.mrb[0].mxu0
    %v429 = vadd.f32 %v324, %v428
    %v430 = vpop.f32.mrb[0].mxu0
    %431 = vmatprep.mubr.f32.mxu0 0.0
    %432 = vmatmul.mubr.f32.gmra.mrb[0].mxu0 %v139
    %v433 = vpop.f32.mrb[0].mxu0
    %v434 = vadd.f32 %v329, %v433
    %v435 = vpop.f32.mrb[0].mxu0
    %436 = vmatprep.mubr.f32.mxu0 0.0
    %437 = vmatmul.mubr.f32.gmra.mrb[0].mxu0 %v140
    %v438 = vpop.f32.mrb[0].mxu0
    %v439 = vadd.f32 %v334, %v438
    %v440 = vpop.f32.mrb[0].mxu0
    %441 = vdwg.mxu0
    %v442 = vld [vmem:[%s7] sm:$0xff]
    %v443 = vld [vmem:[%s7 + $0x8] sm:$0xff]
    %v444 = vld [vmem:[%s7 + $0x10] sm:$0xff]
    %v445 = vld [vmem:[%s7 + $0x18] sm:$0xff]
    %vm446 = vcmask 261120
    %v448 = vsel %vm446, %v404, 0
    %v451 = vsel %vm446, %v409, 0
    %v454 = vsel %vm446, %v414, 0
    %v457 = vsel %vm446, %v419, 0
    %v460 = vsel %vm446, %v424, 0
    %v463 = vsel %vm446, %v429, 0
    %v466 = vsel %vm446, %v434, 0
    %v469 = vsel %vm446, %v439, 0
    %471 = vmatprep.subr.mxu0 0.0
    %472 = vmatpush1.msra.mxu0 %v442
    %473 = vmatprep.subr.mxu0 0.0
    %474 = vmatpush1.msra.mxu0 %v443
    %475 = vmatprep.subr.mxu0 0.0
    %476 = vmatpush1.msra.mxu0 %v444
    %477 = vmatprep.subr.mxu0 0.0
    %478 = vmatpush1.msra.mxu0 %v445
    %479 = vmatprep.subr.mxu0 0.0
    %480 = vmatpush1.msra.mxu0 0.0
    %481 = vmatprep.subr.mxu0 0.0
    %482 = vmatpush1.msra.mxu0 0.0
    %483 = vmatprep.subr.mxu0 0.0
    %484 = vmatpush1.msra.mxu0 0.0
    %485 = vmatprep.subr.mxu0 0.0
    %486 = vmatpush1.msra.mxu0 0.0
    %487 = vmatprep.subr.mxu0 0.0
    %488 = vmatpush1.msra.mxu0 0.0
    %489 = vmatprep.subr.mxu0 0.0
    %490 = vmatpush1.msra.mxu0 0.0
    %491 = vmatprep.subr.mxu0 0.0
    %492 = vmatpush1.msra.mxu0 0.0
    %493 = vmatprep.subr.mxu0 0.0
    %494 = vmatpush1.msra.mxu0 0.0
    %495 = vmatprep.subr.mxu0 0.0
    %496 = vmatpush1.msra.mxu0 0.0
    %497 = vmatprep.subr.mxu0 0.0
    %498 = vmatpush1.msra.mxu0 0.0
    %499 = vmatprep.subr.mxu0 0.0
    %500 = vmatpush1.msra.mxu0 0.0
    %501 = vmatprep.subr.mxu0 0.0
    %502 = vmatpush1.msra.mxu0 0.0
    %503 = vmatprep.subr.mxu0 0.0
    %504 = vmatpush1.msra.mxu0 0.0
    %505 = vmatprep.subr.mxu0 0.0
    %506 = vmatpush1.msra.mxu0 0.0
    %507 = vmatprep.subr.mxu0 0.0
    %508 = vmatpush1.msra.mxu0 0.0
    %509 = vmatprep.subr.mxu0 0.0
    %510 = vmatpush1.msra.mxu0 0.0
    %511 = vmatprep.subr.mxu0 0.0
    %512 = vmatpush1.msra.mxu0 0.0
    %513 = vmatprep.subr.mxu0 0.0
    %514 = vmatpush1.msra.mxu0 0.0
    %515 = vmatprep.subr.mxu0 0.0
    %516 = vmatpush1.msra.mxu0 0.0
    %517 = vmatprep.subr.mxu0 0.0
    %518 = vmatpush1.msra.mxu0 0.0
    %519 = vmatprep.subr.mxu0 0.0
    %520 = vmatpush1.msra.mxu0 0.0
    %521 = vmatprep.subr.mxu0 0.0
    %522 = vmatpush1.msra.mxu0 0.0
    %523 = vmatprep.subr.mxu0 0.0
    %524 = vmatpush1.msra.mxu0 0.0
    %525 = vmatprep.subr.mxu0 0.0
    %526 = vmatpush1.msra.mxu0 0.0
    %527 = vmatprep.subr.mxu0 0.0
    %528 = vmatpush1.msra.mxu0 0.0
    %529 = vmatprep.subr.mxu0 0.0
    %530 = vmatpush1.msra.mxu0 0.0
    %531 = vmatprep.subr.mxu0 0.0
    %532 = vmatpush1.msra.mxu0 0.0
    %533 = vmatprep.subr.mxu0 0.0
    %534 = vmatpush1.msra.mxu0 0.0
    %535 = vmatprep.mubr.f32.mxu0 0.0
    %536 = vmatmul.mubr.f32.gmra.mrb[0].mxu0 %v448
    %v537 = vpop.f32.mrb[0].mxu0
    %v538 = vadd.f32 0.0, %v537
    %v539 = vpop.f32.mrb[0].mxu0
    %540 = vmatprep.mubr.f32.mxu0 0.0
    %541 = vmatmul.mubr.f32.gmra.mrb[0].mxu0 %v451
    %v542 = vpop.f32.mrb[0].mxu0
    %v543 = vadd.f32 0.0, %v542
    %v544 = vpop.f32.mrb[0].mxu0
    %545 = vmatprep.mubr.f32.mxu0 0.0
    %546 = vmatmul.mubr.f32.gmra.mrb[0].mxu0 %v454
    %v547 = vpop.f32.mrb[0].mxu0
    %v548 = vadd.f32 0.0, %v547
    %v549 = vpop.f32.mrb[0].mxu0
    %550 = vmatprep.mubr.f32.mxu0 0.0
    %551 = vmatmul.mubr.f32.gmra.mrb[0].mxu0 %v457
    %v552 = vpop.f32.mrb[0].mxu0
    %v553 = vadd.f32 0.0, %v552
    %v554 = vpop.f32.mrb[0].mxu0
    %555 = vmatprep.mubr.f32.mxu0 0.0
    %556 = vmatmul.mubr.f32.gmra.mrb[0].mxu0 %v460
    %v557 = vpop.f32.mrb[0].mxu0
    %v558 = vadd.f32 0.0, %v557
    %v559 = vpop.f32.mrb[0].mxu0
    %560 = vmatprep.mubr.f32.mxu0 0.0
    %561 = vmatmul.mubr.f32.gmra.mrb[0].mxu0 %v463
    %v562 = vpop.f32.mrb[0].mxu0
    %v563 = vadd.f32 0.0, %v562
    %v564 = vpop.f32.mrb[0].mxu0
    %565 = vmatprep.mubr.f32.mxu0 0.0
    %566 = vmatmul.mubr.f32.gmra.mrb[0].mxu0 %v466
    %v567 = vpop.f32.mrb[0].mxu0
    %v568 = vadd.f32 0.0, %v567
    %v569 = vpop.f32.mrb[0].mxu0
    %570 = vmatprep.mubr.f32.mxu0 0.0
    %571 = vmatmul.mubr.f32.gmra.mrb[0].mxu0 %v469
    %v572 = vpop.f32.mrb[0].mxu0
    %v573 = vadd.f32 0.0, %v572
    %v574 = vpop.f32.mrb[0].mxu0
    %575 = vdwg.mxu0
    %v576 = vld [vmem:[%s2] sm:$0xff]
    %v577 = vld [vmem:[%s2 + $0x8] sm:$0xff]
    %v578 = vld [vmem:[%s2 + $0x10] sm:$0xff]
    %v579 = vld [vmem:[%s2 + $0x18] sm:$0xff]
    %v580 = vld [vmem:[%s2 + $0x20] sm:$0xff]
    %v581 = vld [vmem:[%s2 + $0x28] sm:$0xff]
    %v582 = vld [vmem:[%s2 + $0x30] sm:$0xff]
    %v583 = vld [vmem:[%s2 + $0x38] sm:$0xff]
    %v584 = vld [vmem:[%s8] sm:$0xff]
    %v585 = vld [vmem:[%s8 + $0x8] sm:$0xff]
    %v586 = vld [vmem:[%s8 + $0x10] sm:$0xff]
    %v587 = vld [vmem:[%s8 + $0x18] sm:$0xff]
    %596 = vrot.lane.b32.xlu0 %v538, 96
    %v597 = vpop.permute.xlu0 %596
    %598 = vrot.lane.b32.xlu0 %v543, 96
    %v599 = vpop.permute.xlu0 %598
    %600 = vrot.lane.b32.xlu0 %v548, 96
    %v601 = vpop.permute.xlu0 %600
    %602 = vrot.lane.b32.xlu0 %v553, 96
    %v603 = vpop.permute.xlu0 %602
    %604 = vrot.lane.b32.xlu0 %v558, 96
    %v605 = vpop.permute.xlu0 %604
    %606 = vrot.lane.b32.xlu0 %v563, 96
    %v607 = vpop.permute.xlu0 %606
    %608 = vrot.lane.b32.xlu0 %v568, 96
    %v609 = vpop.permute.xlu0 %608
    %610 = vrot.lane.b32.xlu0 %v573, 96
    %v611 = vpop.permute.xlu0 %610
    %v612 = vsel %vm207, %v538, 0
    %v614 = vsel %vm207, %v543, 0
    %v616 = vsel %vm207, %v548, 0
    %v618 = vsel %vm207, %v553, 0
    %v620 = vsel %vm207, %v558, 0
    %v622 = vsel %vm207, %v563, 0
    %v624 = vsel %vm207, %v568, 0
    %v626 = vsel %vm207, %v573, 0
    %v628 = vsel %vm207, %v597, 0
    %v630 = vsel %vm207, %v599, 0
    %v632 = vsel %vm207, %v601, 0
    %v634 = vsel %vm207, %v603, 0
    %v636 = vsel %vm207, %v605, 0
    %v638 = vsel %vm207, %v607, 0
    %v640 = vsel %vm207, %v609, 0
    %v642 = vsel %vm207, %v611, 0
    %644 = vmatprep.subr.mxu0 0.0
    %645 = vmatpush1.xpose.msra.mxu0 %v628
    %646 = vmatprep.subr.mxu0 0.0
    %647 = vmatpush1.xpose.msra.mxu0 %v630
    %648 = vmatprep.subr.mxu0 0.0
    %649 = vmatpush1.xpose.msra.mxu0 %v632
    %650 = vmatprep.subr.mxu0 0.0
    %651 = vmatpush1.xpose.msra.mxu0 %v634
    %652 = vmatprep.subr.mxu0 0.0
    %653 = vmatpush1.xpose.msra.mxu0 %v636
    %654 = vmatprep.subr.mxu0 0.0
    %655 = vmatpush1.xpose.msra.mxu0 %v638
    %656 = vmatprep.subr.mxu0 0.0
    %657 = vmatpush1.xpose.msra.mxu0 %v640
    %658 = vmatprep.subr.mxu0 0.0
    %659 = vmatpush1.xpose.msra.mxu0 %v642
    %660 = vmatprep.subr.mxu0 0.0
    %661 = vmatpush1.xpose.msra.mxu0 0.0
    %662 = vmatprep.subr.mxu0 0.0
    %663 = vmatpush1.xpose.msra.mxu0 0.0
    %664 = vmatprep.subr.mxu0 0.0
    %665 = vmatpush1.xpose.msra.mxu0 0.0
    %666 = vmatprep.subr.mxu0 0.0
    %667 = vmatpush1.xpose.msra.mxu0 0.0
    %668 = vmatprep.subr.mxu0 0.0
    %669 = vmatpush1.xpose.msra.mxu0 0.0
    %670 = vmatprep.subr.mxu0 0.0
    %671 = vmatpush1.xpose.msra.mxu0 0.0
    %672 = vmatprep.subr.mxu0 0.0
    %673 = vmatpush1.xpose.msra.mxu0 0.0
    %674 = vmatprep.subr.mxu0 0.0
    %675 = vmatpush1.xpose.msra.mxu0 0.0
    %676 = vmatprep.subr.mxu0 0.0
    %677 = vmatpush1.xpose.msra.mxu0 0.0
    %678 = vmatprep.subr.mxu0 0.0
    %679 = vmatpush1.xpose.msra.mxu0 0.0
    %680 = vmatprep.subr.mxu0 0.0
    %681 = vmatpush1.xpose.msra.mxu0 0.0
    %682 = vmatprep.subr.mxu0 0.0
    %683 = vmatpush1.xpose.msra.mxu0 0.0
    %684 = vmatprep.subr.mxu0 0.0
    %685 = vmatpush1.xpose.msra.mxu0 0.0
    %686 = vmatprep.subr.mxu0 0.0
    %687 = vmatpush1.xpose.msra.mxu0 0.0
    %688 = vmatprep.subr.mxu0 0.0
    %689 = vmatpush1.xpose.msra.mxu0 0.0
    %690 = vmatprep.subr.mxu0 0.0
    %691 = vmatpush1.xpose.msra.mxu0 0.0
    %692 = vmatprep.subr.mxu0 0.0
    %693 = vmatpush1.xpose.msra.mxu0 0.0
    %694 = vmatprep.subr.mxu0 0.0
    %695 = vmatpush1.xpose.msra.mxu0 0.0
    %696 = vmatprep.subr.mxu0 0.0
    %697 = vmatpush1.xpose.msra.mxu0 0.0
    %698 = vmatprep.subr.mxu0 0.0
    %699 = vmatpush1.xpose.msra.mxu0 0.0
    %700 = vmatprep.subr.mxu0 0.0
    %701 = vmatpush1.xpose.msra.mxu0 0.0
    %702 = vmatprep.subr.mxu0 0.0
    %703 = vmatpush1.xpose.msra.mxu0 0.0
    %704 = vmatprep.subr.mxu0 0.0
    %705 = vmatpush1.xpose.msra.mxu0 0.0
    %706 = vmatprep.subr.mxu0 0.0
    %707 = vmatpush1.xpose.msra.mxu0 0.0
    %708 = vmatprep.mubr.f32.mxu0 0.0
    %709 = vmatmul.mubr.f32.gmra.mrb[0].mxu0 %v612
    %v710 = vpop.f32.mrb[0].mxu0
    %v711 = vadd.f32 0.0, %v710
    %v712 = vpop.f32.mrb[0].mxu0
    %713 = vmatprep.mubr.f32.mxu0 0.0
    %714 = vmatmul.mubr.f32.gmra.mrb[0].mxu0 %v614
    %v715 = vpop.f32.mrb[0].mxu0
    %v716 = vadd.f32 0.0, %v715
    %v717 = vpop.f32.mrb[0].mxu0
    %718 = vmatprep.mubr.f32.mxu0 0.0
    %719 = vmatmul.mubr.f32.gmra.mrb[0].mxu0 %v616
    %v720 = vpop.f32.mrb[0].mxu0
    %v721 = vadd.f32 0.0, %v720
    %v722 = vpop.f32.mrb[0].mxu0
    %723 = vmatprep.mubr.f32.mxu0 0.0
    %724 = vmatmul.mubr.f32.gmra.mrb[0].mxu0 %v618
    %v725 = vpop.f32.mrb[0].mxu0
    %v726 = vadd.f32 0.0, %v725
    %v727 = vpop.f32.mrb[0].mxu0
    %728 = vmatprep.mubr.f32.mxu0 0.0
    %729 = vmatmul.mubr.f32.gmra.mrb[0].mxu0 %v620
    %v730 = vpop.f32.mrb[0].mxu0
    %v731 = vadd.f32 0.0, %v730
    %v732 = vpop.f32.mrb[0].mxu0
    %733 = vmatprep.mubr.f32.mxu0 0.0
    %734 = vmatmul.mubr.f32.gmra.mrb[0].mxu0 %v622
    %v735 = vpop.f32.mrb[0].mxu0
    %v736 = vadd.f32 0.0, %v735
    %v737 = vpop.f32.mrb[0].mxu0
    %738 = vmatprep.mubr.f32.mxu0 0.0
    %739 = vmatmul.mubr.f32.gmra.mrb[0].mxu0 %v624
    %v740 = vpop.f32.mrb[0].mxu0
    %v741 = vadd.f32 0.0, %v740
    %v742 = vpop.f32.mrb[0].mxu0
    %743 = vmatprep.mubr.f32.mxu0 0.0
    %744 = vmatmul.mubr.f32.gmra.mrb[0].mxu0 %v626
    %v745 = vpop.f32.mrb[0].mxu0
    %v746 = vadd.f32 0.0, %v745
    %v747 = vpop.f32.mrb[0].mxu0
    %748 = vdwg.mxu0
    %v749 = vmul.f32 %v711, 0.25
    %v750 = vmul.f32 %v716, 0.25
    %v751 = vmul.f32 %v721, 0.25
    %v752 = vmul.f32 %v726, 0.25
    %v753 = vmul.f32 %v731, 0.25
    %v754 = vmul.f32 %v736, 0.25
    %v755 = vmul.f32 %v741, 0.25
    %v756 = vmul.f32 %v746, 0.25
    %v757 = vadd.f32 %v749, %v576
    %v758 = vadd.f32 %v750, %v577
    %v759 = vadd.f32 %v751, %v578
    %v760 = vadd.f32 %v752, %v579
    %v761 = vadd.f32 %v753, %v580
    %v762 = vadd.f32 %v754, %v581
    %v763 = vadd.f32 %v755, %v582
    %v764 = vadd.f32 %v756, %v583
    %vm765 = vcmask 523264
    %v766 = vsel %vm765, %v757, -inf
    %767 = vmax.xlane.f32.xlu0 %v766
    %v768 = vpop.xlane.xlu0 %767
    %v769 = vsel %vm765, %v758, -inf
    %770 = vmax.xlane.f32.xlu0 %v769
    %v771 = vpop.xlane.xlu0 %770
    %v772 = vsel %vm765, %v759, -inf
    %773 = vmax.xlane.f32.xlu0 %v772
    %v774 = vpop.xlane.xlu0 %773
    %v775 = vsel %vm765, %v760, -inf
    %776 = vmax.xlane.f32.xlu0 %v775
    %v777 = vpop.xlane.xlu0 %776
    %v778 = vsel %vm765, %v761, -inf
    %779 = vmax.xlane.f32.xlu0 %v778
    %v780 = vpop.xlane.xlu0 %779
    %v781 = vsel %vm765, %v762, -inf
    %782 = vmax.xlane.f32.xlu0 %v781
    %v783 = vpop.xlane.xlu0 %782
    %v784 = vsel %vm765, %v763, -inf
    %785 = vmax.xlane.f32.xlu0 %v784
    %v786 = vpop.xlane.xlu0 %785
    %v787 = vsel %vm765, %v764, -inf
    %788 = vmax.xlane.f32.xlu0 %v787
    %v789 = vpop.xlane.xlu0 %788
    %v790 = vsub.f32 %v757, %v768
    %v791 = vsub.f32 %v758, %v771
    %v792 = vsub.f32 %v759, %v774
    %v793 = vsub.f32 %v760, %v777
    %v794 = vsub.f32 %v761, %v780
    %v795 = vsub.f32 %v762, %v783
    %v796 = vsub.f32 %v763, %v786
    %v797 = vsub.f32 %v764, %v789
    %v798 = vmul.f32 %v790, 1.442695
    %v799 = vpow.pop %v798
    %v800 = vmul.f32 %v791, 1.442695
    %v801 = vpow.pop %v800
    %v802 = vmul.f32 %v792, 1.442695
    %v803 = vpow.pop %v802
    %v804 = vmul.f32 %v793, 1.442695
    %v805 = vpow.pop %v804
    %v806 = vmul.f32 %v794, 1.442695
    %v807 = vpow.pop %v806
    %v808 = vmul.f32 %v795, 1.442695
    %v809 = vpow.pop %v808
    %v810 = vmul.f32 %v796, 1.442695
    %v811 = vpow.pop %v810
    %v812 = vmul.f32 %v797, 1.442695
    %v813 = vpow.pop %v812
    %v814 = vsel %vm765, %v799, 0.0
    %815 = vadd.xlane.f32.xlu0 %v814
    %v816 = vpop.xlane.xlu0 %815
    %v817 = vsel %vm765, %v801, 0.0
    %818 = vadd.xlane.f32.xlu0 %v817
    %v819 = vpop.xlane.xlu0 %818
    %v820 = vsel %vm765, %v803, 0.0
    %821 = vadd.xlane.f32.xlu0 %v820
    %v822 = vpop.xlane.xlu0 %821
    %v823 = vsel %vm765, %v805, 0.0
    %824 = vadd.xlane.f32.xlu0 %v823
    %v825 = vpop.xlane.xlu0 %824
    %v826 = vsel %vm765, %v807, 0.0
    %827 = vadd.xlane.f32.xlu0 %v826
    %v828 = vpop.xlane.xlu0 %827
    %v829 = vsel %vm765, %v809, 0.0
    %830 = vadd.xlane.f32.xlu0 %v829
    %v831 = vpop.xlane.xlu0 %830
    %v832 = vsel %vm765, %v811, 0.0
    %833 = vadd.xlane.f32.xlu0 %v832
    %v834 = vpop.xlane.xlu0 %833
    %v835 = vsel %vm765, %v813, 0.0
    %836 = vadd.xlane.f32.xlu0 %v835
    %v837 = vpop.xlane.xlu0 %836
    %v838 = vrcp.pop %v816
    %v839 = vrcp.pop %v819
    %v840 = vrcp.pop %v822
    %v841 = vrcp.pop %v825
    %v842 = vrcp.pop %v828
    %v843 = vrcp.pop %v831
    %v844 = vrcp.pop %v834
    %v845 = vrcp.pop %v837
    %v846 = vmul.f32 %v799, %v838
    %v847 = vmul.f32 %v801, %v839
    %v848 = vmul.f32 %v803, %v840
    %v849 = vmul.f32 %v805, %v841
    %v850 = vmul.f32 %v807, %v842
    %v851 = vmul.f32 %v809, %v843
    %v852 = vmul.f32 %v811, %v844
    %v853 = vmul.f32 %v813, %v845
    %854 = vrot.lane.b32.xlu0 %v538, 64
    %v855 = vpop.permute.xlu0 %854
    %856 = vrot.lane.b32.xlu0 %v543, 64
    %v857 = vpop.permute.xlu0 %856
    %858 = vrot.lane.b32.xlu0 %v548, 64
    %v859 = vpop.permute.xlu0 %858
    %860 = vrot.lane.b32.xlu0 %v553, 64
    %v861 = vpop.permute.xlu0 %860
    %862 = vrot.lane.b32.xlu0 %v558, 64
    %v863 = vpop.permute.xlu0 %862
    %864 = vrot.lane.b32.xlu0 %v563, 64
    %v865 = vpop.permute.xlu0 %864
    %866 = vrot.lane.b32.xlu0 %v568, 64
    %v867 = vpop.permute.xlu0 %866
    %868 = vrot.lane.b32.xlu0 %v573, 64
    %v869 = vpop.permute.xlu0 %868
    %v879 = vsel %vm765, %v846, 0
    %v882 = vsel %vm765, %v847, 0
    %v885 = vsel %vm765, %v848, 0
    %v888 = vsel %vm765, %v849, 0
    %v891 = vsel %vm765, %v850, 0
    %v894 = vsel %vm765, %v851, 0
    %v897 = vsel %vm765, %v852, 0
    %v900 = vsel %vm765, %v853, 0
    %902 = vmatprep.subr.mxu0 0.0
    %903 = vmatpush1.msra.mxu0 %v855
    %904 = vmatprep.subr.mxu0 0.0
    %905 = vmatpush1.msra.mxu0 %v857
    %906 = vmatprep.subr.mxu0 0.0
    %907 = vmatpush1.msra.mxu0 %v859
    %908 = vmatprep.subr.mxu0 0.0
    %909 = vmatpush1.msra.mxu0 %v861
    %910 = vmatprep.subr.mxu0 0.0
    %911 = vmatpush1.msra.mxu0 %v863
    %912 = vmatprep.subr.mxu0 0.0
    %913 = vmatpush1.msra.mxu0 %v865
    %914 = vmatprep.subr.mxu0 0.0
    %915 = vmatpush1.msra.mxu0 %v867
    %916 = vmatprep.subr.mxu0 0.0
    %917 = vmatpush1.msra.mxu0 %v869
    %918 = vmatprep.subr.mxu0 0.0
    %919 = vmatpush1.msra.mxu0 0.0
    %920 = vmatprep.subr.mxu0 0.0
    %921 = vmatpush1.msra.mxu0 0.0
    %922 = vmatprep.subr.mxu0 0.0
    %923 = vmatpush1.msra.mxu0 0.0
    %924 = vmatprep.subr.mxu0 0.0
    %925 = vmatpush1.msra.mxu0 0.0
    %926 = vmatprep.subr.mxu0 0.0
    %927 = vmatpush1.msra.mxu0 0.0
    %928 = vmatprep.subr.mxu0 0.0
    %929 = vmatpush1.msra.mxu0 0.0
    %930 = vmatprep.subr.mxu0 0.0
    %931 = vmatpush1.msra.mxu0 0.0
    %932 = vmatprep.subr.mxu0 0.0
    %933 = vmatpush1.msra.mxu0 0.0
    %934 = vmatprep.subr.mxu0 0.0
    %935 = vmatpush1.msra.mxu0 0.0
    %936 = vmatprep.subr.mxu0 0.0
    %937 = vmatpush1.msra.mxu0 0.0
    %938 = vmatprep.subr.mxu0 0.0
    %939 = vmatpush1.msra.mxu0 0.0
    %940 = vmatprep.subr.mxu0 0.0
    %941 = vmatpush1.msra.mxu0 0.0
    %942 = vmatprep.subr.mxu0 0.0
    %943 = vmatpush1.msra.mxu0 0.0
    %944 = vmatprep.subr.mxu0 0.0
    %945 = vmatpush1.msra.mxu0 0.0
    %946 = vmatprep.subr.mxu0 0.0
    %947 = vmatpush1.msra.mxu0 0.0
    %948 = vmatprep.subr.mxu0 0.0
    %949 = vmatpush1.msra.mxu0 0.0
    %950 = vmatprep.subr.mxu0 0.0
    %951 = vmatpush1.msra.mxu0 0.0
    %952 = vmatprep.subr.mxu0 0.0
    %953 = vmatpush1.msra.mxu0 0.0
    %954 = vmatprep.subr.mxu0 0.0
    %955 = vmatpush1.msra.mxu0 0.0
    %956 = vmatprep.subr.mxu0 0.0
    %957 = vmatpush1.msra.mxu0 0.0
    %958 = vmatprep.subr.mxu0 0.0
    %959 = vmatpush1.msra.mxu0 0.0
    %960 = vmatprep.subr.mxu0 0.0
    %961 = vmatpush1.msra.mxu0 0.0
    %962 = vmatprep.subr.mxu0 0.0
    %963 = vmatpush1.msra.mxu0 0.0
    %964 = vmatprep.subr.mxu0 0.0
    %965 = vmatpush1.msra.mxu0 0.0
    %966 = vmatprep.mubr.f32.mxu0 0.0
    %967 = vmatmul.mubr.f32.gmra.mrb[0].mxu0 %v879
    %v968 = vpop.f32.mrb[0].mxu0
    %v969 = vadd.f32 0.0, %v968
    %v970 = vpop.f32.mrb[0].mxu0
    %971 = vmatprep.mubr.f32.mxu0 0.0
    %972 = vmatmul.mubr.f32.gmra.mrb[0].mxu0 %v882
    %v973 = vpop.f32.mrb[0].mxu0
    %v974 = vadd.f32 0.0, %v973
    %v975 = vpop.f32.mrb[0].mxu0
    %976 = vmatprep.mubr.f32.mxu0 0.0
    %977 = vmatmul.mubr.f32.gmra.mrb[0].mxu0 %v885
    %v978 = vpop.f32.mrb[0].mxu0
    %v979 = vadd.f32 0.0, %v978
    %v980 = vpop.f32.mrb[0].mxu0
    %981 = vmatprep.mubr.f32.mxu0 0.0
    %982 = vmatmul.mubr.f32.gmra.mrb[0].mxu0 %v888
    %v983 = vpop.f32.mrb[0].mxu0
    %v984 = vadd.f32 0.0, %v983
    %v985 = vpop.f32.mrb[0].mxu0
    %986 = vmatprep.mubr.f32.mxu0 0.0
    %987 = vmatmul.mubr.f32.gmra.mrb[0].mxu0 %v891
    %v988 = vpop.f32.mrb[0].mxu0
    %v989 = vadd.f32 0.0, %v988
    %v990 = vpop.f32.mrb[0].mxu0
    %991 = vmatprep.mubr.f32.mxu0 0.0
    %992 = vmatmul.mubr.f32.gmra.mrb[0].mxu0 %v894
    %v993 = vpop.f32.mrb[0].mxu0
    %v994 = vadd.f32 0.0, %v993
    %v995 = vpop.f32.mrb[0].mxu0
    %996 = vmatprep.mubr.f32.mxu0 0.0
    %997 = vmatmul.mubr.f32.gmra.mrb[0].mxu0 %v897
    %v998 = vpop.f32.mrb[0].mxu0
    %v999 = vadd.f32 0.0, %v998
    %v1000 = vpop.f32.mrb[0].mxu0
    %1001 = vmatprep.mubr.f32.mxu0 0.0
    %1002 = vmatmul.mubr.f32.gmra.mrb[0].mxu0 %v900
    %v1003 = vpop.f32.mrb[0].mxu0
    %v1004 = vadd.f32 0.0, %v1003
    %v1005 = vpop.f32.mrb[0].mxu0
    %1006 = vdwg.mxu0
    %1007 = vrot.lane.b32.xlu0 %v538, 112
    %v1008 = vpop.permute.xlu0 %1007
    %1009 = vrot.lane.b32.xlu0 %v543, 112
    %v1010 = vpop.permute.xlu0 %1009
    %1011 = vrot.lane.b32.xlu0 %v548, 112
    %v1012 = vpop.permute.xlu0 %1011
    %1013 = vrot.lane.b32.xlu0 %v553, 112
    %v1014 = vpop.permute.xlu0 %1013
    %1015 = vrot.lane.b32.xlu0 %v558, 112
    %v1016 = vpop.permute.xlu0 %1015
    %1017 = vrot.lane.b32.xlu0 %v563, 112
    %v1018 = vpop.permute.xlu0 %1017
    %1019 = vrot.lane.b32.xlu0 %v568, 112
    %v1020 = vpop.permute.xlu0 %1019
    %1021 = vrot.lane.b32.xlu0 %v573, 112
    %v1022 = vpop.permute.xlu0 %1021
    %1023 = vrot.lane.b32.xlu0 %v538, 80
    %v1024 = vpop.permute.xlu0 %1023
    %1025 = vrot.lane.b32.xlu0 %v543, 80
    %v1026 = vpop.permute.xlu0 %1025
    %1027 = vrot.lane.b32.xlu0 %v548, 80
    %v1028 = vpop.permute.xlu0 %1027
    %1029 = vrot.lane.b32.xlu0 %v553, 80
    %v1030 = vpop.permute.xlu0 %1029
    %1031 = vrot.lane.b32.xlu0 %v558, 80
    %v1032 = vpop.permute.xlu0 %1031
    %1033 = vrot.lane.b32.xlu0 %v563, 80
    %v1034 = vpop.permute.xlu0 %1033
    %1035 = vrot.lane.b32.xlu0 %v568, 80
    %v1036 = vpop.permute.xlu0 %1035
    %1037 = vrot.lane.b32.xlu0 %v573, 80
    %v1038 = vpop.permute.xlu0 %1037
    %v1039 = vsel %vm207, %v1008, 0
    %v1041 = vsel %vm207, %v1010, 0
    %v1043 = vsel %vm207, %v1012, 0
    %v1045 = vsel %vm207, %v1014, 0
    %v1047 = vsel %vm207, %v1016, 0
    %v1049 = vsel %vm207, %v1018, 0
    %v1051 = vsel %vm207, %v1020, 0
    %v1053 = vsel %vm207, %v1022, 0
    %v1055 = vsel %vm207, %v1024, 0
    %v1057 = vsel %vm207, %v1026, 0
    %v1059 = vsel %vm207, %v1028, 0
    %v1061 = vsel %vm207, %v1030, 0
    %v1063 = vsel %vm207, %v1032, 0
    %v1065 = vsel %vm207, %v1034, 0
    %v1067 = vsel %vm207, %v1036, 0
    %v1069 = vsel %vm207, %v1038, 0
    %1071 = vmatprep.subr.mxu0 0.0
    %1072 = vmatpush1.xpose.msra.mxu0 %v1055
    %1073 = vmatprep.subr.mxu0 0.0
    %1074 = vmatpush1.xpose.msra.mxu0 %v1057
    %1075 = vmatprep.subr.mxu0 0.0
    %1076 = vmatpush1.xpose.msra.mxu0 %v1059
    %1077 = vmatprep.subr.mxu0 0.0
    %1078 = vmatpush1.xpose.msra.mxu0 %v1061
    %1079 = vmatprep.subr.mxu0 0.0
    %1080 = vmatpush1.xpose.msra.mxu0 %v1063
    %1081 = vmatprep.subr.mxu0 0.0
    %1082 = vmatpush1.xpose.msra.mxu0 %v1065
    %1083 = vmatprep.subr.mxu0 0.0
    %1084 = vmatpush1.xpose.msra.mxu0 %v1067
    %1085 = vmatprep.subr.mxu0 0.0
    %1086 = vmatpush1.xpose.msra.mxu0 %v1069
    %1087 = vmatprep.subr.mxu0 0.0
    %1088 = vmatpush1.xpose.msra.mxu0 0.0
    %1089 = vmatprep.subr.mxu0 0.0
    %1090 = vmatpush1.xpose.msra.mxu0 0.0
    %1091 = vmatprep.subr.mxu0 0.0
    %1092 = vmatpush1.xpose.msra.mxu0 0.0
    %1093 = vmatprep.subr.mxu0 0.0
    %1094 = vmatpush1.xpose.msra.mxu0 0.0
    %1095 = vmatprep.subr.mxu0 0.0
    %1096 = vmatpush1.xpose.msra.mxu0 0.0
    %1097 = vmatprep.subr.mxu0 0.0
    %1098 = vmatpush1.xpose.msra.mxu0 0.0
    %1099 = vmatprep.subr.mxu0 0.0
    %1100 = vmatpush1.xpose.msra.mxu0 0.0
    %1101 = vmatprep.subr.mxu0 0.0
    %1102 = vmatpush1.xpose.msra.mxu0 0.0
    %1103 = vmatprep.subr.mxu0 0.0
    %1104 = vmatpush1.xpose.msra.mxu0 0.0
    %1105 = vmatprep.subr.mxu0 0.0
    %1106 = vmatpush1.xpose.msra.mxu0 0.0
    %1107 = vmatprep.subr.mxu0 0.0
    %1108 = vmatpush1.xpose.msra.mxu0 0.0
    %1109 = vmatprep.subr.mxu0 0.0
    %1110 = vmatpush1.xpose.msra.mxu0 0.0
    %1111 = vmatprep.subr.mxu0 0.0
    %1112 = vmatpush1.xpose.msra.mxu0 0.0
    %1113 = vmatprep.subr.mxu0 0.0
    %1114 = vmatpush1.xpose.msra.mxu0 0.0
    %1115 = vmatprep.subr.mxu0 0.0
    %1116 = vmatpush1.xpose.msra.mxu0 0.0
    %1117 = vmatprep.subr.mxu0 0.0
    %1118 = vmatpush1.xpose.msra.mxu0 0.0
    %1119 = vmatprep.subr.mxu0 0.0
    %1120 = vmatpush1.xpose.msra.mxu0 0.0
    %1121 = vmatprep.subr.mxu0 0.0
    %1122 = vmatpush1.xpose.msra.mxu0 0.0
    %1123 = vmatprep.subr.mxu0 0.0
    %1124 = vmatpush1.xpose.msra.mxu0 0.0
    %1125 = vmatprep.subr.mxu0 0.0
    %1126 = vmatpush1.xpose.msra.mxu0 0.0
    %1127 = vmatprep.subr.mxu0 0.0
    %1128 = vmatpush1.xpose.msra.mxu0 0.0
    %1129 = vmatprep.subr.mxu0 0.0
    %1130 = vmatpush1.xpose.msra.mxu0 0.0
    %1131 = vmatprep.subr.mxu0 0.0
    %1132 = vmatpush1.xpose.msra.mxu0 0.0
    %1133 = vmatprep.subr.mxu0 0.0
    %1134 = vmatpush1.xpose.msra.mxu0 0.0
    %1135 = vmatprep.mubr.f32.mxu0 0.0
    %1136 = vmatmul.mubr.f32.gmra.mrb[0].mxu0 %v1039
    %v1137 = vpop.f32.mrb[0].mxu0
    %v1138 = vadd.f32 0.0, %v1137
    %v1139 = vpop.f32.mrb[0].mxu0
    %1140 = vmatprep.mubr.f32.mxu0 0.0
    %1141 = vmatmul.mubr.f32.gmra.mrb[0].mxu0 %v1041
    %v1142 = vpop.f32.mrb[0].mxu0
    %v1143 = vadd.f32 0.0, %v1142
    %v1144 = vpop.f32.mrb[0].mxu0
    %1145 = vmatprep.mubr.f32.mxu0 0.0
    %1146 = vmatmul.mubr.f32.gmra.mrb[0].mxu0 %v1043
    %v1147 = vpop.f32.mrb[0].mxu0
    %v1148 = vadd.f32 0.0, %v1147
    %v1149 = vpop.f32.mrb[0].mxu0
    %1150 = vmatprep.mubr.f32.mxu0 0.0
    %1151 = vmatmul.mubr.f32.gmra.mrb[0].mxu0 %v1045
    %v1152 = vpop.f32.mrb[0].mxu0
    %v1153 = vadd.f32 0.0, %v1152
    %v1154 = vpop.f32.mrb[0].mxu0
    %1155 = vmatprep.mubr.f32.mxu0 0.0
    %1156 = vmatmul.mubr.f32.gmra.mrb[0].mxu0 %v1047
    %v1157 = vpop.f32.mrb[0].mxu0
    %v1158 = vadd.f32 0.0, %v1157
    %v1159 = vpop.f32.mrb[0].mxu0
    %1160 = vmatprep.mubr.f32.mxu0 0.0
    %1161 = vmatmul.mubr.f32.gmra.mrb[0].mxu0 %v1049
    %v1162 = vpop.f32.mrb[0].mxu0
    %v1163 = vadd.f32 0.0, %v1162
    %v1164 = vpop.f32.mrb[0].mxu0
    %1165 = vmatprep.mubr.f32.mxu0 0.0
    %1166 = vmatmul.mubr.f32.gmra.mrb[0].mxu0 %v1051
    %v1167 = vpop.f32.mrb[0].mxu0
    %v1168 = vadd.f32 0.0, %v1167
    %v1169 = vpop.f32.mrb[0].mxu0
    %1170 = vmatprep.mubr.f32.mxu0 0.0
    %1171 = vmatmul.mubr.f32.gmra.mrb[0].mxu0 %v1053
    %v1172 = vpop.f32.mrb[0].mxu0
    %v1173 = vadd.f32 0.0, %v1172
    %v1174 = vpop.f32.mrb[0].mxu0
    %1175 = vdwg.mxu0
    %v1176 = vmul.f32 %v1138, 0.25
    %v1177 = vmul.f32 %v1143, 0.25
    %v1178 = vmul.f32 %v1148, 0.25
    %v1179 = vmul.f32 %v1153, 0.25
    %v1180 = vmul.f32 %v1158, 0.25
    %v1181 = vmul.f32 %v1163, 0.25
    %v1182 = vmul.f32 %v1168, 0.25
    %v1183 = vmul.f32 %v1173, 0.25
    %v1184 = vadd.f32 %v1176, %v576
    %v1185 = vadd.f32 %v1177, %v577
    %v1186 = vadd.f32 %v1178, %v578
    %v1187 = vadd.f32 %v1179, %v579
    %v1188 = vadd.f32 %v1180, %v580
    %v1189 = vadd.f32 %v1181, %v581
    %v1190 = vadd.f32 %v1182, %v582
    %v1191 = vadd.f32 %v1183, %v583
    %v1192 = vsel %vm765, %v1184, -inf
    %1193 = vmax.xlane.f32.xlu0 %v1192
    %v1194 = vpop.xlane.xlu0 %1193
    %v1195 = vsel %vm765, %v1185, -inf
    %1196 = vmax.xlane.f32.xlu0 %v1195
    %v1197 = vpop.xlane.xlu0 %1196
    %v1198 = vsel %vm765, %v1186, -inf
    %1199 = vmax.xlane.f32.xlu0 %v1198
    %v1200 = vpop.xlane.xlu0 %1199
    %v1201 = vsel %vm765, %v1187, -inf
    %1202 = vmax.xlane.f32.xlu0 %v1201
    %v1203 = vpop.xlane.xlu0 %1202
    %v1204 = vsel %vm765, %v1188, -inf
    %1205 = vmax.xlane.f32.xlu0 %v1204
    %v1206 = vpop.xlane.xlu0 %1205
    %v1207 = vsel %vm765, %v1189, -inf
    %1208 = vmax.xlane.f32.xlu0 %v1207
    %v1209 = vpop.xlane.xlu0 %1208
    %v1210 = vsel %vm765, %v1190, -inf
    %1211 = vmax.xlane.f32.xlu0 %v1210
    %v1212 = vpop.xlane.xlu0 %1211
    %v1213 = vsel %vm765, %v1191, -inf
    %1214 = vmax.xlane.f32.xlu0 %v1213
    %v1215 = vpop.xlane.xlu0 %1214
    %v1216 = vsub.f32 %v1184, %v1194
    %v1217 = vsub.f32 %v1185, %v1197
    %v1218 = vsub.f32 %v1186, %v1200
    %v1219 = vsub.f32 %v1187, %v1203
    %v1220 = vsub.f32 %v1188, %v1206
    %v1221 = vsub.f32 %v1189, %v1209
    %v1222 = vsub.f32 %v1190, %v1212
    %v1223 = vsub.f32 %v1191, %v1215
    %v1224 = vmul.f32 %v1216, 1.442695
    %v1225 = vpow.pop %v1224
    %v1226 = vmul.f32 %v1217, 1.442695
    %v1227 = vpow.pop %v1226
    %v1228 = vmul.f32 %v1218, 1.442695
    %v1229 = vpow.pop %v1228
    %v1230 = vmul.f32 %v1219, 1.442695
    %v1231 = vpow.pop %v1230
    %v1232 = vmul.f32 %v1220, 1.442695
    %v1233 = vpow.pop %v1232
    %v1234 = vmul.f32 %v1221, 1.442695
    %v1235 = vpow.pop %v1234
    %v1236 = vmul.f32 %v1222, 1.442695
    %v1237 = vpow.pop %v1236
    %v1238 = vmul.f32 %v1223, 1.442695
    %v1239 = vpow.pop %v1238
    %v1240 = vsel %vm765, %v1225, 0.0
    %1241 = vadd.xlane.f32.xlu0 %v1240
    %v1242 = vpop.xlane.xlu0 %1241
    %v1243 = vsel %vm765, %v1227, 0.0
    %1244 = vadd.xlane.f32.xlu0 %v1243
    %v1245 = vpop.xlane.xlu0 %1244
    %v1246 = vsel %vm765, %v1229, 0.0
    %1247 = vadd.xlane.f32.xlu0 %v1246
    %v1248 = vpop.xlane.xlu0 %1247
    %v1249 = vsel %vm765, %v1231, 0.0
    %1250 = vadd.xlane.f32.xlu0 %v1249
    %v1251 = vpop.xlane.xlu0 %1250
    %v1252 = vsel %vm765, %v1233, 0.0
    %1253 = vadd.xlane.f32.xlu0 %v1252
    %v1254 = vpop.xlane.xlu0 %1253
    %v1255 = vsel %vm765, %v1235, 0.0
    %1256 = vadd.xlane.f32.xlu0 %v1255
    %v1257 = vpop.xlane.xlu0 %1256
    %v1258 = vsel %vm765, %v1237, 0.0
    %1259 = vadd.xlane.f32.xlu0 %v1258
    %v1260 = vpop.xlane.xlu0 %1259
    %v1261 = vsel %vm765, %v1239, 0.0
    %1262 = vadd.xlane.f32.xlu0 %v1261
    %v1263 = vpop.xlane.xlu0 %1262
    %v1264 = vrcp.pop %v1242
    %v1265 = vrcp.pop %v1245
    %v1266 = vrcp.pop %v1248
    %v1267 = vrcp.pop %v1251
    %v1268 = vrcp.pop %v1254
    %v1269 = vrcp.pop %v1257
    %v1270 = vrcp.pop %v1260
    %v1271 = vrcp.pop %v1263
    %v1272 = vmul.f32 %v1225, %v1264
    %v1273 = vmul.f32 %v1227, %v1265
    %v1274 = vmul.f32 %v1229, %v1266
    %v1275 = vmul.f32 %v1231, %v1267
    %v1276 = vmul.f32 %v1233, %v1268
    %v1277 = vmul.f32 %v1235, %v1269
    %v1278 = vmul.f32 %v1237, %v1270
    %v1279 = vmul.f32 %v1239, %v1271
    %1280 = vrot.lane.b32.xlu0 %v538, 48
    %v1281 = vpop.permute.xlu0 %1280
    %1282 = vrot.lane.b32.xlu0 %v543, 48
    %v1283 = vpop.permute.xlu0 %1282
    %1284 = vrot.lane.b32.xlu0 %v548, 48
    %v1285 = vpop.permute.xlu0 %1284
    %1286 = vrot.lane.b32.xlu0 %v553, 48
    %v1287 = vpop.permute.xlu0 %1286
    %1288 = vrot.lane.b32.xlu0 %v558, 48
    %v1289 = vpop.permute.xlu0 %1288
    %1290 = vrot.lane.b32.xlu0 %v563, 48
    %v1291 = vpop.permute.xlu0 %1290
    %1292 = vrot.lane.b32.xlu0 %v568, 48
    %v1293 = vpop.permute.xlu0 %1292
    %1294 = vrot.lane.b32.xlu0 %v573, 48
    %v1295 = vpop.permute.xlu0 %1294
    %v1305 = vsel %vm765, %v1272, 0
    %v1308 = vsel %vm765, %v1273, 0
    %v1311 = vsel %vm765, %v1274, 0
    %v1314 = vsel %vm765, %v1275, 0
    %v1317 = vsel %vm765, %v1276, 0
    %v1320 = vsel %vm765, %v1277, 0
    %v1323 = vsel %vm765, %v1278, 0
    %v1326 = vsel %vm765, %v1279, 0
    %1328 = vmatprep.subr.mxu0 0.0
    %1329 = vmatpush1.msra.mxu0 %v1281
    %1330 = vmatprep.subr.mxu0 0.0
    %1331 = vmatpush1.msra.mxu0 %v1283
    %1332 = vmatprep.subr.mxu0 0.0
    %1333 = vmatpush1.msra.mxu0 %v1285
    %1334 = vmatprep.subr.mxu0 0.0
    %1335 = vmatpush1.msra.mxu0 %v1287
    %1336 = vmatprep.subr.mxu0 0.0
    %1337 = vmatpush1.msra.mxu0 %v1289
    %1338 = vmatprep.subr.mxu0 0.0
    %1339 = vmatpush1.msra.mxu0 %v1291
    %1340 = vmatprep.subr.mxu0 0.0
    %1341 = vmatpush1.msra.mxu0 %v1293
    %1342 = vmatprep.subr.mxu0 0.0
    %1343 = vmatpush1.msra.mxu0 %v1295
    %1344 = vmatprep.subr.mxu0 0.0
    %1345 = vmatpush1.msra.mxu0 0.0
    %1346 = vmatprep.subr.mxu0 0.0
    %1347 = vmatpush1.msra.mxu0 0.0
    %1348 = vmatprep.subr.mxu0 0.0
    %1349 = vmatpush1.msra.mxu0 0.0
    %1350 = vmatprep.subr.mxu0 0.0
    %1351 = vmatpush1.msra.mxu0 0.0
    %1352 = vmatprep.subr.mxu0 0.0
    %1353 = vmatpush1.msra.mxu0 0.0
    %1354 = vmatprep.subr.mxu0 0.0
    %1355 = vmatpush1.msra.mxu0 0.0
    %1356 = vmatprep.subr.mxu0 0.0
    %1357 = vmatpush1.msra.mxu0 0.0
    %1358 = vmatprep.subr.mxu0 0.0
    %1359 = vmatpush1.msra.mxu0 0.0
    %1360 = vmatprep.subr.mxu0 0.0
    %1361 = vmatpush1.msra.mxu0 0.0
    %1362 = vmatprep.subr.mxu0 0.0
    %1363 = vmatpush1.msra.mxu0 0.0
    %1364 = vmatprep.subr.mxu0 0.0
    %1365 = vmatpush1.msra.mxu0 0.0
    %1366 = vmatprep.subr.mxu0 0.0
    %1367 = vmatpush1.msra.mxu0 0.0
    %1368 = vmatprep.subr.mxu0 0.0
    %1369 = vmatpush1.msra.mxu0 0.0
    %1370 = vmatprep.subr.mxu0 0.0
    %1371 = vmatpush1.msra.mxu0 0.0
    %1372 = vmatprep.subr.mxu0 0.0
    %1373 = vmatpush1.msra.mxu0 0.0
    %1374 = vmatprep.subr.mxu0 0.0
    %1375 = vmatpush1.msra.mxu0 0.0
    %1376 = vmatprep.subr.mxu0 0.0
    %1377 = vmatpush1.msra.mxu0 0.0
    %1378 = vmatprep.subr.mxu0 0.0
    %1379 = vmatpush1.msra.mxu0 0.0
    %1380 = vmatprep.subr.mxu0 0.0
    %1381 = vmatpush1.msra.mxu0 0.0
    %1382 = vmatprep.subr.mxu0 0.0
    %1383 = vmatpush1.msra.mxu0 0.0
    %1384 = vmatprep.subr.mxu0 0.0
    %1385 = vmatpush1.msra.mxu0 0.0
    %1386 = vmatprep.subr.mxu0 0.0
    %1387 = vmatpush1.msra.mxu0 0.0
    %1388 = vmatprep.subr.mxu0 0.0
    %1389 = vmatpush1.msra.mxu0 0.0
    %1390 = vmatprep.subr.mxu0 0.0
    %1391 = vmatpush1.msra.mxu0 0.0
    %1392 = vmatprep.mubr.f32.mxu0 0.0
    %1393 = vmatmul.mubr.f32.gmra.mrb[0].mxu0 %v1305
    %v1394 = vpop.f32.mrb[0].mxu0
    %v1395 = vadd.f32 0.0, %v1394
    %v1396 = vpop.f32.mrb[0].mxu0
    %1397 = vmatprep.mubr.f32.mxu0 0.0
    %1398 = vmatmul.mubr.f32.gmra.mrb[0].mxu0 %v1308
    %v1399 = vpop.f32.mrb[0].mxu0
    %v1400 = vadd.f32 0.0, %v1399
    %v1401 = vpop.f32.mrb[0].mxu0
    %1402 = vmatprep.mubr.f32.mxu0 0.0
    %1403 = vmatmul.mubr.f32.gmra.mrb[0].mxu0 %v1311
    %v1404 = vpop.f32.mrb[0].mxu0
    %v1405 = vadd.f32 0.0, %v1404
    %v1406 = vpop.f32.mrb[0].mxu0
    %1407 = vmatprep.mubr.f32.mxu0 0.0
    %1408 = vmatmul.mubr.f32.gmra.mrb[0].mxu0 %v1314
    %v1409 = vpop.f32.mrb[0].mxu0
    %v1410 = vadd.f32 0.0, %v1409
    %v1411 = vpop.f32.mrb[0].mxu0
    %1412 = vmatprep.mubr.f32.mxu0 0.0
    %1413 = vmatmul.mubr.f32.gmra.mrb[0].mxu0 %v1317
    %v1414 = vpop.f32.mrb[0].mxu0
    %v1415 = vadd.f32 0.0, %v1414
    %v1416 = vpop.f32.mrb[0].mxu0
    %1417 = vmatprep.mubr.f32.mxu0 0.0
    %1418 = vmatmul.mubr.f32.gmra.mrb[0].mxu0 %v1320
    %v1419 = vpop.f32.mrb[0].mxu0
    %v1420 = vadd.f32 0.0, %v1419
    %v1421 = vpop.f32.mrb[0].mxu0
    %1422 = vmatprep.mubr.f32.mxu0 0.0
    %1423 = vmatmul.mubr.f32.gmra.mrb[0].mxu0 %v1323
    %v1424 = vpop.f32.mrb[0].mxu0
    %v1425 = vadd.f32 0.0, %v1424
    %v1426 = vpop.f32.mrb[0].mxu0
    %1427 = vmatprep.mubr.f32.mxu0 0.0
    %1428 = vmatmul.mubr.f32.gmra.mrb[0].mxu0 %v1326
    %v1429 = vpop.f32.mrb[0].mxu0
    %v1430 = vadd.f32 0.0, %v1429
    %v1431 = vpop.f32.mrb[0].mxu0
    %1432 = vdwg.mxu0
    %v1434 = vsel %vm207, %v1395, 0
    %v1437 = vsel %vm207, %v1400, 0
    %v1440 = vsel %vm207, %v1405, 0
    %v1443 = vsel %vm207, %v1410, 0
    %v1446 = vsel %vm207, %v1415, 0
    %v1449 = vsel %vm207, %v1420, 0
    %v1452 = vsel %vm207, %v1425, 0
    %v1455 = vsel %vm207, %v1430, 0
    %1457 = vmatprep.subr.mxu0 0.0
    %1458 = vmatpush1.msra.mxu0 %v586
    %1459 = vmatprep.subr.mxu0 0.0
    %1460 = vmatpush1.msra.mxu0 %v587
    %1461 = vmatprep.subr.mxu0 0.0
    %1462 = vmatpush1.msra.mxu0 0.0
    %1463 = vmatprep.subr.mxu0 0.0
    %1464 = vmatpush1.msra.mxu0 0.0
    %1465 = vmatprep.subr.mxu0 0.0
    %1466 = vmatpush1.msra.mxu0 0.0
    %1467 = vmatprep.subr.mxu0 0.0
    %1468 = vmatpush1.msra.mxu0 0.0
    %1469 = vmatprep.subr.mxu0 0.0
    %1470 = vmatpush1.msra.mxu0 0.0
    %1471 = vmatprep.subr.mxu0 0.0
    %1472 = vmatpush1.msra.mxu0 0.0
    %1473 = vmatprep.subr.mxu0 0.0
    %1474 = vmatpush1.msra.mxu0 0.0
    %1475 = vmatprep.subr.mxu0 0.0
    %1476 = vmatpush1.msra.mxu0 0.0
    %1477 = vmatprep.subr.mxu0 0.0
    %1478 = vmatpush1.msra.mxu0 0.0
    %1479 = vmatprep.subr.mxu0 0.0
    %1480 = vmatpush1.msra.mxu0 0.0
    %1481 = vmatprep.subr.mxu0 0.0
    %1482 = vmatpush1.msra.mxu0 0.0
    %1483 = vmatprep.subr.mxu0 0.0
    %1484 = vmatpush1.msra.mxu0 0.0
    %1485 = vmatprep.subr.mxu0 0.0
    %1486 = vmatpush1.msra.mxu0 0.0
    %1487 = vmatprep.subr.mxu0 0.0
    %1488 = vmatpush1.msra.mxu0 0.0
    %1489 = vmatprep.subr.mxu0 0.0
    %1490 = vmatpush1.msra.mxu0 0.0
    %1491 = vmatprep.subr.mxu0 0.0
    %1492 = vmatpush1.msra.mxu0 0.0
    %1493 = vmatprep.subr.mxu0 0.0
    %1494 = vmatpush1.msra.mxu0 0.0
    %1495 = vmatprep.subr.mxu0 0.0
    %1496 = vmatpush1.msra.mxu0 0.0
    %1497 = vmatprep.subr.mxu0 0.0
    %1498 = vmatpush1.msra.mxu0 0.0
    %1499 = vmatprep.subr.mxu0 0.0
    %1500 = vmatpush1.msra.mxu0 0.0
    %1501 = vmatprep.subr.mxu0 0.0
    %1502 = vmatpush1.msra.mxu0 0.0
    %1503 = vmatprep.subr.mxu0 0.0
    %1504 = vmatpush1.msra.mxu0 0.0
    %1505 = vmatprep.subr.mxu0 0.0
    %1506 = vmatpush1.msra.mxu0 0.0
    %1507 = vmatprep.subr.mxu0 0.0
    %1508 = vmatpush1.msra.mxu0 0.0
    %1509 = vmatprep.subr.mxu0 0.0
    %1510 = vmatpush1.msra.mxu0 0.0
    %1511 = vmatprep.subr.mxu0 0.0
    %1512 = vmatpush1.msra.mxu0 0.0
    %1513 = vmatprep.subr.mxu0 0.0
    %1514 = vmatpush1.msra.mxu0 0.0
    %1515 = vmatprep.subr.mxu0 0.0
    %1516 = vmatpush1.msra.mxu0 0.0
    %1517 = vmatprep.subr.mxu0 0.0
    %1518 = vmatpush1.msra.mxu0 0.0
    %1519 = vmatprep.subr.mxu0 0.0
    %1520 = vmatpush1.msra.mxu0 0.0
    %1521 = vmatprep.mubr.f32.mxu0 0.0
    %1522 = vmatmul.mubr.f32.gmra.mrb[0].mxu0 %v1434
    %v1523 = vpop.f32.mrb[0].mxu0
    %v1524 = vadd.f32 0.0, %v1523
    %v1525 = vpop.f32.mrb[0].mxu0
    %1526 = vmatprep.mubr.f32.mxu0 0.0
    %1527 = vmatmul.mubr.f32.gmra.mrb[0].mxu0 %v1437
    %v1528 = vpop.f32.mrb[0].mxu0
    %v1529 = vadd.f32 0.0, %v1528
    %v1530 = vpop.f32.mrb[0].mxu0
    %1531 = vmatprep.mubr.f32.mxu0 0.0
    %1532 = vmatmul.mubr.f32.gmra.mrb[0].mxu0 %v1440
    %v1533 = vpop.f32.mrb[0].mxu0
    %v1534 = vadd.f32 0.0, %v1533
    %v1535 = vpop.f32.mrb[0].mxu0
    %1536 = vmatprep.mubr.f32.mxu0 0.0
    %1537 = vmatmul.mubr.f32.gmra.mrb[0].mxu0 %v1443
    %v1538 = vpop.f32.mrb[0].mxu0
    %v1539 = vadd.f32 0.0, %v1538
    %v1540 = vpop.f32.mrb[0].mxu0
    %1541 = vmatprep.mubr.f32.mxu0 0.0
    %1542 = vmatmul.mubr.f32.gmra.mrb[0].mxu0 %v1446
    %v1543 = vpop.f32.mrb[0].mxu0
    %v1544 = vadd.f32 0.0, %v1543
    %v1545 = vpop.f32.mrb[0].mxu0
    %1546 = vmatprep.mubr.f32.mxu0 0.0
    %1547 = vmatmul.mubr.f32.gmra.mrb[0].mxu0 %v1449
    %v1548 = vpop.f32.mrb[0].mxu0
    %v1549 = vadd.f32 0.0, %v1548
    %v1550 = vpop.f32.mrb[0].mxu0
    %1551 = vmatprep.mubr.f32.mxu0 0.0
    %1552 = vmatmul.mubr.f32.gmra.mrb[0].mxu0 %v1452
    %v1553 = vpop.f32.mrb[0].mxu0
    %v1554 = vadd.f32 0.0, %v1553
    %v1555 = vpop.f32.mrb[0].mxu0
    %1556 = vmatprep.mubr.f32.mxu0 0.0
    %1557 = vmatmul.mubr.f32.gmra.mrb[0].mxu0 %v1455
    %v1558 = vpop.f32.mrb[0].mxu0
    %v1559 = vadd.f32 0.0, %v1558
    %v1560 = vpop.f32.mrb[0].mxu0
    %1561 = vdwg.mxu0
    %v1563 = vsel %vm207, %v969, 0
    %v1566 = vsel %vm207, %v974, 0
    %v1569 = vsel %vm207, %v979, 0
    %v1572 = vsel %vm207, %v984, 0
    %v1575 = vsel %vm207, %v989, 0
    %v1578 = vsel %vm207, %v994, 0
    %v1581 = vsel %vm207, %v999, 0
    %v1584 = vsel %vm207, %v1004, 0
    %1586 = vmatprep.subr.mxu0 0.0
    %1587 = vmatpush1.msra.mxu0 %v584
    %1588 = vmatprep.subr.mxu0 0.0
    %1589 = vmatpush1.msra.mxu0 %v585
    %1590 = vmatprep.subr.mxu0 0.0
    %1591 = vmatpush1.msra.mxu0 0.0
    %1592 = vmatprep.subr.mxu0 0.0
    %1593 = vmatpush1.msra.mxu0 0.0
    %1594 = vmatprep.subr.mxu0 0.0
    %1595 = vmatpush1.msra.mxu0 0.0
    %1596 = vmatprep.subr.mxu0 0.0
    %1597 = vmatpush1.msra.mxu0 0.0
    %1598 = vmatprep.subr.mxu0 0.0
    %1599 = vmatpush1.msra.mxu0 0.0
    %1600 = vmatprep.subr.mxu0 0.0
    %1601 = vmatpush1.msra.mxu0 0.0
    %1602 = vmatprep.subr.mxu0 0.0
    %1603 = vmatpush1.msra.mxu0 0.0
    %1604 = vmatprep.subr.mxu0 0.0
    %1605 = vmatpush1.msra.mxu0 0.0
    %1606 = vmatprep.subr.mxu0 0.0
    %1607 = vmatpush1.msra.mxu0 0.0
    %1608 = vmatprep.subr.mxu0 0.0
    %1609 = vmatpush1.msra.mxu0 0.0
    %1610 = vmatprep.subr.mxu0 0.0
    %1611 = vmatpush1.msra.mxu0 0.0
    %1612 = vmatprep.subr.mxu0 0.0
    %1613 = vmatpush1.msra.mxu0 0.0
    %1614 = vmatprep.subr.mxu0 0.0
    %1615 = vmatpush1.msra.mxu0 0.0
    %1616 = vmatprep.subr.mxu0 0.0
    %1617 = vmatpush1.msra.mxu0 0.0
    %1618 = vmatprep.subr.mxu0 0.0
    %1619 = vmatpush1.msra.mxu0 0.0
    %1620 = vmatprep.subr.mxu0 0.0
    %1621 = vmatpush1.msra.mxu0 0.0
    %1622 = vmatprep.subr.mxu0 0.0
    %1623 = vmatpush1.msra.mxu0 0.0
    %1624 = vmatprep.subr.mxu0 0.0
    %1625 = vmatpush1.msra.mxu0 0.0
    %1626 = vmatprep.subr.mxu0 0.0
    %1627 = vmatpush1.msra.mxu0 0.0
    %1628 = vmatprep.subr.mxu0 0.0
    %1629 = vmatpush1.msra.mxu0 0.0
    %1630 = vmatprep.subr.mxu0 0.0
    %1631 = vmatpush1.msra.mxu0 0.0
    %1632 = vmatprep.subr.mxu0 0.0
    %1633 = vmatpush1.msra.mxu0 0.0
    %1634 = vmatprep.subr.mxu0 0.0
    %1635 = vmatpush1.msra.mxu0 0.0
    %1636 = vmatprep.subr.mxu0 0.0
    %1637 = vmatpush1.msra.mxu0 0.0
    %1638 = vmatprep.subr.mxu0 0.0
    %1639 = vmatpush1.msra.mxu0 0.0
    %1640 = vmatprep.subr.mxu0 0.0
    %1641 = vmatpush1.msra.mxu0 0.0
    %1642 = vmatprep.subr.mxu0 0.0
    %1643 = vmatpush1.msra.mxu0 0.0
    %1644 = vmatprep.subr.mxu0 0.0
    %1645 = vmatpush1.msra.mxu0 0.0
    %1646 = vmatprep.subr.mxu0 0.0
    %1647 = vmatpush1.msra.mxu0 0.0
    %1648 = vmatprep.subr.mxu0 0.0
    %1649 = vmatpush1.msra.mxu0 0.0
    %1650 = vmatprep.mubr.f32.mxu0 0.0
    %1651 = vmatmul.mubr.f32.gmra.mrb[0].mxu0 %v1563
    %v1652 = vpop.f32.mrb[0].mxu0
    %v1653 = vadd.f32 %v1524, %v1652
    %v1654 = vpop.f32.mrb[0].mxu0
    %1655 = vmatprep.mubr.f32.mxu0 0.0
    %1656 = vmatmul.mubr.f32.gmra.mrb[0].mxu0 %v1566
    %v1657 = vpop.f32.mrb[0].mxu0
    %v1658 = vadd.f32 %v1529, %v1657
    %v1659 = vpop.f32.mrb[0].mxu0
    %1660 = vmatprep.mubr.f32.mxu0 0.0
    %1661 = vmatmul.mubr.f32.gmra.mrb[0].mxu0 %v1569
    %v1662 = vpop.f32.mrb[0].mxu0
    %v1663 = vadd.f32 %v1534, %v1662
    %v1664 = vpop.f32.mrb[0].mxu0
    %1665 = vmatprep.mubr.f32.mxu0 0.0
    %1666 = vmatmul.mubr.f32.gmra.mrb[0].mxu0 %v1572
    %v1667 = vpop.f32.mrb[0].mxu0
    %v1668 = vadd.f32 %v1539, %v1667
    %v1669 = vpop.f32.mrb[0].mxu0
    %1670 = vmatprep.mubr.f32.mxu0 0.0
    %1671 = vmatmul.mubr.f32.gmra.mrb[0].mxu0 %v1575
    %v1672 = vpop.f32.mrb[0].mxu0
    %v1673 = vadd.f32 %v1544, %v1672
    %v1674 = vpop.f32.mrb[0].mxu0
    %1675 = vmatprep.mubr.f32.mxu0 0.0
    %1676 = vmatmul.mubr.f32.gmra.mrb[0].mxu0 %v1578
    %v1677 = vpop.f32.mrb[0].mxu0
    %v1678 = vadd.f32 %v1549, %v1677
    %v1679 = vpop.f32.mrb[0].mxu0
    %1680 = vmatprep.mubr.f32.mxu0 0.0
    %1681 = vmatmul.mubr.f32.gmra.mrb[0].mxu0 %v1581
    %v1682 = vpop.f32.mrb[0].mxu0
    %v1683 = vadd.f32 %v1554, %v1682
    %v1684 = vpop.f32.mrb[0].mxu0
    %1685 = vmatprep.mubr.f32.mxu0 0.0
    %1686 = vmatmul.mubr.f32.gmra.mrb[0].mxu0 %v1584
    %v1687 = vpop.f32.mrb[0].mxu0
    %v1688 = vadd.f32 %v1559, %v1687
    %v1689 = vpop.f32.mrb[0].mxu0
    %1690 = vdwg.mxu0
    %v1691 = vadd.f32 %v404, %v1653
    %v1692 = vadd.f32 %v409, %v1658
    %v1693 = vadd.f32 %v414, %v1663
    %v1694 = vadd.f32 %v419, %v1668
    %v1695 = vadd.f32 %v424, %v1673
    %v1696 = vadd.f32 %v429, %v1678
    %v1697 = vadd.f32 %v434, %v1683
    %v1698 = vadd.f32 %v439, %v1688
    %v1699 = vld [vmem:[%s9] sm:$0x1]
    %v1700 = vld [vmem:[%s10] sm:$0x1]
    %v1701 = vsel %vm446, %v1691, 0.0
    %1702 = vadd.xlane.f32.xlu0 %v1701
    %v1703 = vpop.xlane.xlu0 %1702
    %v1704 = vsel %vm446, %v1692, 0.0
    %1705 = vadd.xlane.f32.xlu0 %v1704
    %v1706 = vpop.xlane.xlu0 %1705
    %v1707 = vsel %vm446, %v1693, 0.0
    %1708 = vadd.xlane.f32.xlu0 %v1707
    %v1709 = vpop.xlane.xlu0 %1708
    %v1710 = vsel %vm446, %v1694, 0.0
    %1711 = vadd.xlane.f32.xlu0 %v1710
    %v1712 = vpop.xlane.xlu0 %1711
    %v1713 = vsel %vm446, %v1695, 0.0
    %1714 = vadd.xlane.f32.xlu0 %v1713
    %v1715 = vpop.xlane.xlu0 %1714
    %v1716 = vsel %vm446, %v1696, 0.0
    %1717 = vadd.xlane.f32.xlu0 %v1716
    %v1718 = vpop.xlane.xlu0 %1717
    %v1719 = vsel %vm446, %v1697, 0.0
    %1720 = vadd.xlane.f32.xlu0 %v1719
    %v1721 = vpop.xlane.xlu0 %1720
    %v1722 = vsel %vm446, %v1698, 0.0
    %1723 = vadd.xlane.f32.xlu0 %v1722
    %v1724 = vpop.xlane.xlu0 %1723
    %v1725 = vrcp.pop 32.0
    %v1726 = vmul.f32 %v1703, %v1725
    %v1727 = vmul.f32 %v1706, %v1725
    %v1728 = vmul.f32 %v1709, %v1725
    %v1729 = vmul.f32 %v1712, %v1725
    %v1730 = vmul.f32 %v1715, %v1725
    %v1731 = vmul.f32 %v1718, %v1725
    %v1732 = vmul.f32 %v1721, %v1725
    %v1733 = vmul.f32 %v1724, %v1725
    %v1734 = vsub.f32 %v1691, %v1726
    %v1735 = vsub.f32 %v1692, %v1727
    %v1736 = vsub.f32 %v1693, %v1728
    %v1737 = vsub.f32 %v1694, %v1729
    %v1738 = vsub.f32 %v1695, %v1730
    %v1739 = vsub.f32 %v1696, %v1731
    %v1740 = vsub.f32 %v1697, %v1732
    %v1741 = vsub.f32 %v1698, %v1733
    %v1742 = vmul.f32 %v1734, %v1734
    %v1743 = vmul.f32 %v1735, %v1735
    %v1744 = vmul.f32 %v1736, %v1736
    %v1745 = vmul.f32 %v1737, %v1737
    %v1746 = vmul.f32 %v1738, %v1738
    %v1747 = vmul.f32 %v1739, %v1739
    %v1748 = vmul.f32 %v1740, %v1740
    %v1749 = vmul.f32 %v1741, %v1741
    %v1750 = vsel %vm446, %v1742, 0.0
    %1751 = vadd.xlane.f32.xlu0 %v1750
    %v1752 = vpop.xlane.xlu0 %1751
    %v1753 = vsel %vm446, %v1743, 0.0
    %1754 = vadd.xlane.f32.xlu0 %v1753
    %v1755 = vpop.xlane.xlu0 %1754
    %v1756 = vsel %vm446, %v1744, 0.0
    %1757 = vadd.xlane.f32.xlu0 %v1756
    %v1758 = vpop.xlane.xlu0 %1757
    %v1759 = vsel %vm446, %v1745, 0.0
    %1760 = vadd.xlane.f32.xlu0 %v1759
    %v1761 = vpop.xlane.xlu0 %1760
    %v1762 = vsel %vm446, %v1746, 0.0
    %1763 = vadd.xlane.f32.xlu0 %v1762
    %v1764 = vpop.xlane.xlu0 %1763
    %v1765 = vsel %vm446, %v1747, 0.0
    %1766 = vadd.xlane.f32.xlu0 %v1765
    %v1767 = vpop.xlane.xlu0 %1766
    %v1768 = vsel %vm446, %v1748, 0.0
    %1769 = vadd.xlane.f32.xlu0 %v1768
    %v1770 = vpop.xlane.xlu0 %1769
    %v1771 = vsel %vm446, %v1749, 0.0
    %1772 = vadd.xlane.f32.xlu0 %v1771
    %v1773 = vpop.xlane.xlu0 %1772
    %v1774 = vmul.f32 %v1752, %v1725
    %v1775 = vmul.f32 %v1755, %v1725
    %v1776 = vmul.f32 %v1758, %v1725
    %v1777 = vmul.f32 %v1761, %v1725
    %v1778 = vmul.f32 %v1764, %v1725
    %v1779 = vmul.f32 %v1767, %v1725
    %v1780 = vmul.f32 %v1770, %v1725
    %v1781 = vmul.f32 %v1773, %v1725
    %v1782 = vadd.f32 %v1774, 1e-05
    %v1783 = vadd.f32 %v1775, 1e-05
    %v1784 = vadd.f32 %v1776, 1e-05
    %v1785 = vadd.f32 %v1777, 1e-05
    %v1786 = vadd.f32 %v1778, 1e-05
    %v1787 = vadd.f32 %v1779, 1e-05
    %v1788 = vadd.f32 %v1780, 1e-05
    %v1789 = vadd.f32 %v1781, 1e-05
    %v1790 = vrsqrt.pop %v1782
    %v1791 = vrsqrt.pop %v1783
    %v1792 = vrsqrt.pop %v1784
    %v1793 = vrsqrt.pop %v1785
    %v1794 = vrsqrt.pop %v1786
    %v1795 = vrsqrt.pop %v1787
    %v1796 = vrsqrt.pop %v1788
    %v1797 = vrsqrt.pop %v1789
    %v1798 = vmul.f32 %v1734, %v1790
    %v1799 = vmul.f32 %v1735, %v1791
    %v1800 = vmul.f32 %v1736, %v1792
    %v1801 = vmul.f32 %v1737, %v1793
    %v1802 = vmul.f32 %v1738, %v1794
    %v1803 = vmul.f32 %v1739, %v1795
    %v1804 = vmul.f32 %v1740, %v1796
    %v1805 = vmul.f32 %v1741, %v1797
    %v1807 = vlaneseq
    %v1808 = vshrl.u32 %v1807, 7
    %v1809 = vsub.s32 0, %v1808
    %v1810 = vrot.slane %v1699, %v1809
    %v1812 = vmul.f32 %v1798, %v1810
    %v1813 = vmul.f32 %v1799, %v1810
    %v1814 = vmul.f32 %v1800, %v1810
    %v1815 = vmul.f32 %v1801, %v1810
    %v1816 = vmul.f32 %v1802, %v1810
    %v1817 = vmul.f32 %v1803, %v1810
    %v1818 = vmul.f32 %v1804, %v1810
    %v1819 = vmul.f32 %v1805, %v1810
    %v1821 = vlaneseq
    %v1822 = vshrl.u32 %v1821, 7
    %v1823 = vsub.s32 0, %v1822
    %v1824 = vrot.slane %v1700, %v1823
    %v1826 = vadd.f32 %v1812, %v1824
    %v1827 = vadd.f32 %v1813, %v1824
    %v1828 = vadd.f32 %v1814, %v1824
    %v1829 = vadd.f32 %v1815, %v1824
    %v1830 = vadd.f32 %v1816, %v1824
    %v1831 = vadd.f32 %v1817, %v1824
    %v1832 = vadd.f32 %v1818, %v1824
    %v1833 = vadd.f32 %v1819, %v1824
    %v1834 = vld [vmem:[%s13] sm:$0xff]
    %v1835 = vld [vmem:[%s13 + $0x8] sm:$0xff]
    %v1836 = vld [vmem:[%s13 + $0x10] sm:$0xff]
    %v1837 = vld [vmem:[%s13 + $0x18] sm:$0xff]
    %v1838 = vld [vmem:[%s14] sm:$0x1]
    %v1840 = vlaneseq
    %v1841 = vshrl.u32 %v1840, 7
    %v1842 = vsub.s32 0, %v1841
    %v1843 = vrot.slane %v1838, %v1842
    %v1846 = vsel %vm446, %v1826, 0
    %v1849 = vsel %vm446, %v1827, 0
    %v1852 = vsel %vm446, %v1828, 0
    %v1855 = vsel %vm446, %v1829, 0
    %v1858 = vsel %vm446, %v1830, 0
    %v1861 = vsel %vm446, %v1831, 0
    %v1864 = vsel %vm446, %v1832, 0
    %v1867 = vsel %vm446, %v1833, 0
    %1869 = vmatprep.subr.mxu0 0.0
    %1870 = vmatpush1.msra.mxu0 %v1834
    %1871 = vmatprep.subr.mxu0 0.0
    %1872 = vmatpush1.msra.mxu0 %v1835
    %1873 = vmatprep.subr.mxu0 0.0
    %1874 = vmatpush1.msra.mxu0 %v1836
    %1875 = vmatprep.subr.mxu0 0.0
    %1876 = vmatpush1.msra.mxu0 %v1837
    %1877 = vmatprep.subr.mxu0 0.0
    %1878 = vmatpush1.msra.mxu0 0.0
    %1879 = vmatprep.subr.mxu0 0.0
    %1880 = vmatpush1.msra.mxu0 0.0
    %1881 = vmatprep.subr.mxu0 0.0
    %1882 = vmatpush1.msra.mxu0 0.0
    %1883 = vmatprep.subr.mxu0 0.0
    %1884 = vmatpush1.msra.mxu0 0.0
    %1885 = vmatprep.subr.mxu0 0.0
    %1886 = vmatpush1.msra.mxu0 0.0
    %1887 = vmatprep.subr.mxu0 0.0
    %1888 = vmatpush1.msra.mxu0 0.0
    %1889 = vmatprep.subr.mxu0 0.0
    %1890 = vmatpush1.msra.mxu0 0.0
    %1891 = vmatprep.subr.mxu0 0.0
    %1892 = vmatpush1.msra.mxu0 0.0
    %1893 = vmatprep.subr.mxu0 0.0
    %1894 = vmatpush1.msra.mxu0 0.0
    %1895 = vmatprep.subr.mxu0 0.0
    %1896 = vmatpush1.msra.mxu0 0.0
    %1897 = vmatprep.subr.mxu0 0.0
    %1898 = vmatpush1.msra.mxu0 0.0
    %1899 = vmatprep.subr.mxu0 0.0
    %1900 = vmatpush1.msra.mxu0 0.0
    %1901 = vmatprep.subr.mxu0 0.0
    %1902 = vmatpush1.msra.mxu0 0.0
    %1903 = vmatprep.subr.mxu0 0.0
    %1904 = vmatpush1.msra.mxu0 0.0
    %1905 = vmatprep.subr.mxu0 0.0
    %1906 = vmatpush1.msra.mxu0 0.0
    %1907 = vmatprep.subr.mxu0 0.0
    %1908 = vmatpush1.msra.mxu0 0.0
    %1909 = vmatprep.subr.mxu0 0.0
    %1910 = vmatpush1.msra.mxu0 0.0
    %1911 = vmatprep.subr.mxu0 0.0
    %1912 = vmatpush1.msra.mxu0 0.0
    %1913 = vmatprep.subr.mxu0 0.0
    %1914 = vmatpush1.msra.mxu0 0.0
    %1915 = vmatprep.subr.mxu0 0.0
    %1916 = vmatpush1.msra.mxu0 0.0
    %1917 = vmatprep.subr.mxu0 0.0
    %1918 = vmatpush1.msra.mxu0 0.0
    %1919 = vmatprep.subr.mxu0 0.0
    %1920 = vmatpush1.msra.mxu0 0.0
    %1921 = vmatprep.subr.mxu0 0.0
    %1922 = vmatpush1.msra.mxu0 0.0
    %1923 = vmatprep.subr.mxu0 0.0
    %1924 = vmatpush1.msra.mxu0 0.0
    %1925 = vmatprep.subr.mxu0 0.0
    %1926 = vmatpush1.msra.mxu0 0.0
    %1927 = vmatprep.subr.mxu0 0.0
    %1928 = vmatpush1.msra.mxu0 0.0
    %1929 = vmatprep.subr.mxu0 0.0
    %1930 = vmatpush1.msra.mxu0 0.0
    %1931 = vmatprep.subr.mxu0 0.0
    %1932 = vmatpush1.msra.mxu0 0.0
    %1933 = vmatprep.mubr.f32.mxu0 0.0
    %1934 = vmatmul.mubr.f32.gmra.mrb[0].mxu0 %v1846
    %v1935 = vpop.f32.mrb[0].mxu0
    %v1936 = vadd.f32 %v1843, %v1935
    %v1937 = vpop.f32.mrb[0].mxu0
    %1938 = vmatprep.mubr.f32.mxu0 0.0
    %1939 = vmatmul.mubr.f32.gmra.mrb[0].mxu0 %v1849
    %v1940 = vpop.f32.mrb[0].mxu0
    %v1941 = vadd.f32 %v1843, %v1940
    %v1942 = vpop.f32.mrb[0].mxu0
    %1943 = vmatprep.mubr.f32.mxu0 0.0
    %1944 = vmatmul.mubr.f32.gmra.mrb[0].mxu0 %v1852
    %v1945 = vpop.f32.mrb[0].mxu0
    %v1946 = vadd.f32 %v1843, %v1945
    %v1947 = vpop.f32.mrb[0].mxu0
    %1948 = vmatprep.mubr.f32.mxu0 0.0
    %1949 = vmatmul.mubr.f32.gmra.mrb[0].mxu0 %v1855
    %v1950 = vpop.f32.mrb[0].mxu0
    %v1951 = vadd.f32 %v1843, %v1950
    %v1952 = vpop.f32.mrb[0].mxu0
    %1953 = vmatprep.mubr.f32.mxu0 0.0
    %1954 = vmatmul.mubr.f32.gmra.mrb[0].mxu0 %v1858
    %v1955 = vpop.f32.mrb[0].mxu0
    %v1956 = vadd.f32 %v1843, %v1955
    %v1957 = vpop.f32.mrb[0].mxu0
    %1958 = vmatprep.mubr.f32.mxu0 0.0
    %1959 = vmatmul.mubr.f32.gmra.mrb[0].mxu0 %v1861
    %v1960 = vpop.f32.mrb[0].mxu0
    %v1961 = vadd.f32 %v1843, %v1960
    %v1962 = vpop.f32.mrb[0].mxu0
    %1963 = vmatprep.mubr.f32.mxu0 0.0
    %1964 = vmatmul.mubr.f32.gmra.mrb[0].mxu0 %v1864
    %v1965 = vpop.f32.mrb[0].mxu0
    %v1966 = vadd.f32 %v1843, %v1965
    %v1967 = vpop.f32.mrb[0].mxu0
    %1968 = vmatprep.mubr.f32.mxu0 0.0
    %1969 = vmatmul.mubr.f32.gmra.mrb[0].mxu0 %v1867
    %v1970 = vpop.f32.mrb[0].mxu0
    %v1971 = vadd.f32 %v1843, %v1970
    %v1972 = vpop.f32.mrb[0].mxu0
    %1973 = vdwg.mxu0
    %v1974 = vmax.f32 %v1936, 0.0
    %v1975 = vmax.f32 %v1941, 0.0
    %v1976 = vmax.f32 %v1946, 0.0
    %v1977 = vmax.f32 %v1951, 0.0
    %v1978 = vmax.f32 %v1956, 0.0
    %v1979 = vmax.f32 %v1961, 0.0
    %v1980 = vmax.f32 %v1966, 0.0
    %v1981 = vmax.f32 %v1971, 0.0
    %v1982 = vld [vmem:[%s15] sm:$0xff]
    %v1983 = vld [vmem:[%s15 + $0x8] sm:$0xff]
    %v1984 = vld [vmem:[%s15 + $0x10] sm:$0xff]
    %v1985 = vld [vmem:[%s15 + $0x18] sm:$0xff]
    %v1986 = vld [vmem:[%s15 + $0x20] sm:$0xff]
    %v1987 = vld [vmem:[%s15 + $0x28] sm:$0xff]
    %v1988 = vld [vmem:[%s15 + $0x30] sm:$0xff]
    %v1989 = vld [vmem:[%s15 + $0x38] sm:$0xff]
    %v1990 = vld [vmem:[%s16] sm:$0x1]
    %v1992 = vlaneseq
    %v1993 = vshrl.u32 %v1992, 7
    %v1994 = vsub.s32 0, %v1993
    %v1995 = vrot.slane %v1990, %v1994
    %v1998 = vsel %vm765, %v1974, 0
    %v2001 = vsel %vm765, %v1975, 0
    %v2004 = vsel %vm765, %v1976, 0
    %v2007 = vsel %vm765, %v1977, 0
    %v2010 = vsel %vm765, %v1978, 0
    %v2013 = vsel %vm765, %v1979, 0
    %v2016 = vsel %vm765, %v1980, 0
    %v2019 = vsel %vm765, %v1981, 0
    %2021 = vmatprep.subr.mxu0 0.0
    %2022 = vmatpush1.msra.mxu0 %v1982
    %2023 = vmatprep.subr.mxu0 0.0
    %2024 = vmatpush1.msra.mxu0 %v1983
    %2025 = vmatprep.subr.mxu0 0.0
    %2026 = vmatpush1.msra.mxu0 %v1984
    %2027 = vmatprep.subr.mxu0 0.0
    %2028 = vmatpush1.msra.mxu0 %v1985
    %2029 = vmatprep.subr.mxu0 0.0
    %2030 = vmatpush1.msra.mxu0 %v1986
    %2031 = vmatprep.subr.mxu0 0.0
    %2032 = vmatpush1.msra.mxu0 %v1987
    %2033 = vmatprep.subr.mxu0 0.0
    %2034 = vmatpush1.msra.mxu0 %v1988
    %2035 = vmatprep.subr.mxu0 0.0
    %2036 = vmatpush1.msra.mxu0 %v1989
    %2037 = vmatprep.subr.mxu0 0.0
    %2038 = vmatpush1.msra.mxu0 0.0
    %2039 = vmatprep.subr.mxu0 0.0
    %2040 = vmatpush1.msra.mxu0 0.0
    %2041 = vmatprep.subr.mxu0 0.0
    %2042 = vmatpush1.msra.mxu0 0.0
    %2043 = vmatprep.subr.mxu0 0.0
    %2044 = vmatpush1.msra.mxu0 0.0
    %2045 = vmatprep.subr.mxu0 0.0
    %2046 = vmatpush1.msra.mxu0 0.0
    %2047 = vmatprep.subr.mxu0 0.0
    %2048 = vmatpush1.msra.mxu0 0.0
    %2049 = vmatprep.subr.mxu0 0.0
    %2050 = vmatpush1.msra.mxu0 0.0
    %2051 = vmatprep.subr.mxu0 0.0
    %2052 = vmatpush1.msra.mxu0 0.0
    %2053 = vmatprep.subr.mxu0 0.0
    %2054 = vmatpush1.msra.mxu0 0.0
    %2055 = vmatprep.subr.mxu0 0.0
    %2056 = vmatpush1.msra.mxu0 0.0
    %2057 = vmatprep.subr.mxu0 0.0
    %2058 = vmatpush1.msra.mxu0 0.0
    %2059 = vmatprep.subr.mxu0 0.0
    %2060 = vmatpush1.msra.mxu0 0.0
    %2061 = vmatprep.subr.mxu0 0.0
    %2062 = vmatpush1.msra.mxu0 0.0
    %2063 = vmatprep.subr.mxu0 0.0
    %2064 = vmatpush1.msra.mxu0 0.0
    %2065 = vmatprep.subr.mxu0 0.0
    %2066 = vmatpush1.msra.mxu0 0.0
    %2067 = vmatprep.subr.mxu0 0.0
    %2068 = vmatpush1.msra.mxu0 0.0
    %2069 = vmatprep.subr.mxu0 0.0
    %2070 = vmatpush1.msra.mxu0 0.0
    %2071 = vmatprep.subr.mxu0 0.0
    %2072 = vmatpush1.msra.mxu0 0.0
    %2073 = vmatprep.subr.mxu0 0.0
    %2074 = vmatpush1.msra.mxu0 0.0
    %2075 = vmatprep.subr.mxu0 0.0
    %2076 = vmatpush1.msra.mxu0 0.0
    %2077 = vmatprep.subr.mxu0 0.0
    %2078 = vmatpush1.msra.mxu0 0.0
    %2079 = vmatprep.subr.mxu0 0.0
    %2080 = vmatpush1.msra.mxu0 0.0
    %2081 = vmatprep.subr.mxu0 0.0
    %2082 = vmatpush1.msra.mxu0 0.0
    %2083 = vmatprep.subr.mxu0 0.0
    %2084 = vmatpush1.msra.mxu0 0.0
    %2085 = vmatprep.mubr.f32.mxu0 0.0
    %2086 = vmatmul.mubr.f32.gmra.mrb[0].mxu0 %v1998
    %v2087 = vpop.f32.mrb[0].mxu0
    %v2088 = vadd.f32 %v1995, %v2087
    %v2089 = vpop.f32.mrb[0].mxu0
    %2090 = vmatprep.mubr.f32.mxu0 0.0
    %2091 = vmatmul.mubr.f32.gmra.mrb[0].mxu0 %v2001
    %v2092 = vpop.f32.mrb[0].mxu0
    %v2093 = vadd.f32 %v1995, %v2092
    %v2094 = vpop.f32.mrb[0].mxu0
    %2095 = vmatprep.mubr.f32.mxu0 0.0
    %2096 = vmatmul.mubr.f32.gmra.mrb[0].mxu0 %v2004
    %v2097 = vpop.f32.mrb[0].mxu0
    %v2098 = vadd.f32 %v1995, %v2097
    %v2099 = vpop.f32.mrb[0].mxu0
    %2100 = vmatprep.mubr.f32.mxu0 0.0
    %2101 = vmatmul.mubr.f32.gmra.mrb[0].mxu0 %v2007
    %v2102 = vpop.f32.mrb[0].mxu0
    %v2103 = vadd.f32 %v1995, %v2102
    %v2104 = vpop.f32.mrb[0].mxu0
    %2105 = vmatprep.mubr.f32.mxu0 0.0
    %2106 = vmatmul.mubr.f32.gmra.mrb[0].mxu0 %v2010
    %v2107 = vpop.f32.mrb[0].mxu0
    %v2108 = vadd.f32 %v1995, %v2107
    %v2109 = vpop.f32.mrb[0].mxu0
    %2110 = vmatprep.mubr.f32.mxu0 0.0
    %2111 = vmatmul.mubr.f32.gmra.mrb[0].mxu0 %v2013
    %v2112 = vpop.f32.mrb[0].mxu0
    %v2113 = vadd.f32 %v1995, %v2112
    %v2114 = vpop.f32.mrb[0].mxu0
    %2115 = vmatprep.mubr.f32.mxu0 0.0
    %2116 = vmatmul.mubr.f32.gmra.mrb[0].mxu0 %v2016
    %v2117 = vpop.f32.mrb[0].mxu0
    %v2118 = vadd.f32 %v1995, %v2117
    %v2119 = vpop.f32.mrb[0].mxu0
    %2120 = vmatprep.mubr.f32.mxu0 0.0
    %2121 = vmatmul.mubr.f32.gmra.mrb[0].mxu0 %v2019
    %v2122 = vpop.f32.mrb[0].mxu0
    %v2123 = vadd.f32 %v1995, %v2122
    %v2124 = vpop.f32.mrb[0].mxu0
    %2125 = vdwg.mxu0
    %v2126 = vadd.f32 %v1826, %v2088
    %v2127 = vadd.f32 %v1827, %v2093
    %v2128 = vadd.f32 %v1828, %v2098
    %v2129 = vadd.f32 %v1829, %v2103
    %v2130 = vadd.f32 %v1830, %v2108
    %v2131 = vadd.f32 %v1831, %v2113
    %v2132 = vadd.f32 %v1832, %v2118
    %v2133 = vadd.f32 %v1833, %v2123
    %v2134 = vld [vmem:[%s11] sm:$0x1]
    %v2135 = vld [vmem:[%s12] sm:$0x1]
    %v2136 = vsel %vm446, %v2126, 0.0
    %2137 = vadd.xlane.f32.xlu0 %v2136
    %v2138 = vpop.xlane.xlu0 %2137
    %v2139 = vsel %vm446, %v2127, 0.0
    %2140 = vadd.xlane.f32.xlu0 %v2139
    %v2141 = vpop.xlane.xlu0 %2140
    %v2142 = vsel %vm446, %v2128, 0.0
    %2143 = vadd.xlane.f32.xlu0 %v2142
    %v2144 = vpop.xlane.xlu0 %2143
    %v2145 = vsel %vm446, %v2129, 0.0
    %2146 = vadd.xlane.f32.xlu0 %v2145
    %v2147 = vpop.xlane.xlu0 %2146
    %v2148 = vsel %vm446, %v2130, 0.0
    %2149 = vadd.xlane.f32.xlu0 %v2148
    %v2150 = vpop.xlane.xlu0 %2149
    %v2151 = vsel %vm446, %v2131, 0.0
    %2152 = vadd.xlane.f32.xlu0 %v2151
    %v2153 = vpop.xlane.xlu0 %2152
    %v2154 = vsel %vm446, %v2132, 0.0
    %2155 = vadd.xlane.f32.xlu0 %v2154
    %v2156 = vpop.xlane.xlu0 %2155
    %v2157 = vsel %vm446, %v2133, 0.0
    %2158 = vadd.xlane.f32.xlu0 %v2157
    %v2159 = vpop.xlane.xlu0 %2158
    %v2160 = vmul.f32 %v2138, %v1725
    %v2161 = vmul.f32 %v2141, %v1725
    %v2162 = vmul.f32 %v2144, %v1725
    %v2163 = vmul.f32 %v2147, %v1725
    %v2164 = vmul.f32 %v2150, %v1725
    %v2165 = vmul.f32 %v2153, %v1725
    %v2166 = vmul.f32 %v2156, %v1725
    %v2167 = vmul.f32 %v2159, %v1725
    %v2168 = vsub.f32 %v2126, %v2160
    %v2169 = vsub.f32 %v2127, %v2161
    %v2170 = vsub.f32 %v2128, %v2162
    %v2171 = vsub.f32 %v2129, %v2163
    %v2172 = vsub.f32 %v2130, %v2164
    %v2173 = vsub.f32 %v2131, %v2165
    %v2174 = vsub.f32 %v2132, %v2166
    %v2175 = vsub.f32 %v2133, %v2167
    %v2176 = vmul.f32 %v2168, %v2168
    %v2177 = vmul.f32 %v2169, %v2169
    %v2178 = vmul.f32 %v2170, %v2170
    %v2179 = vmul.f32 %v2171, %v2171
    %v2180 = vmul.f32 %v2172, %v2172
    %v2181 = vmul.f32 %v2173, %v2173
    %v2182 = vmul.f32 %v2174, %v2174
    %v2183 = vmul.f32 %v2175, %v2175
    %v2184 = vsel %vm446, %v2176, 0.0
    %2185 = vadd.xlane.f32.xlu0 %v2184
    %v2186 = vpop.xlane.xlu0 %2185
    %v2187 = vsel %vm446, %v2177, 0.0
    %2188 = vadd.xlane.f32.xlu0 %v2187
    %v2189 = vpop.xlane.xlu0 %2188
    %v2190 = vsel %vm446, %v2178, 0.0
    %2191 = vadd.xlane.f32.xlu0 %v2190
    %v2192 = vpop.xlane.xlu0 %2191
    %v2193 = vsel %vm446, %v2179, 0.0
    %2194 = vadd.xlane.f32.xlu0 %v2193
    %v2195 = vpop.xlane.xlu0 %2194
    %v2196 = vsel %vm446, %v2180, 0.0
    %2197 = vadd.xlane.f32.xlu0 %v2196
    %v2198 = vpop.xlane.xlu0 %2197
    %v2199 = vsel %vm446, %v2181, 0.0
    %2200 = vadd.xlane.f32.xlu0 %v2199
    %v2201 = vpop.xlane.xlu0 %2200
    %v2202 = vsel %vm446, %v2182, 0.0
    %2203 = vadd.xlane.f32.xlu0 %v2202
    %v2204 = vpop.xlane.xlu0 %2203
    %v2205 = vsel %vm446, %v2183, 0.0
    %2206 = vadd.xlane.f32.xlu0 %v2205
    %v2207 = vpop.xlane.xlu0 %2206
    %v2208 = vmul.f32 %v2186, %v1725
    %v2209 = vmul.f32 %v2189, %v1725
    %v2210 = vmul.f32 %v2192, %v1725
    %v2211 = vmul.f32 %v2195, %v1725
    %v2212 = vmul.f32 %v2198, %v1725
    %v2213 = vmul.f32 %v2201, %v1725
    %v2214 = vmul.f32 %v2204, %v1725
    %v2215 = vmul.f32 %v2207, %v1725
    %v2216 = vadd.f32 %v2208, 1e-05
    %v2217 = vadd.f32 %v2209, 1e-05
    %v2218 = vadd.f32 %v2210, 1e-05
    %v2219 = vadd.f32 %v2211, 1e-05
    %v2220 = vadd.f32 %v2212, 1e-05
    %v2221 = vadd.f32 %v2213, 1e-05
    %v2222 = vadd.f32 %v2214, 1e-05
    %v2223 = vadd.f32 %v2215, 1e-05
    %v2224 = vrsqrt.pop %v2216
    %v2225 = vrsqrt.pop %v2217
    %v2226 = vrsqrt.pop %v2218
    %v2227 = vrsqrt.pop %v2219
    %v2228 = vrsqrt.pop %v2220
    %v2229 = vrsqrt.pop %v2221
    %v2230 = vrsqrt.pop %v2222
    %v2231 = vrsqrt.pop %v2223
    %v2232 = vmul.f32 %v2168, %v2224
    %v2233 = vmul.f32 %v2169, %v2225
    %v2234 = vmul.f32 %v2170, %v2226
    %v2235 = vmul.f32 %v2171, %v2227
    %v2236 = vmul.f32 %v2172, %v2228
    %v2237 = vmul.f32 %v2173, %v2229
    %v2238 = vmul.f32 %v2174, %v2230
    %v2239 = vmul.f32 %v2175, %v2231
    %v2241 = vlaneseq
    %v2242 = vshrl.u32 %v2241, 7
    %v2243 = vsub.s32 0, %v2242
    %v2244 = vrot.slane %v2134, %v2243
    %v2246 = vmul.f32 %v2232, %v2244
    %v2247 = vmul.f32 %v2233, %v2244
    %v2248 = vmul.f32 %v2234, %v2244
    %v2249 = vmul.f32 %v2235, %v2244
    %v2250 = vmul.f32 %v2236, %v2244
    %v2251 = vmul.f32 %v2237, %v2244
    %v2252 = vmul.f32 %v2238, %v2244
    %v2253 = vmul.f32 %v2239, %v2244
    %v2255 = vlaneseq
    %v2256 = vshrl.u32 %v2255, 7
    %v2257 = vsub.s32 0, %v2256
    %v2258 = vrot.slane %v2135, %v2257
    %v2260 = vadd.f32 %v2246, %v2258
    %v2261 = vadd.f32 %v2247, %v2258
    %v2262 = vadd.f32 %v2248, %v2258
    %v2263 = vadd.f32 %v2249, %v2258
    %v2264 = vadd.f32 %v2250, %v2258
    %v2265 = vadd.f32 %v2251, %v2258
    %v2266 = vadd.f32 %v2252, %v2258
    %v2267 = vadd.f32 %v2253, %v2258
    %v2268 = vld [vmem:[%s17] sm:$0xff]
    %v2269 = vld [vmem:[%s17 + $0x8] sm:$0xff]
    %v2270 = vld [vmem:[%s17 + $0x10] sm:$0xff]
    %v2271 = vld [vmem:[%s17 + $0x18] sm:$0xff]
    %v2272 = vld [vmem:[%s18] sm:$0x1]
    %v2274 = vlaneseq
    %v2275 = vshrl.u32 %v2274, 7
    %v2276 = vsub.s32 0, %v2275
    %v2277 = vrot.slane %v2272, %v2276
    %v2280 = vsel %vm446, %v2260, 0
    %v2283 = vsel %vm446, %v2261, 0
    %v2286 = vsel %vm446, %v2262, 0
    %v2289 = vsel %vm446, %v2263, 0
    %v2292 = vsel %vm446, %v2264, 0
    %v2295 = vsel %vm446, %v2265, 0
    %v2298 = vsel %vm446, %v2266, 0
    %v2301 = vsel %vm446, %v2267, 0
    %2303 = vmatprep.subr.mxu0 0.0
    %2304 = vmatpush1.msra.mxu0 %v2268
    %2305 = vmatprep.subr.mxu0 0.0
    %2306 = vmatpush1.msra.mxu0 %v2269
    %2307 = vmatprep.subr.mxu0 0.0
    %2308 = vmatpush1.msra.mxu0 %v2270
    %2309 = vmatprep.subr.mxu0 0.0
    %2310 = vmatpush1.msra.mxu0 %v2271
    %2311 = vmatprep.subr.mxu0 0.0
    %2312 = vmatpush1.msra.mxu0 0.0
    %2313 = vmatprep.subr.mxu0 0.0
    %2314 = vmatpush1.msra.mxu0 0.0
    %2315 = vmatprep.subr.mxu0 0.0
    %2316 = vmatpush1.msra.mxu0 0.0
    %2317 = vmatprep.subr.mxu0 0.0
    %2318 = vmatpush1.msra.mxu0 0.0
    %2319 = vmatprep.subr.mxu0 0.0
    %2320 = vmatpush1.msra.mxu0 0.0
    %2321 = vmatprep.subr.mxu0 0.0
    %2322 = vmatpush1.msra.mxu0 0.0
    %2323 = vmatprep.subr.mxu0 0.0
    %2324 = vmatpush1.msra.mxu0 0.0
    %2325 = vmatprep.subr.mxu0 0.0
    %2326 = vmatpush1.msra.mxu0 0.0
    %2327 = vmatprep.subr.mxu0 0.0
    %2328 = vmatpush1.msra.mxu0 0.0
    %2329 = vmatprep.subr.mxu0 0.0
    %2330 = vmatpush1.msra.mxu0 0.0
    %2331 = vmatprep.subr.mxu0 0.0
    %2332 = vmatpush1.msra.mxu0 0.0
    %2333 = vmatprep.subr.mxu0 0.0
    %2334 = vmatpush1.msra.mxu0 0.0
    %2335 = vmatprep.subr.mxu0 0.0
    %2336 = vmatpush1.msra.mxu0 0.0
    %2337 = vmatprep.subr.mxu0 0.0
    %2338 = vmatpush1.msra.mxu0 0.0
    %2339 = vmatprep.subr.mxu0 0.0
    %2340 = vmatpush1.msra.mxu0 0.0
    %2341 = vmatprep.subr.mxu0 0.0
    %2342 = vmatpush1.msra.mxu0 0.0
    %2343 = vmatprep.subr.mxu0 0.0
    %2344 = vmatpush1.msra.mxu0 0.0
    %2345 = vmatprep.subr.mxu0 0.0
    %2346 = vmatpush1.msra.mxu0 0.0
    %2347 = vmatprep.subr.mxu0 0.0
    %2348 = vmatpush1.msra.mxu0 0.0
    %2349 = vmatprep.subr.mxu0 0.0
    %2350 = vmatpush1.msra.mxu0 0.0
    %2351 = vmatprep.subr.mxu0 0.0
    %2352 = vmatpush1.msra.mxu0 0.0
    %2353 = vmatprep.subr.mxu0 0.0
    %2354 = vmatpush1.msra.mxu0 0.0
    %2355 = vmatprep.subr.mxu0 0.0
    %2356 = vmatpush1.msra.mxu0 0.0
    %2357 = vmatprep.subr.mxu0 0.0
    %2358 = vmatpush1.msra.mxu0 0.0
    %2359 = vmatprep.subr.mxu0 0.0
    %2360 = vmatpush1.msra.mxu0 0.0
    %2361 = vmatprep.subr.mxu0 0.0
    %2362 = vmatpush1.msra.mxu0 0.0
    %2363 = vmatprep.subr.mxu0 0.0
    %2364 = vmatpush1.msra.mxu0 0.0
    %2365 = vmatprep.subr.mxu0 0.0
    %2366 = vmatpush1.msra.mxu0 0.0
    %2367 = vmatprep.mubr.f32.mxu0 0.0
    %2368 = vmatmul.mubr.f32.gmra.mrb[0].mxu0 %v2280
    %v2369 = vpop.f32.mrb[0].mxu0
    %v2370 = vadd.f32 %v2277, %v2369
    %v2371 = vpop.f32.mrb[0].mxu0
    %2372 = vmatprep.mubr.f32.mxu0 0.0
    %2373 = vmatmul.mubr.f32.gmra.mrb[0].mxu0 %v2283
    %v2374 = vpop.f32.mrb[0].mxu0
    %v2375 = vadd.f32 %v2277, %v2374
    %v2376 = vpop.f32.mrb[0].mxu0
    %2377 = vmatprep.mubr.f32.mxu0 0.0
    %2378 = vmatmul.mubr.f32.gmra.mrb[0].mxu0 %v2286
    %v2379 = vpop.f32.mrb[0].mxu0
    %v2380 = vadd.f32 %v2277, %v2379
    %v2381 = vpop.f32.mrb[0].mxu0
    %2382 = vmatprep.mubr.f32.mxu0 0.0
    %2383 = vmatmul.mubr.f32.gmra.mrb[0].mxu0 %v2289
    %v2384 = vpop.f32.mrb[0].mxu0
    %v2385 = vadd.f32 %v2277, %v2384
    %v2386 = vpop.f32.mrb[0].mxu0
    %2387 = vmatprep.mubr.f32.mxu0 0.0
    %2388 = vmatmul.mubr.f32.gmra.mrb[0].mxu0 %v2292
    %v2389 = vpop.f32.mrb[0].mxu0
    %v2390 = vadd.f32 %v2277, %v2389
    %v2391 = vpop.f32.mrb[0].mxu0
    %2392 = vmatprep.mubr.f32.mxu0 0.0
    %2393 = vmatmul.mubr.f32.gmra.mrb[0].mxu0 %v2295
    %v2394 = vpop.f32.mrb[0].mxu0
    %v2395 = vadd.f32 %v2277, %v2394
    %v2396 = vpop.f32.mrb[0].mxu0
    %2397 = vmatprep.mubr.f32.mxu0 0.0
    %2398 = vmatmul.mubr.f32.gmra.mrb[0].mxu0 %v2298
    %v2399 = vpop.f32.mrb[0].mxu0
    %v2400 = vadd.f32 %v2277, %v2399
    %v2401 = vpop.f32.mrb[0].mxu0
    %2402 = vmatprep.mubr.f32.mxu0 0.0
    %2403 = vmatmul.mubr.f32.gmra.mrb[0].mxu0 %v2301
    %v2404 = vpop.f32.mrb[0].mxu0
    %v2405 = vadd.f32 %v2277, %v2404
    %v2406 = vpop.f32.mrb[0].mxu0
    %2407 = vdwg.mxu0
    %v2408 = vtanh.pop %v2370
    %v2409 = vtanh.pop %v2375
    %v2410 = vtanh.pop %v2380
    %v2411 = vtanh.pop %v2385
    %v2412 = vtanh.pop %v2390
    %v2413 = vtanh.pop %v2395
    %v2414 = vtanh.pop %v2400
    %v2415 = vtanh.pop %v2405
    %v2416 = vld [vmem:[%s19] sm:$0x1]
    %v2418 = vlaneseq
    %v2419 = vshrl.u32 %v2418, 7
    %v2420 = vsub.s32 0, %v2419
    %v2421 = vrot.slane %v2416, %v2420
    %v2423 = vmul.f32 %v2408, %v2421
    %v2424 = vmul.f32 %v2409, %v2421
    %v2425 = vmul.f32 %v2410, %v2421
    %v2426 = vmul.f32 %v2411, %v2421
    %v2427 = vmul.f32 %v2412, %v2421
    %v2428 = vmul.f32 %v2413, %v2421
    %v2429 = vmul.f32 %v2414, %v2421
    %v2430 = vmul.f32 %v2415, %v2421
    %v2431 = vsel %vm446, %v2423, 0.0
    %2432 = vadd.xlane.f32.xlu0 %v2431
    %v2433 = vpop.xlane.xlu0 %2432
    %v2434 = vsel %vm446, %v2424, 0.0
    %2435 = vadd.xlane.f32.xlu0 %v2434
    %v2436 = vpop.xlane.xlu0 %2435
    %v2437 = vsel %vm446, %v2425, 0.0
    %2438 = vadd.xlane.f32.xlu0 %v2437
    %v2439 = vpop.xlane.xlu0 %2438
    %v2440 = vsel %vm446, %v2426, 0.0
    %2441 = vadd.xlane.f32.xlu0 %v2440
    %v2442 = vpop.xlane.xlu0 %2441
    %v2443 = vsel %vm446, %v2427, 0.0
    %2444 = vadd.xlane.f32.xlu0 %v2443
    %v2445 = vpop.xlane.xlu0 %2444
    %v2446 = vsel %vm446, %v2428, 0.0
    %2447 = vadd.xlane.f32.xlu0 %v2446
    %v2448 = vpop.xlane.xlu0 %2447
    %v2449 = vsel %vm446, %v2429, 0.0
    %2450 = vadd.xlane.f32.xlu0 %v2449
    %v2451 = vpop.xlane.xlu0 %2450
    %v2452 = vsel %vm446, %v2430, 0.0
    %2453 = vadd.xlane.f32.xlu0 %v2452
    %v2454 = vpop.xlane.xlu0 %2453
    %v2455 = vld [vmem:[%s3] sm:$0xff]
    %v2457 = vlaneseq
    %v2458 = vshrl.u32 %v2457, 7
    %v2459 = vsub.s32 0, %v2458
    %v2460 = vrot.slane %v2455, %v2459
    %2462 = vbcast.lane.b32.xlu0 %v2460, 256
    %v2463 = vpop.permute.xlu0 %2462
    %v2464 = vlaneseq
    %v2465 = vshrl.u32 %v2464, 7
    %v2466 = vsub.s32 1, %v2465
    %v2467 = vrot.slane %v2455, %v2466
    %2469 = vbcast.lane.b32.xlu0 %v2467, 256
    %v2470 = vpop.permute.xlu0 %2469
    %v2471 = vlaneseq
    %v2472 = vshrl.u32 %v2471, 7
    %v2473 = vsub.s32 2, %v2472
    %v2474 = vrot.slane %v2455, %v2473
    %2476 = vbcast.lane.b32.xlu0 %v2474, 256
    %v2477 = vpop.permute.xlu0 %2476
    %v2478 = vlaneseq
    %v2479 = vshrl.u32 %v2478, 7
    %v2480 = vsub.s32 3, %v2479
    %v2481 = vrot.slane %v2455, %v2480
    %2483 = vbcast.lane.b32.xlu0 %v2481, 256
    %v2484 = vpop.permute.xlu0 %2483
    %v2485 = vlaneseq
    %v2486 = vshrl.u32 %v2485, 7
    %v2487 = vsub.s32 4, %v2486
    %v2488 = vrot.slane %v2455, %v2487
    %2490 = vbcast.lane.b32.xlu0 %v2488, 256
    %v2491 = vpop.permute.xlu0 %2490
    %v2492 = vlaneseq
    %v2493 = vshrl.u32 %v2492, 7
    %v2494 = vsub.s32 5, %v2493
    %v2495 = vrot.slane %v2455, %v2494
    %2497 = vbcast.lane.b32.xlu0 %v2495, 256
    %v2498 = vpop.permute.xlu0 %2497
    %v2499 = vlaneseq
    %v2500 = vshrl.u32 %v2499, 7
    %v2501 = vsub.s32 6, %v2500
    %v2502 = vrot.slane %v2455, %v2501
    %2504 = vbcast.lane.b32.xlu0 %v2502, 256
    %v2505 = vpop.permute.xlu0 %2504
    %v2506 = vlaneseq
    %v2507 = vshrl.u32 %v2506, 7
    %v2508 = vsub.s32 7, %v2507
    %v2509 = vrot.slane %v2455, %v2508
    %2511 = vbcast.lane.b32.xlu0 %v2509, 256
    %v2512 = vpop.permute.xlu0 %2511
    %v2521 = vadd.f32 %v2433, %v2463
    %v2522 = vadd.f32 %v2436, %v2470
    %v2523 = vadd.f32 %v2439, %v2477
    %v2524 = vadd.f32 %v2442, %v2484
    %v2525 = vadd.f32 %v2445, %v2491
    %v2526 = vadd.f32 %v2448, %v2498
    %v2527 = vadd.f32 %v2451, %v2505
    %v2528 = vadd.f32 %v2454, %v2512
    %2537 = vset.pattern.permute.xlu0 0
    %2538 = vperm.xlu0 %2537, %v2521
    %v2539 = vpop.permute.xlu0 %2538
    %2540 = vset.pattern.permute.xlu0 0
    %2541 = vperm.xlu0 %2540, %v2522
    %v2542 = vpop.permute.xlu0 %2541
    %2543 = vset.pattern.permute.xlu0 0
    %2544 = vperm.xlu0 %2543, %v2523
    %v2545 = vpop.permute.xlu0 %2544
    %2546 = vset.pattern.permute.xlu0 0
    %2547 = vperm.xlu0 %2546, %v2524
    %v2548 = vpop.permute.xlu0 %2547
    %2549 = vset.pattern.permute.xlu0 0
    %2550 = vperm.xlu0 %2549, %v2525
    %v2551 = vpop.permute.xlu0 %2550
    %2552 = vset.pattern.permute.xlu0 0
    %2553 = vperm.xlu0 %2552, %v2526
    %v2554 = vpop.permute.xlu0 %2553
    %2555 = vset.pattern.permute.xlu0 0
    %2556 = vperm.xlu0 %2555, %v2527
    %v2557 = vpop.permute.xlu0 %2556
    %2558 = vset.pattern.permute.xlu0 0
    %2559 = vperm.xlu0 %2558, %v2528
    %v2560 = vpop.permute.xlu0 %2559
    %v2561 = vlaneseq
    %v2562 = vshrl.u32 %v2561, 7
    %v2563 = vsub.s32 %v92, %v2562
    %v2564 = vrot.slane %v2539, %v2563
    %v2565 = vlaneseq
    %v2566 = vshrl.u32 %v2565, 7
    %v2567 = vsub.s32 %v92, %v2566
    %v2568 = vrot.slane %v2542, %v2567
    %v2569 = vlaneseq
    %v2570 = vshrl.u32 %v2569, 7
    %v2571 = vsub.s32 %v92, %v2570
    %v2572 = vrot.slane %v2545, %v2571
    %v2573 = vlaneseq
    %v2574 = vshrl.u32 %v2573, 7
    %v2575 = vsub.s32 %v92, %v2574
    %v2576 = vrot.slane %v2548, %v2575
    %v2577 = vlaneseq
    %v2578 = vshrl.u32 %v2577, 7
    %v2579 = vsub.s32 %v92, %v2578
    %v2580 = vrot.slane %v2551, %v2579
    %v2581 = vlaneseq
    %v2582 = vshrl.u32 %v2581, 7
    %v2583 = vsub.s32 %v92, %v2582
    %v2584 = vrot.slane %v2554, %v2583
    %v2585 = vlaneseq
    %v2586 = vshrl.u32 %v2585, 7
    %v2587 = vsub.s32 %v92, %v2586
    %v2588 = vrot.slane %v2557, %v2587
    %v2589 = vlaneseq
    %v2590 = vshrl.u32 %v2589, 7
    %v2591 = vsub.s32 %v92, %v2590
    %v2592 = vrot.slane %v2560, %v2591
    %vm2593 = vcmask 1041409
    %v2594 = vsel %vm2593, %v2568, %v2564
    %vm2595 = vcmask 1042434
    %v2596 = vsel %vm2595, %v2572, %v2594
    %vm2597 = vcmask 1043459
    %v2598 = vsel %vm2597, %v2576, %v2596
    %vm2599 = vcmask 1044484
    %v2600 = vsel %vm2599, %v2580, %v2598
    %vm2601 = vcmask 1045509
    %v2602 = vsel %vm2601, %v2584, %v2600
    %vm2603 = vcmask 1046534
    %v2604 = vsel %vm2603, %v2588, %v2602
    %vm2605 = vcmask 1047559
    %v2606 = vsel %vm2605, %v2592, %v2604
    %vm2608 = vcmask 64512
    %v2609 = vsel %vm2608, %v2606, -inf
    %2610 = vmax.xlane.f32.xlu0 %v2609
    %v2611 = vpop.xlane.xlu0 %2610
    %v2613 = vlaneseq
    %v2614 = vshrl.u32 %v2613, 7
    %v2615 = vsub.s32 0, %v2614
    %v2616 = vrot.slane %v2611, %v2615
    %v2617 = vlaneseq
    %v2618 = vshrl.u32 %v2617, 7
    %v2619 = vsub.s32 1, %v2618
    %v2620 = vrot.slane %v2611, %v2619
    %v2621 = vlaneseq
    %v2622 = vshrl.u32 %v2621, 7
    %v2623 = vsub.s32 2, %v2622
    %v2624 = vrot.slane %v2611, %v2623
    %v2625 = vlaneseq
    %v2626 = vshrl.u32 %v2625, 7
    %v2627 = vsub.s32 3, %v2626
    %v2628 = vrot.slane %v2611, %v2627
    %v2629 = vlaneseq
    %v2630 = vshrl.u32 %v2629, 7
    %v2631 = vsub.s32 4, %v2630
    %v2632 = vrot.slane %v2611, %v2631
    %v2633 = vlaneseq
    %v2634 = vshrl.u32 %v2633, 7
    %v2635 = vsub.s32 5, %v2634
    %v2636 = vrot.slane %v2611, %v2635
    %v2637 = vlaneseq
    %v2638 = vshrl.u32 %v2637, 7
    %v2639 = vsub.s32 6, %v2638
    %v2640 = vrot.slane %v2611, %v2639
    %v2641 = vlaneseq
    %v2642 = vshrl.u32 %v2641, 7
    %v2643 = vsub.s32 7, %v2642
    %v2644 = vrot.slane %v2611, %v2643
    %v2653 = vsub.f32 %v2521, %v2616
    %v2654 = vsub.f32 %v2522, %v2620
    %v2655 = vsub.f32 %v2523, %v2624
    %v2656 = vsub.f32 %v2524, %v2628
    %v2657 = vsub.f32 %v2525, %v2632
    %v2658 = vsub.f32 %v2526, %v2636
    %v2659 = vsub.f32 %v2527, %v2640
    %v2660 = vsub.f32 %v2528, %v2644
    %v2661 = vmul.f32 %v2653, 1.442695
    %v2662 = vpow.pop %v2661
    %v2663 = vmul.f32 %v2654, 1.442695
    %v2664 = vpow.pop %v2663
    %v2665 = vmul.f32 %v2655, 1.442695
    %v2666 = vpow.pop %v2665
    %v2667 = vmul.f32 %v2656, 1.442695
    %v2668 = vpow.pop %v2667
    %v2669 = vmul.f32 %v2657, 1.442695
    %v2670 = vpow.pop %v2669
    %v2671 = vmul.f32 %v2658, 1.442695
    %v2672 = vpow.pop %v2671
    %v2673 = vmul.f32 %v2659, 1.442695
    %v2674 = vpow.pop %v2673
    %v2675 = vmul.f32 %v2660, 1.442695
    %v2676 = vpow.pop %v2675
    %2685 = vset.pattern.permute.xlu0 0
    %2686 = vperm.xlu0 %2685, %v2662
    %v2687 = vpop.permute.xlu0 %2686
    %2688 = vset.pattern.permute.xlu0 0
    %2689 = vperm.xlu0 %2688, %v2664
    %v2690 = vpop.permute.xlu0 %2689
    %2691 = vset.pattern.permute.xlu0 0
    %2692 = vperm.xlu0 %2691, %v2666
    %v2693 = vpop.permute.xlu0 %2692
    %2694 = vset.pattern.permute.xlu0 0
    %2695 = vperm.xlu0 %2694, %v2668
    %v2696 = vpop.permute.xlu0 %2695
    %2697 = vset.pattern.permute.xlu0 0
    %2698 = vperm.xlu0 %2697, %v2670
    %v2699 = vpop.permute.xlu0 %2698
    %2700 = vset.pattern.permute.xlu0 0
    %2701 = vperm.xlu0 %2700, %v2672
    %v2702 = vpop.permute.xlu0 %2701
    %2703 = vset.pattern.permute.xlu0 0
    %2704 = vperm.xlu0 %2703, %v2674
    %v2705 = vpop.permute.xlu0 %2704
    %2706 = vset.pattern.permute.xlu0 0
    %2707 = vperm.xlu0 %2706, %v2676
    %v2708 = vpop.permute.xlu0 %2707
    %v2709 = vlaneseq
    %v2710 = vshrl.u32 %v2709, 7
    %v2711 = vsub.s32 %v92, %v2710
    %v2712 = vrot.slane %v2687, %v2711
    %v2713 = vlaneseq
    %v2714 = vshrl.u32 %v2713, 7
    %v2715 = vsub.s32 %v92, %v2714
    %v2716 = vrot.slane %v2690, %v2715
    %v2717 = vlaneseq
    %v2718 = vshrl.u32 %v2717, 7
    %v2719 = vsub.s32 %v92, %v2718
    %v2720 = vrot.slane %v2693, %v2719
    %v2721 = vlaneseq
    %v2722 = vshrl.u32 %v2721, 7
    %v2723 = vsub.s32 %v92, %v2722
    %v2724 = vrot.slane %v2696, %v2723
    %v2725 = vlaneseq
    %v2726 = vshrl.u32 %v2725, 7
    %v2727 = vsub.s32 %v92, %v2726
    %v2728 = vrot.slane %v2699, %v2727
    %v2729 = vlaneseq
    %v2730 = vshrl.u32 %v2729, 7
    %v2731 = vsub.s32 %v92, %v2730
    %v2732 = vrot.slane %v2702, %v2731
    %v2733 = vlaneseq
    %v2734 = vshrl.u32 %v2733, 7
    %v2735 = vsub.s32 %v92, %v2734
    %v2736 = vrot.slane %v2705, %v2735
    %v2737 = vlaneseq
    %v2738 = vshrl.u32 %v2737, 7
    %v2739 = vsub.s32 %v92, %v2738
    %v2740 = vrot.slane %v2708, %v2739
    %v2741 = vsel %vm2593, %v2716, %v2712
    %v2742 = vsel %vm2595, %v2720, %v2741
    %v2743 = vsel %vm2597, %v2724, %v2742
    %v2744 = vsel %vm2599, %v2728, %v2743
    %v2745 = vsel %vm2601, %v2732, %v2744
    %v2746 = vsel %vm2603, %v2736, %v2745
    %v2747 = vsel %vm2605, %v2740, %v2746
    %v2749 = vsel %vm2608, %v2747, 0.0
    %2750 = vadd.xlane.f32.xlu0 %v2749
    %v2751 = vpop.xlane.xlu0 %2750
    %v2752 = vrcp.pop %v2751
    %v2754 = vlaneseq
    %v2755 = vshrl.u32 %v2754, 7
    %v2756 = vsub.s32 0, %v2755
    %v2757 = vrot.slane %v2752, %v2756
    %v2758 = vlaneseq
    %v2759 = vshrl.u32 %v2758, 7
    %v2760 = vsub.s32 1, %v2759
    %v2761 = vrot.slane %v2752, %v2760
    %v2762 = vlaneseq
    %v2763 = vshrl.u32 %v2762, 7
    %v2764 = vsub.s32 2, %v2763
    %v2765 = vrot.slane %v2752, %v2764
    %v2766 = vlaneseq
    %v2767 = vshrl.u32 %v2766, 7
    %v2768 = vsub.s32 3, %v2767
    %v2769 = vrot.slane %v2752, %v2768
    %v2770 = vlaneseq
    %v2771 = vshrl.u32 %v2770, 7
    %v2772 = vsub.s32 4, %v2771
    %v2773 = vrot.slane %v2752, %v2772
    %v2774 = vlaneseq
    %v2775 = vshrl.u32 %v2774, 7
    %v2776 = vsub.s32 5, %v2775
    %v2777 = vrot.slane %v2752, %v2776
    %v2778 = vlaneseq
    %v2779 = vshrl.u32 %v2778, 7
    %v2780 = vsub.s32 6, %v2779
    %v2781 = vrot.slane %v2752, %v2780
    %v2782 = vlaneseq
    %v2783 = vshrl.u32 %v2782, 7
    %v2784 = vsub.s32 7, %v2783
    %v2785 = vrot.slane %v2752, %v2784
    %v2794 = vmul.f32 %v2662, %v2757
    %v2795 = vmul.f32 %v2664, %v2761
    %v2796 = vmul.f32 %v2666, %v2765
    %v2797 = vmul.f32 %v2668, %v2769
    %v2798 = vmul.f32 %v2670, %v2773
    %v2799 = vmul.f32 %v2672, %v2777
    %v2800 = vmul.f32 %v2674, %v2781
    %v2801 = vmul.f32 %v2676, %v2785
    %2803 = vset.pattern.permute.xlu0 0
    %2804 = vperm.xlu0 %2803, %v2794
    %v2805 = vpop.permute.xlu0 %2804
    %2808 = vset.pattern.permute.xlu0 0
    %2809 = vperm.xlu0 %2808, %v2795
    %v2810 = vpop.permute.xlu0 %2809
    %2813 = vset.pattern.permute.xlu0 0
    %2814 = vperm.xlu0 %2813, %v2796
    %v2815 = vpop.permute.xlu0 %2814
    %2818 = vset.pattern.permute.xlu0 0
    %2819 = vperm.xlu0 %2818, %v2797
    %v2820 = vpop.permute.xlu0 %2819
    %2823 = vset.pattern.permute.xlu0 0
    %2824 = vperm.xlu0 %2823, %v2798
    %v2825 = vpop.permute.xlu0 %2824
    %2828 = vset.pattern.permute.xlu0 0
    %2829 = vperm.xlu0 %2828, %v2799
    %v2830 = vpop.permute.xlu0 %2829
    %2833 = vset.pattern.permute.xlu0 0
    %2834 = vperm.xlu0 %2833, %v2800
    %v2835 = vpop.permute.xlu0 %2834
    %2838 = vset.pattern.permute.xlu0 0
    %2839 = vperm.xlu0 %2838, %v2801
    %v2840 = vpop.permute.xlu0 %2839
    %v2842 = vmul.f32 %v2260, %v2805
    %v2843 = vmul.f32 %v2261, %v2810
    %v2844 = vmul.f32 %v2262, %v2815
    %v2845 = vmul.f32 %v2263, %v2820
    %v2846 = vmul.f32 %v2264, %v2825
    %v2847 = vmul.f32 %v2265, %v2830
    %v2848 = vmul.f32 %v2266, %v2835
    %v2849 = vmul.f32 %v2267, %v2840
    %v2850 = vsel %vm446, %v2842, 0.0
    %v2851 = vrot.slane %v2850, 4
    %v2852 = vadd.f32 %v2850, %v2851
    %v2853 = vrot.slane %v2852, 2
    %v2854 = vadd.f32 %v2852, %v2853
    %v2855 = vrot.slane %v2854, 1
    %v2856 = vadd.f32 %v2854, %v2855
    %v2857 = vsel %vm446, %v2843, 0.0
    %v2858 = vrot.slane %v2857, 4
    %v2859 = vadd.f32 %v2857, %v2858
    %v2860 = vrot.slane %v2859, 2
    %v2861 = vadd.f32 %v2859, %v2860
    %v2862 = vrot.slane %v2861, 1
    %v2863 = vadd.f32 %v2861, %v2862
    %v2864 = vsel %vm446, %v2844, 0.0
    %v2865 = vrot.slane %v2864, 4
    %v2866 = vadd.f32 %v2864, %v2865
    %v2867 = vrot.slane %v2866, 2
    %v2868 = vadd.f32 %v2866, %v2867
    %v2869 = vrot.slane %v2868, 1
    %v2870 = vadd.f32 %v2868, %v2869
    %v2871 = vsel %vm446, %v2845, 0.0
    %v2872 = vrot.slane %v2871, 4
    %v2873 = vadd.f32 %v2871, %v2872
    %v2874 = vrot.slane %v2873, 2
    %v2875 = vadd.f32 %v2873, %v2874
    %v2876 = vrot.slane %v2875, 1
    %v2877 = vadd.f32 %v2875, %v2876
    %v2878 = vsel %vm446, %v2846, 0.0
    %v2879 = vrot.slane %v2878, 4
    %v2880 = vadd.f32 %v2878, %v2879
    %v2881 = vrot.slane %v2880, 2
    %v2882 = vadd.f32 %v2880, %v2881
    %v2883 = vrot.slane %v2882, 1
    %v2884 = vadd.f32 %v2882, %v2883
    %v2885 = vsel %vm446, %v2847, 0.0
    %v2886 = vrot.slane %v2885, 4
    %v2887 = vadd.f32 %v2885, %v2886
    %v2888 = vrot.slane %v2887, 2
    %v2889 = vadd.f32 %v2887, %v2888
    %v2890 = vrot.slane %v2889, 1
    %v2891 = vadd.f32 %v2889, %v2890
    %v2892 = vsel %vm446, %v2848, 0.0
    %v2893 = vrot.slane %v2892, 4
    %v2894 = vadd.f32 %v2892, %v2893
    %v2895 = vrot.slane %v2894, 2
    %v2896 = vadd.f32 %v2894, %v2895
    %v2897 = vrot.slane %v2896, 1
    %v2898 = vadd.f32 %v2896, %v2897
    %v2899 = vsel %vm446, %v2849, 0.0
    %v2900 = vrot.slane %v2899, 4
    %v2901 = vadd.f32 %v2899, %v2900
    %v2902 = vrot.slane %v2901, 2
    %v2903 = vadd.f32 %v2901, %v2902
    %v2904 = vrot.slane %v2903, 1
    %v2905 = vadd.f32 %v2903, %v2904
    %v2906 = vld [vmem:[%s20] sm:$0xff]
    %v2907 = vld [vmem:[%s20 + $0x8] sm:$0xff]
    %v2908 = vld [vmem:[%s20 + $0x10] sm:$0xff]
    %v2909 = vld [vmem:[%s20 + $0x18] sm:$0xff]
    %v2910 = vld [vmem:[%s21] sm:$0x1]
    %v2912 = vlaneseq
    %v2913 = vshrl.u32 %v2912, 7
    %v2914 = vsub.s32 0, %v2913
    %v2915 = vrot.slane %v2910, %v2914
    %v2925 = vsel %vm2593, %v2863, %v2856
    %v2926 = vsel %vm2595, %v2870, %v2925
    %v2927 = vsel %vm2597, %v2877, %v2926
    %v2928 = vsel %vm2599, %v2884, %v2927
    %v2929 = vsel %vm2601, %v2891, %v2928
    %v2930 = vsel %vm2603, %v2898, %v2929
    %v2931 = vsel %vm2605, %v2905, %v2930
    %v2932 = vsel %vm446, %v2931, 0
    %2934 = vmatprep.subr.mxu0 0.0
    %2935 = vmatpush1.msra.mxu0 %v2906
    %2936 = vmatprep.subr.mxu0 0.0
    %2937 = vmatpush1.msra.mxu0 %v2907
    %2938 = vmatprep.subr.mxu0 0.0
    %2939 = vmatpush1.msra.mxu0 %v2908
    %2940 = vmatprep.subr.mxu0 0.0
    %2941 = vmatpush1.msra.mxu0 %v2909
    %2942 = vmatprep.subr.mxu0 0.0
    %2943 = vmatpush1.msra.mxu0 0.0
    %2944 = vmatprep.subr.mxu0 0.0
    %2945 = vmatpush1.msra.mxu0 0.0
    %2946 = vmatprep.subr.mxu0 0.0
    %2947 = vmatpush1.msra.mxu0 0.0
    %2948 = vmatprep.subr.mxu0 0.0
    %2949 = vmatpush1.msra.mxu0 0.0
    %2950 = vmatprep.subr.mxu0 0.0
    %2951 = vmatpush1.msra.mxu0 0.0
    %2952 = vmatprep.subr.mxu0 0.0
    %2953 = vmatpush1.msra.mxu0 0.0
    %2954 = vmatprep.subr.mxu0 0.0
    %2955 = vmatpush1.msra.mxu0 0.0
    %2956 = vmatprep.subr.mxu0 0.0
    %2957 = vmatpush1.msra.mxu0 0.0
    %2958 = vmatprep.subr.mxu0 0.0
    %2959 = vmatpush1.msra.mxu0 0.0
    %2960 = vmatprep.subr.mxu0 0.0
    %2961 = vmatpush1.msra.mxu0 0.0
    %2962 = vmatprep.subr.mxu0 0.0
    %2963 = vmatpush1.msra.mxu0 0.0
    %2964 = vmatprep.subr.mxu0 0.0
    %2965 = vmatpush1.msra.mxu0 0.0
    %2966 = vmatprep.subr.mxu0 0.0
    %2967 = vmatpush1.msra.mxu0 0.0
    %2968 = vmatprep.subr.mxu0 0.0
    %2969 = vmatpush1.msra.mxu0 0.0
    %2970 = vmatprep.subr.mxu0 0.0
    %2971 = vmatpush1.msra.mxu0 0.0
    %2972 = vmatprep.subr.mxu0 0.0
    %2973 = vmatpush1.msra.mxu0 0.0
    %2974 = vmatprep.subr.mxu0 0.0
    %2975 = vmatpush1.msra.mxu0 0.0
    %2976 = vmatprep.subr.mxu0 0.0
    %2977 = vmatpush1.msra.mxu0 0.0
    %2978 = vmatprep.subr.mxu0 0.0
    %2979 = vmatpush1.msra.mxu0 0.0
    %2980 = vmatprep.subr.mxu0 0.0
    %2981 = vmatpush1.msra.mxu0 0.0
    %2982 = vmatprep.subr.mxu0 0.0
    %2983 = vmatpush1.msra.mxu0 0.0
    %2984 = vmatprep.subr.mxu0 0.0
    %2985 = vmatpush1.msra.mxu0 0.0
    %2986 = vmatprep.subr.mxu0 0.0
    %2987 = vmatpush1.msra.mxu0 0.0
    %2988 = vmatprep.subr.mxu0 0.0
    %2989 = vmatpush1.msra.mxu0 0.0
    %2990 = vmatprep.subr.mxu0 0.0
    %2991 = vmatpush1.msra.mxu0 0.0
    %2992 = vmatprep.subr.mxu0 0.0
    %2993 = vmatpush1.msra.mxu0 0.0
    %2994 = vmatprep.subr.mxu0 0.0
    %2995 = vmatpush1.msra.mxu0 0.0
    %2996 = vmatprep.subr.mxu0 0.0
    %2997 = vmatpush1.msra.mxu0 0.0
    %2998 = vmatprep.mubr.f32.mxu0 0.0
    %2999 = vmatmul.mubr.f32.gmra.mrb[0].mxu0 %v2932
    %v3000 = vpop.f32.mrb[0].mxu0
    %v3001 = vadd.f32 %v2915, %v3000
    %v3002 = vpop.f32.mrb[0].mxu0
    %3003 = vdwg.mxu0
    %v3004 = vtanh.pop %v3001
    %v3006 = vcombine.high %v3004, %v3004
    %v3008 = vld [vmem:[%s22] sm:$0x1]
    %v3010 = vlaneseq
    %v3011 = vshrl.u32 %v3010, 7
    %v3012 = vsub.s32 0, %v3011
    %v3013 = vrot.slane %v3008, %v3012
    %v3015 = vmul.f32 %v3004, %v3013
    %v3016 = vmul.f32 %v3006, %v3013
    %vm3017 = vcmask 257024
    %v3018 = vsel %vm3017, %v3015, 0.0
    %3019 = vadd.xlane.f32.xlu0 %v3018
    %v3020 = vpop.xlane.xlu0 %3019
    %v3021 = vsel %vm3017, %v3016, 0.0
    %3022 = vadd.xlane.f32.xlu0 %v3021
    %v3023 = vpop.xlane.xlu0 %3022
    %v3024 = vld [vmem:[%s4] sm:$0x3]
    %v3026 = vlaneseq
    %v3027 = vshrl.u32 %v3026, 7
    %v3028 = vsub.s32 0, %v3027
    %v3029 = vrot.slane %v3024, %v3028
    %3031 = vbcast.lane.b32.xlu0 %v3029, 256
    %v3032 = vpop.permute.xlu0 %3031
    %v3033 = vlaneseq
    %v3034 = vshrl.u32 %v3033, 7
    %v3035 = vsub.s32 1, %v3034
    %v3036 = vrot.slane %v3024, %v3035
    %3038 = vbcast.lane.b32.xlu0 %v3036, 256
    %v3039 = vpop.permute.xlu0 %3038
    %v3042 = vadd.f32 %v3020, %v3032
    %v3043 = vadd.f32 %v3023, %v3039
    %3046 = vset.pattern.permute.xlu0 0
    %3047 = vperm.xlu0 %3046, %v3042
    %v3048 = vpop.permute.xlu0 %3047
    %3049 = vset.pattern.permute.xlu0 0
    %3050 = vperm.xlu0 %3049, %v3043
    %v3051 = vpop.permute.xlu0 %3050
    %v3052 = vlaneseq
    %v3053 = vshrl.u32 %v3052, 7
    %v3054 = vsub.s32 %v92, %v3053
    %v3055 = vrot.slane %v3048, %v3054
    %v3056 = vlaneseq
    %v3057 = vshrl.u32 %v3056, 7
    %v3058 = vsub.s32 %v92, %v3057
    %v3059 = vrot.slane %v3051, %v3058
    %v3060 = vsel %vm2593, %v3059, %v3055
    %vm3062 = vcmask 25600
    %v3063 = vsel %vm3062, %v3060, -inf
    %3064 = vmax.xlane.f32.xlu0 %v3063
    %v3065 = vpop.xlane.xlu0 %3064
    %v3067 = vlaneseq
    %v3068 = vshrl.u32 %v3067, 7
    %v3069 = vsub.s32 0, %v3068
    %v3070 = vrot.slane %v3065, %v3069
    %v3071 = vlaneseq
    %v3072 = vshrl.u32 %v3071, 7
    %v3073 = vsub.s32 1, %v3072
    %v3074 = vrot.slane %v3065, %v3073
    %v3077 = vsub.f32 %v3042, %v3070
    %v3078 = vsub.f32 %v3043, %v3074
    %v3079 = vmul.f32 %v3077, 1.442695
    %v3080 = vpow.pop %v3079
    %v3081 = vmul.f32 %v3078, 1.442695
    %v3082 = vpow.pop %v3081
    %3085 = vset.pattern.permute.xlu0 0
    %3086 = vperm.xlu0 %3085, %v3080
    %v3087 = vpop.permute.xlu0 %3086
    %3088 = vset.pattern.permute.xlu0 0
    %3089 = vperm.xlu0 %3088, %v3082
    %v3090 = vpop.permute.xlu0 %3089
    %v3091 = vlaneseq
    %v3092 = vshrl.u32 %v3091, 7
    %v3093 = vsub.s32 %v92, %v3092
    %v3094 = vrot.slane %v3087, %v3093
    %v3095 = vlaneseq
    %v3096 = vshrl.u32 %v3095, 7
    %v3097 = vsub.s32 %v92, %v3096
    %v3098 = vrot.slane %v3090, %v3097
    %v3099 = vsel %vm2593, %v3098, %v3094
    %v3101 = vsel %vm3062, %v3099, 0.0
    %3102 = vadd.xlane.f32.xlu0 %v3101
    %v3103 = vpop.xlane.xlu0 %3102
    %v3104 = vrcp.pop %v3103
    %v3106 = vlaneseq
    %v3107 = vshrl.u32 %v3106, 7
    %v3108 = vsub.s32 0, %v3107
    %v3109 = vrot.slane %v3104, %v3108
    %v3110 = vlaneseq
    %v3111 = vshrl.u32 %v3110, 7
    %v3112 = vsub.s32 1, %v3111
    %v3113 = vrot.slane %v3104, %v3112
    %v3116 = vmul.f32 %v3080, %v3109
    %v3117 = vmul.f32 %v3082, %v3113
    %3119 = vset.pattern.permute.xlu0 0
    %3120 = vperm.xlu0 %3119, %v3116
    %v3121 = vpop.permute.xlu0 %3120
    %3123 = vset.pattern.permute.xlu0 0
    %3124 = vperm.xlu0 %3123, %v3117
    %v3125 = vpop.permute.xlu0 %3124
    %v3126 = vrot.slane %v3121, 1
    %v3127 = vrot.slane %v3121, 2
    %v3128 = vrot.slane %v3121, 3
    %v3129 = vrot.slane %v3125, 1
    %v3130 = vrot.slane %v3125, 2
    %v3131 = vrot.slane %v3125, 3
    %v3140 = vmul.f32 %v2856, %v3121
    %v3141 = vmul.f32 %v2863, %v3126
    %v3142 = vmul.f32 %v2870, %v3127
    %v3143 = vmul.f32 %v2877, %v3128
    %v3144 = vmul.f32 %v2884, %v3125
    %v3145 = vmul.f32 %v2891, %v3129
    %v3146 = vmul.f32 %v2898, %v3130
    %v3147 = vmul.f32 %v2905, %v3131
    %v3156 = vrot.slane %v3141, 7
    %v3157 = vsel %vm2593, %v3156, %v3140
    %v3158 = vrot.slane %v3142, 6
    %v3159 = vsel %vm2595, %v3158, %v3157
    %v3160 = vrot.slane %v3143, 5
    %v3161 = vsel %vm2597, %v3160, %v3159
    %v3162 = vrot.slane %v3145, 7
    %v3163 = vsel %vm2593, %v3162, %v3144
    %v3164 = vrot.slane %v3146, 6
    %v3165 = vsel %vm2595, %v3164, %v3163
    %v3166 = vrot.slane %v3147, 5
    %v3167 = vsel %vm2597, %v3166, %v3165
    %v3170 = vsel %vm3017, %v3161, 0.0
    %v3171 = vrot.slane %v3170, 4
    %v3172 = vadd.f32 %v3170, %v3171
    %v3173 = vrot.slane %v3172, 2
    %v3174 = vadd.f32 %v3172, %v3173
    %v3175 = vrot.slane %v3174, 1
    %v3176 = vadd.f32 %v3174, %v3175
    %v3177 = vsel %vm3017, %v3167, 0.0
    %v3178 = vrot.slane %v3177, 4
    %v3179 = vadd.f32 %v3177, %v3178
    %v3180 = vrot.slane %v3179, 2
    %v3181 = vadd.f32 %v3179, %v3180
    %v3182 = vrot.slane %v3181, 1
    %v3183 = vadd.f32 %v3181, %v3182
    %3184 = vst [vmem:[#allocation2] sm:$0xff] 0.0
    %3185 = vst [vmem:[#allocation2 + $0x8] sm:$0xff] 0.0
    %v3188 = vrot.slane %v3183, 7
    %v3189 = vsel %vm2593, %v3188, %v3176
    %vm3191 = vcmask 254976
    %3192 = vst.msk [vmem:[#allocation2] sm:$0x3] %vm3191, %v3189
    %v3193 = vlaneseq
    %v3194 = vshrl.u32 %v3193, 7
    %v3195 = vsub.s32 %v92, %v3194
    %v3196 = vrot.slane %v3121, %v3195
    %v3197 = vlaneseq
    %v3198 = vshrl.u32 %v3197, 7
    %v3199 = vsub.s32 %v92, %v3198
    %v3200 = vrot.slane %v3125, %v3199
    %v3201 = vsel %vm2593, %v3200, %v3196
    %3203 = vst.msk [vmem:[#allocation2 + $0x2] sm:$0x3] %vm3062, %v3201
    %v3204 = vlaneseq
    %v3205 = vshrl.u32 %v3204, 7
    %v3206 = vsub.s32 %v92, %v3205
    %v3207 = vrot.slane %v2805, %v3206
    %v3208 = vlaneseq
    %v3209 = vshrl.u32 %v3208, 7
    %v3210 = vsub.s32 %v92, %v3209
    %v3211 = vrot.slane %v2810, %v3210
    %v3212 = vlaneseq
    %v3213 = vshrl.u32 %v3212, 7
    %v3214 = vsub.s32 %v92, %v3213
    %v3215 = vrot.slane %v2815, %v3214
    %v3216 = vlaneseq
    %v3217 = vshrl.u32 %v3216, 7
    %v3218 = vsub.s32 %v92, %v3217
    %v3219 = vrot.slane %v2820, %v3218
    %v3220 = vlaneseq
    %v3221 = vshrl.u32 %v3220, 7
    %v3222 = vsub.s32 %v92, %v3221
    %v3223 = vrot.slane %v2825, %v3222
    %v3224 = vlaneseq
    %v3225 = vshrl.u32 %v3224, 7
    %v3226 = vsub.s32 %v92, %v3225
    %v3227 = vrot.slane %v2830, %v3226
    %v3228 = vlaneseq
    %v3229 = vshrl.u32 %v3228, 7
    %v3230 = vsub.s32 %v92, %v3229
    %v3231 = vrot.slane %v2835, %v3230
    %v3232 = vlaneseq
    %v3233 = vshrl.u32 %v3232, 7
    %v3234 = vsub.s32 %v92, %v3233
    %v3235 = vrot.slane %v2840, %v3234
    %v3236 = vsel %vm2593, %v3211, %v3207
    %v3237 = vsel %vm2595, %v3215, %v3236
    %v3238 = vsel %vm2597, %v3219, %v3237
    %v3239 = vsel %vm2599, %v3223, %v3238
    %v3240 = vsel %vm2601, %v3227, %v3239
    %v3241 = vsel %vm2603, %v3231, %v3240
    %v3242 = vsel %vm2605, %v3235, %v3241
    %3244 = vst.msk [vmem:[#allocation2 + $0x4] sm:$0xff] %vm2608, %v3242
    // Predicated region
    $region94: #{tpu_custom_call.1} parent=1 // pred_check
      _
    $region95: #{tpu_custom_call.1} parent=1 // pred_check_branch
      %3246 = sbr.rel (0) target = $region97
    $region96: #{tpu_custom_call.1} parent=1 // pred_region
      %s3248 = ssub.s32 256, 256
      %3249 = vsyncadd [#allocation3], %s3248
      %s3250 = sshll.u32 [#allocation2], 4
      %s3251 = int_to_ptr.vmem [resolvable:$true] %s3250
      %3256 = dma.vmem_to_hbm [thread:$0]  %s3251, 256, %s23, [#allocation3], 128, 128, 8
    $region97: #{tpu_custom_call.1} parent=1 // pred_fallthru
      _
    // Predicated region
    $region98: #{tpu_custom_call.1} parent=1 // pred_check
      _
    $region99: #{tpu_custom_call.1} parent=1 // pred_check_branch
      %3258 = sbr.rel (0) target = $region101
    $region100: #{tpu_custom_call.1} parent=1 // pred_region
      %3259 = dma.done [#allocation3], 256
    $region101: #{tpu_custom_call.1} parent=1 // pred_fallthru
      _
    %3260 = vsyncpa [#allocation3], 1

</llo_original>
